<compile_context>
chip_gen: v7x
topology: tpu7x:2x2x1
jax: 0.10.0
libtpu: 0.0.40
codegen_flags: <defaults>
</compile_context>

<pallas_src>
import math
from functools import partial

import jax
import jax.numpy as jnp
from jax.experimental import pallas as pl
from jax.experimental.pallas import tpu as pltpu

# bf16 MXU operands (f32 accumulation everywhere).  Set to jnp.float32 for
# bit-closer parity with the f32 PyTorch reference at ~2-4x lower MXU rate.
MXU_DTYPE = jnp.bfloat16

_TM = 512          # row tile
_TN = 512          # column tile cap (actual tn chosen to divide N when possible)
_TK_MAX = 1536     # K runs un-tiled up to this size


def _vmem_capacity_bytes():
    try:
        cap = int(pltpu.get_tpu_info().vmem_capacity_bytes)
        if cap > 0:
            return cap
    except Exception:
        pass
    return 64 * 1024 * 1024   # conservative (v7x per-core VMEM)


_VMEM_CAP = _vmem_capacity_bytes()
_VMEM_LIMIT = int(min(_VMEM_CAP * 3 // 4, 96 * 1024 * 1024))


def _round_up(x, m):
    return (x + m - 1) // m * m


def _pad_axis(a, axis, target):
    if a.shape[axis] == target:
        return a
    pads = [(0, 0)] * a.ndim
    pads[axis] = (0, target - a.shape[axis])
    return jnp.pad(a, pads)


def _choose_tn(n):
    """Column tile: a multiple of 128 that divides round_up(n,128) (no padding)."""
    npad = _round_up(n, 128)
    if npad <= _TN:
        return npad
    d = _TN
    while d >= 128:
        if npad % d == 0:
            return d
        d -= 128
    return _TN


def _choose_tk(k):
    """K tile: full K when small (single k step), else a 128-multiple divisor."""
    if k <= _TK_MAX:
        return k
    d = _TK_MAX
    while d >= 128:
        if k % d == 0:
            return d
        d -= 128
    return _TK_MAX   # fallback: K gets zero-padded


# ----------------------------- Pallas kernels -----------------------------

def _matmul_kernel(*refs, has_res):
    """Single-K-step matmul: o = x @ w + b (+ res) per (i, j) tile."""
    if has_res:
        x_ref, w_ref, b_ref, r_ref, o_ref = refs
    else:
        x_ref, w_ref, b_ref, o_ref = refs
    x = x_ref[...]
    if x.dtype != MXU_DTYPE:
        x = x.astype(MXU_DTYPE)           # cast in VMEM; f32 residual-stream inputs
    y = jnp.dot(x, w_ref[...], preferred_element_type=jnp.float32) + b_ref[...]
    if has_res:
        y = y + r_ref[...].astype(jnp.float32)
    o_ref[...] = y.astype(o_ref.dtype)


def _matmul_ktiled_kernel(*refs, has_res):
    """K-tiled matmul accumulating directly into the resident f32 output block."""
    if has_res:
        x_ref, w_ref, b_ref, r_ref, o_ref = refs
    else:
        x_ref, w_ref, b_ref, o_ref = refs
    k = pl.program_id(2)

    @pl.when(k == 0)
    def _():
        o_ref[...] = jnp.zeros_like(o_ref)

    x = x_ref[...]
    if x.dtype != MXU_DTYPE:
        x = x.astype(MXU_DTYPE)
    o_ref[...] += jnp.dot(x, w_ref[...], preferred_element_type=jnp.float32)

    @pl.when(k == pl.num_programs(2) - 1)
    def _():
        y = o_ref[...] + b_ref[...]
        if has_res:
            y = y + r_ref[...].astype(jnp.float32)
        o_ref[...] = y


def linear(x, w, b, residual=None, out_dtype=jnp.float32):
    """y = x @ w + b (+ residual), tiled & software-pipelined.  Weights are
    cast to bf16 in the wrapper (re-read per row tile -> real DMA saving)."""
    lead = x.shape[:-1]
    K = x.shape[-1]
    N = w.shape[1]
    x2 = x.reshape(-1, K)
    M = x2.shape[0]

    tm = min(_TM, _round_up(M, 8))
    tn = _choose_tn(N)
    tk = _choose_tk(K)
    Mp, Np, Kp = _round_up(M, tm), _round_up(N, tn), _round_up(K, tk)
    nk = Kp // tk

    x2 = _pad_axis(_pad_axis(x2, 0, Mp), 1, Kp)
    wp = _pad_axis(_pad_axis(w.astype(MXU_DTYPE), 0, Kp), 1, Np)
    bp = _pad_axis(b.reshape(1, N).astype(jnp.float32), 1, Np)

    has_res = residual is not None
    args = [x2, wp, bp]
    if has_res:
        r2 = _pad_axis(_pad_axis(residual.reshape(-1, N), 0, Mp), 1, Np)
        args.append(r2)

    ce = pl.CostEstimate(
        flops=int(2 * M * K * N), transcendentals=0,
        bytes_accessed=int(jnp.dtype(x2.dtype).itemsize * M * K + 2 * K * N
                           + jnp.dtype(out_dtype).itemsize * M * N))

    if nk == 1:
        in_specs = [pl.BlockSpec((tm, Kp), lambda i, j: (i, 0)),
                    pl.BlockSpec((Kp, tn), lambda i, j: (0, j)),
                    pl.BlockSpec((1, tn), lambda i, j: (0, j))]
        if has_res:
            in_specs.append(pl.BlockSpec((tm, tn), lambda i, j: (i, j)))
        out = pl.pallas_call(
            partial(_matmul_kernel, has_res=has_res),
            grid=(Mp // tm, Np // tn),
            in_specs=in_specs,
            out_specs=pl.BlockSpec((tm, tn), lambda i, j: (i, j)),
            out_shape=jax.ShapeDtypeStruct((Mp, Np), out_dtype),
            compiler_params=pltpu.CompilerParams(
                dimension_semantics=("parallel", "parallel"),
                vmem_limit_bytes=_VMEM_LIMIT),
            cost_estimate=ce,
        )(*args)
    else:
        # accumulation happens in the f32 output block itself
        assert out_dtype == jnp.float32, "k-tiled path accumulates into f32 output"
        in_specs = [pl.BlockSpec((tm, tk), lambda i, j, k: (i, k)),
                    pl.BlockSpec((tk, tn), lambda i, j, k: (k, j)),
                    pl.BlockSpec((1, tn), lambda i, j, k: (0, j))]
        if has_res:
            in_specs.append(pl.BlockSpec((tm, tn), lambda i, j, k: (i, j)))
        out = pl.pallas_call(
            partial(_matmul_ktiled_kernel, has_res=has_res),
            grid=(Mp // tm, Np // tn, nk),
            in_specs=in_specs,
            out_specs=pl.BlockSpec((tm, tn), lambda i, j, k: (i, j)),
            out_shape=jax.ShapeDtypeStruct((Mp, Np), jnp.float32),
            compiler_params=pltpu.CompilerParams(
                dimension_semantics=("parallel", "parallel", "arbitrary"),
                vmem_limit_bytes=_VMEM_LIMIT),
            cost_estimate=ce,
        )(*args)

    return out[:M, :N].reshape(*lead, N)


def _ln_matmul_kernel(x_ref, g_ref, beta_ref, w_ref, b_ref, o_ref, xn_ref, *,
                      eps, gelu):
    # LayerNorm computed once per row tile (j == 0) into a bf16 scratch that is
    # reused for every output-column tile (x block is resident across j).
    @pl.when(pl.program_id(1) == 0)
    def _():
        x = x_ref[...].astype(jnp.float32)
        mean = jnp.mean(x, axis=-1, keepdims=True)
        xc = x - mean
        var = jnp.mean(xc * xc, axis=-1, keepdims=True)
        xn_ref[...] = (xc * jax.lax.rsqrt(var + eps) * g_ref[...]
                       + beta_ref[...]).astype(xn_ref.dtype)

    y = jnp.dot(xn_ref[...], w_ref[...],
                preferred_element_type=jnp.float32) + b_ref[...]
    if gelu:
        # TODO(synk): exact erf-GELU once math.erf lowering is guaranteed on
        # Mosaic; the tanh approximation (<= ~3e-3 abs dev) runs on the EUP.
        y = 0.5 * y * (1.0 + jnp.tanh(0.7978845608028654
                                      * (y + 0.044715 * y * y * y)))
    o_ref[...] = y.astype(o_ref.dtype)


def ln_linear(x, g, beta, w, b, eps=1e-5, out_dtype=jnp.float32, gelu=False):
    """y = [GELU](LayerNorm(x) @ w + b), LN fused into the matmul.  LN needs
    the full feature axis, so K (= embed dim) is kept un-tiled."""
    lead = x.shape[:-1]
    K = x.shape[-1]
    N = w.shape[1]
    x2 = x.reshape(-1, K)
    M = x2.shape[0]

    tm = min(_TM, _round_up(M, 8))
    tn = _choose_tn(N)
    Mp, Np = _round_up(M, tm), _round_up(N, tn)

    x2 = _pad_axis(x2, 0, Mp)
    wp = _pad_axis(w.astype(MXU_DTYPE), 1, Np)
    bp = _pad_axis(b.reshape(1, N).astype(jnp.float32), 1, Np)

    out = pl.pallas_call(
        partial(_ln_matmul_kernel, eps=eps, gelu=gelu),
        grid=(Mp // tm, Np // tn),
        in_specs=[pl.BlockSpec((tm, K), lambda i, j: (i, 0)),
                  pl.BlockSpec((1, K), lambda i, j: (0, 0)),
                  pl.BlockSpec((1, K), lambda i, j: (0, 0)),
                  pl.BlockSpec((K, tn), lambda i, j: (0, j)),
                  pl.BlockSpec((1, tn), lambda i, j: (0, j))],
        out_specs=pl.BlockSpec((tm, tn), lambda i, j: (i, j)),
        out_shape=jax.ShapeDtypeStruct((Mp, Np), out_dtype),
        scratch_shapes=[pltpu.VMEM((tm, K), MXU_DTYPE)],
        compiler_params=pltpu.CompilerParams(
            # j must stay sequential per core so the LN scratch written at j==0
            # is valid for j>0; rows (i) carry the megacore parallelism.
            dimension_semantics=("parallel", "arbitrary"),
            vmem_limit_bytes=_VMEM_LIMIT),
        cost_estimate=pl.CostEstimate(
            flops=int(2 * M * K * N),
            transcendentals=int(M * N if gelu else 0),
            bytes_accessed=int(4 * M * K + 2 * K * N
                               + jnp.dtype(out_dtype).itemsize * M * N)),
    )(x2, g.reshape(1, K).astype(jnp.float32),
      beta.reshape(1, K).astype(jnp.float32), wp, bp)
    return out[:M, :N].reshape(*lead, N)


def _layernorm_kernel(x_ref, g_ref, b_ref, o_ref, *, eps):
    x = x_ref[...].astype(jnp.float32)
    mean = jnp.mean(x, axis=-1, keepdims=True)
    xc = x - mean
    var = jnp.mean(xc * xc, axis=-1, keepdims=True)
    o_ref[...] = xc * jax.lax.rsqrt(var + eps) * g_ref[...] + b_ref[...]


def layernorm(x, g, b, eps=1e-5):
    lead = x.shape[:-1]
    D = x.shape[-1]
    x2 = x.reshape(-1, D)
    M = x2.shape[0]
    tm = min(512, _round_up(M, 8))
    Mp = _round_up(M, tm)
    x2 = _pad_axis(x2, 0, Mp)
    out = pl.pallas_call(
        partial(_layernorm_kernel, eps=eps),
        grid=(Mp // tm,),
        in_specs=[pl.BlockSpec((tm, D), lambda i: (i, 0)),
                  pl.BlockSpec((1, D), lambda i: (0, 0)),
                  pl.BlockSpec((1, D), lambda i: (0, 0))],
        out_specs=pl.BlockSpec((tm, D), lambda i: (i, 0)),
        out_shape=jax.ShapeDtypeStruct((Mp, D), jnp.float32),
        compiler_params=pltpu.CompilerParams(
            dimension_semantics=("parallel",),
            vmem_limit_bytes=_VMEM_LIMIT),
    )(x2, g.reshape(1, D), b.reshape(1, D))
    return out[:M].reshape(*lead, D)


def _mhsa_kernel(qkv_ref, o_ref, *, num_heads, head_dim, scale):
    D = num_heads * head_dim
    qkv = qkv_ref[...]                                      # (G, S, 3D) bf16
    for h in range(num_heads):
        lo = h * head_dim
        q = qkv[:, :, lo:lo + head_dim]
        k = qkv[:, :, D + lo:D + lo + head_dim]
        v = qkv[:, :, 2 * D + lo:2 * D + lo + head_dim]
        s = jnp.einsum('gqd,gkd->gqk', q, k,
                       preferred_element_type=jnp.float32) * scale
        s = s - jnp.max(s, axis=-1, keepdims=True)
        p = jnp.exp(s)
        l = jnp.sum(p, axis=-1, keepdims=True)
        o = jnp.einsum('gqk,gkd->gqd', p.astype(qkv.dtype), v,
                       preferred_element_type=jnp.float32)
        # store each head's output straight into the resident output block:
        # bounds score/output liveness; the HBM writeback of o_ref stays one
        # dense (G, S, D) DMA regardless of how the VMEM block was filled.
        o_ref[:, :, lo:lo + head_dim] = (o / l).astype(o_ref.dtype)


def mhsa_attention(qkv, num_heads):
    """qkv: (B, S, 3D) -> (B, S, D).  G sequences batched per grid step to
    amortize grid/DMA overhead (crucial for the temporal path where B = b*p is
    huge and S = num_frames is tiny)."""
    B, S, threeD = qkv.shape
    D = threeD // 3
    dh = D // num_heads
    scale = 1.0 / math.sqrt(dh)

    in_bytes = jnp.dtype(qkv.dtype).itemsize
    out_bytes = jnp.dtype(MXU_DTYPE).itemsize
    # double-buffered qkv/out blocks + one head's f32 scores/probs/output
    per_seq = (2 * S * threeD * in_bytes + 2 * S * D * out_bytes
               + 4 * (2 * S * S + S * dh + S * D))
    budget = int(min(_VMEM_CAP // 4, 24 * 1024 * 1024))
    G = max(1, budget // max(per_seq, 1))
    if B >= 2:
        G = min(G, B // 2)   # >= 2 grid steps so both v7x TensorCores get work
    G = max(1, min(G, B))
    Bp = _round_up(B, G)     # pad B (zeros -> finite softmax) instead of G=1
    qkv_p = _pad_axis(qkv, 0, Bp)

    out = pl.pallas_call(
        partial(_mhsa_kernel, num_heads=num_heads, head_dim=dh, scale=scale),
        grid=(Bp // G,),
        in_specs=[pl.BlockSpec((G, S, threeD), lambda i: (i, 0, 0))],
        out_specs=pl.BlockSpec((G, S, D), lambda i: (i, 0, 0)),
        out_shape=jax.ShapeDtypeStruct((Bp, S, D), MXU_DTYPE),
        compiler_params=pltpu.CompilerParams(
            dimension_semantics=("parallel",),
            vmem_limit_bytes=_VMEM_LIMIT),
        cost_estimate=pl.CostEstimate(
            flops=int(4 * B * S * S * D),
            transcendentals=int(B * num_heads * S * S),
            bytes_accessed=int(in_bytes * B * S * threeD
                               + out_bytes * B * S * D)),
    )(qkv_p)
    return out[:B]


# ------------------------- model building blocks --------------------------

def mha(x, ln_g, ln_b, p, num_heads, out_dtype=jnp.float32):
    """Pre-norm multi-head self-attention (q=k=v=x).  LayerNorm is fused into
    the QKV projection; qkv / attention outputs stay in bf16 (matmul-only)."""
    qkv = ln_linear(x, ln_g, ln_b, p["in_w"], p["in_b"], out_dtype=MXU_DTYPE)
    o = mhsa_attention(qkv, num_heads)                       # (B, S, D) bf16
    return linear(o, p["out_w"], p["out_b"], out_dtype=out_dtype)


def timesformer_forward(x, params, *, patch_size, num_heads):
    b, t, c, h, w = x.shape
    P = patch_size
    hp, wp = h // P, w // P
    p = hp * wp
    D = params["cls_token"].shape[-1]

    # ---- PatchEmbed: Conv2d(kernel=stride=P) == patch-unfold + matmul ----
    patches = x.reshape(b * t, c, hp, P, wp, P)
    patches = patches.transpose(0, 2, 4, 1, 3, 5).reshape(b * t, p, c * P * P)
    xt = linear(patches.astype(MXU_DTYPE),
                params["patch_w"], params["patch_b"])                # (b*t, p, D)

    # ---- cls token + learnable spatial position embedding ----
    cls = jnp.broadcast_to(params["cls_token"], (b * t, 1, D))
    xt = jnp.concatenate([cls, xt], axis=1) + params["pos_embed"]    # (b*t, p+1, D)

    # ---- learnable temporal embedding (use_cls_token_temporal == False) ----
    cls_tokens = xt[:b, 0:1, :]                                      # (b, 1, D)
    xs = xt[:, 1:, :].reshape(b, t, p, D).transpose(0, 2, 1, 3)      # (b, p, t, D)
    xs = xs.reshape(b * p, t, D) + params["time_embed"]              # (b*p, t, D)
    xs = xs.reshape(b, p * t, D)
    x = jnp.concatenate([cls_tokens, xs], axis=1)                    # (b, 1+p*t, D)

    # ---- transformer layers: [time_attn, space_attn, ffn] ----
    for lp in params["layers"]:
        # divided temporal attention (pre-norm, LN fused) + temporal_fc;
        # cls excluded; residual add fused into the temporal_fc matmul.
        init_cls = x[:, 0:1, :]
        identity = x[:, 1:, :]                                       # (b, p*t, D)
        qt = identity.reshape(b * p, t, D)                           # free view
        rt = mha(qt, lp["t_ln_g"], lp["t_ln_b"], lp["t_attn"], num_heads,
                 out_dtype=MXU_DTYPE)
        xt_new = linear(rt, lp["t_fc_w"], lp["t_fc_b"],
                        residual=qt, out_dtype=jnp.float32)          # id + fc(rt)
        x = jnp.concatenate([init_cls, xt_new.reshape(b, p * t, D)], axis=1)

        # divided spatial attention (pre-norm); cls replicated per frame,
        # mean-merged back.
        identity = x
        init_cls = x[:, 0:1, :]
        qs = x[:, 1:, :].reshape(b, p, t, D).transpose(0, 2, 1, 3)
        qs = qs.reshape(b * t, p, D)
        cls_rep = jnp.broadcast_to(init_cls, (b, t, D)).reshape(b * t, 1, D)
        qs = jnp.concatenate([cls_rep, qs], axis=1)                  # (b*t, p+1, D)
        rs = mha(qs, lp["s_ln_g"], lp["s_ln_b"], lp["s_attn"], num_heads,
                 out_dtype=jnp.float32)
        cls_out = rs[:, 0, :].reshape(b, t, D).mean(axis=1, keepdims=True)
        rs_rest = rs[:, 1:, :].reshape(b, t, p, D).transpose(0, 2, 1, 3)
        rs_rest = rs_rest.reshape(b, p * t, D)
        x = identity + jnp.concatenate([cls_out, rs_rest], axis=1)

        # FFN (pre-norm): LN + Linear + GELU fused in one kernel (bf16 hidden),
        # second Linear with the residual add fused into its epilogue.
        hdn = ln_linear(x, lp["f_ln_g"], lp["f_ln_b"],
                        lp["ffn_w1"], lp["ffn_b1"],
                        out_dtype=MXU_DTYPE, gelu=True)
        x = linear(hdn, lp["ffn_w2"], lp["ffn_b2"],
                   residual=x, out_dtype=jnp.float32)

    # ---- final LayerNorm(eps=1e-6); only the cls row is returned, so only
    #      it is normalized (per-token LN => identical result, saves HBM). ----
    cls_final = layernorm(x[:, 0:1, :], params["norm_g"], params["norm_b"],
                          eps=1e-6)
    return cls_final[:, 0]                                           # (b, D)


# ----------------------------- parameter init ------------------------------

def init_params(key, *, in_channels, patch_size, embed_dims, num_heads,
                num_layers, num_frames, num_patches, hidden):
    D = embed_dims
    keys = iter(jax.random.split(key, 64))

    def nrm(shape, std=0.02):
        return jax.random.normal(next(keys), shape, jnp.float32) * std

    def zeros(shape):
        return jnp.zeros(shape, jnp.float32)

    def ones(shape):
        return jnp.ones(shape, jnp.float32)

    def attn_params():
        return dict(in_w=nrm((D, 3 * D)), in_b=zeros((3 * D,)),
                    out_w=nrm((D, D)), out_b=zeros((D,)))

    params = dict(
        patch_w=nrm((in_channels * patch_size * patch_size, D)),
        patch_b=zeros((D,)),
        cls_token=nrm((1, 1, D)),
        pos_embed=nrm((1, num_patches + 1, D)),
        time_embed=nrm((1, num_frames, D)),
        norm_g=ones((D,)), norm_b=zeros((D,)),
        layers=[],
    )
    for _ in range(num_layers):
        params["layers"].append(dict(
            t_ln_g=ones((D,)), t_ln_b=zeros((D,)),
            t_attn=attn_params(),
            # NOTE: the PyTorch module zero-inits temporal_fc; small random values
            # are used here so the temporal-attention kernel path is exercised.
            t_fc_w=nrm((D, D)), t_fc_b=zeros((D,)),
            s_ln_g=ones((D,)), s_ln_b=zeros((D,)),
            s_attn=attn_params(),
            f_ln_g=ones((D,)), f_ln_b=zeros((D,)),
            ffn_w1=nrm((D, hidden)), ffn_b1=zeros((hidden,)),
            ffn_w2=nrm((hidden, D)), ffn_b2=zeros((D,)),
        ))
    return params


# --------------------------------- main -------------------------------------

if __name__ == "__main__":
    # small synthetic config (module defaults scaled down)
    B, T, C, H, W = 2, 2, 3, 8, 8
    PATCH = 4
    EMBED = 32
    HEADS = 4
    LAYERS = 2
    HIDDEN = 4 * EMBED
    NUM_PATCHES = (H // PATCH) * (W // PATCH)

    key = jax.random.PRNGKey(0)
    kx, kp = jax.random.split(key)
    x = jax.random.normal(kx, (B, T, C, H, W), jnp.float32)
    params = init_params(kp, in_channels=C, patch_size=PATCH, embed_dims=EMBED,
                         num_heads=HEADS, num_layers=LAYERS, num_frames=T,
                         num_patches=NUM_PATCHES, hidden=HIDDEN)

    fwd = jax.jit(partial(timesformer_forward, patch_size=PATCH, num_heads=HEADS))
    out = fwd(x, params)
    jax.block_until_ready(out)
    assert out.shape == (B, EMBED) and out.dtype == jnp.float32
    print("KERNEL_OK")
</pallas_src>

<mosaic_0001>
module attributes {stable_mosaic.version = 11 : i64} {
  func.func @_matmul_kernel(%arg0: i32, %arg1: i32, %arg2: memref<16x32xbf16, #tpu.memory_space<vmem>>, %arg3: memref<32x128xbf16, #tpu.memory_space<vmem>>, %arg4: memref<1x128xf32, #tpu.memory_space<vmem>>, %arg5: memref<16x128xbf16, #tpu.memory_space<vmem>>) attributes {dimension_semantics = [#tpu.dimension_semantics<parallel>, #tpu.dimension_semantics<parallel>], iteration_bounds = array<i64: 1, 1>, scalar_prefetch = 0 : i64, scratch_operands = 0 : i64, tpu.core_type = #tpu.core_type<tc>, window_params = [{transform_indices = @transform_0, window_bounds = array<i64: 16, 32>}, {transform_indices = @transform_1, window_bounds = array<i64: 32, 128>}, {transform_indices = @transform_2, window_bounds = array<i64: 1, 128>}, {transform_indices = @transform_3, window_bounds = array<i64: 16, 128>}]} {
    %c0 = arith.constant 0 : index
    %c0_0 = arith.constant 0 : index
    %0 = vector.load %arg2[%c0, %c0_0] : memref<16x32xbf16, #tpu.memory_space<vmem>>, vector<16x32xbf16>
    %c0_1 = arith.constant 0 : index
    %c0_2 = arith.constant 0 : index
    %1 = vector.load %arg3[%c0_1, %c0_2] : memref<32x128xbf16, #tpu.memory_space<vmem>>, vector<32x128xbf16>
    %cst = arith.constant dense<0.000000e+00> : vector<16x128xf32>
    %2 = tpu.matmul %0, %1, %cst {dimension_numbers = #tpu.dot_dimension_numbers<[1], [0], [0], [1], [0, 0, 1, 1], [], []>} : vector<16x32xbf16>, vector<32x128xbf16>, vector<16x128xf32> -> vector<16x128xf32>
    %c0_3 = arith.constant 0 : index
    %c0_4 = arith.constant 0 : index
    %3 = vector.load %arg4[%c0_3, %c0_4] : memref<1x128xf32, #tpu.memory_space<vmem>>, vector<1x128xf32>
    %4 = vector.broadcast %3 : vector<1x128xf32> to vector<16x128xf32>
    %5 = arith.addf %2, %4 : vector<16x128xf32>
    %6 = arith.truncf %5 : vector<16x128xf32> to vector<16x128xbf16>
    %c0_5 = arith.constant 0 : index
    %c0_6 = arith.constant 0 : index
    %7 = vector.load %arg5[%c0_5, %c0_6] : memref<16x128xbf16, #tpu.memory_space<vmem>>, vector<16x128xbf16>
    tpu.vector_store %arg5[%c0_5, %c0_6], %6 {strides = array<i32>} : memref<16x128xbf16, #tpu.memory_space<vmem>>, vector<16x128xbf16>,
    return
  }
  func.func @transform_0(%arg0: i32, %arg1: i32) -> (i32, i32) {
    %c0_i32 = arith.constant 0 : i32
    %c0_i32_0 = arith.constant 0 : i32
    return %arg0, %c0_i32 : i32, i32
  }
  func.func @transform_1(%arg0: i32, %arg1: i32) -> (i32, i32) {
    %c0_i32 = arith.constant 0 : i32
    %c0_i32_0 = arith.constant 0 : i32
    return %c0_i32, %arg1 : i32, i32
  }
  func.func @transform_2(%arg0: i32, %arg1: i32) -> (i32, i32) {
    %c0_i32 = arith.constant 0 : i32
    %c0_i32_0 = arith.constant 0 : i32
    return %c0_i32, %arg1 : i32, i32
  }
  func.func @transform_3(%arg0: i32, %arg1: i32) -> (i32, i32) {
    %c0_i32 = arith.constant 0 : i32
    return %arg0, %arg1 : i32, i32
  }
}

module attributes {stable_mosaic.version = 11 : i64} {
  func.func @_matmul_kernel(%arg0: i32, %arg1: i32, %arg2: memref<16x48xbf16, #tpu.memory_space<vmem>>, %arg3: memref<48x128xbf16, #tpu.memory_space<vmem>>, %arg4: memref<1x128xf32, #tpu.memory_space<vmem>>, %arg5: memref<16x128xf32, #tpu.memory_space<vmem>>) attributes {dimension_semantics = [#tpu.dimension_semantics<parallel>, #tpu.dimension_semantics<parallel>], iteration_bounds = array<i64: 1, 1>, scalar_prefetch = 0 : i64, scratch_operands = 0 : i64, tpu.core_type = #tpu.core_type<tc>, window_params = [{transform_indices = @transform_0, window_bounds = array<i64: 16, 48>}, {transform_indices = @transform_1, window_bounds = array<i64: 48, 128>}, {transform_indices = @transform_2, window_bounds = array<i64: 1, 128>}, {transform_indices = @transform_3, window_bounds = array<i64: 16, 128>}]} {
    %c0 = arith.constant 0 : index
    %c0_0 = arith.constant 0 : index
    %0 = vector.load %arg2[%c0, %c0_0] : memref<16x48xbf16, #tpu.memory_space<vmem>>, vector<16x48xbf16>
    %c0_1 = arith.constant 0 : index
    %c0_2 = arith.constant 0 : index
    %1 = vector.load %arg3[%c0_1, %c0_2] : memref<48x128xbf16, #tpu.memory_space<vmem>>, vector<48x128xbf16>
    %cst = arith.constant dense<0.000000e+00> : vector<16x128xf32>
    %2 = tpu.matmul %0, %1, %cst {dimension_numbers = #tpu.dot_dimension_numbers<[1], [0], [0], [1], [0, 0, 1, 1], [], []>} : vector<16x48xbf16>, vector<48x128xbf16>, vector<16x128xf32> -> vector<16x128xf32>
    %c0_3 = arith.constant 0 : index
    %c0_4 = arith.constant 0 : index
    %3 = vector.load %arg4[%c0_3, %c0_4] : memref<1x128xf32, #tpu.memory_space<vmem>>, vector<1x128xf32>
    %4 = vector.broadcast %3 : vector<1x128xf32> to vector<16x128xf32>
    %5 = arith.addf %2, %4 : vector<16x128xf32>
    %c0_5 = arith.constant 0 : index
    %c0_6 = arith.constant 0 : index
    %6 = vector.load %arg5[%c0_5, %c0_6] : memref<16x128xf32, #tpu.memory_space<vmem>>, vector<16x128xf32>
    tpu.vector_store %arg5[%c0_5, %c0_6], %5 {strides = array<i32>} : memref<16x128xf32, #tpu.memory_space<vmem>>, vector<16x128xf32>,
    return
  }
  func.func @transform_0(%arg0: i32, %arg1: i32) -> (i32, i32) {
    %c0_i32 = arith.constant 0 : i32
    %c0_i32_0 = arith.constant 0 : i32
    return %arg0, %c0_i32 : i32, i32
  }
  func.func @transform_1(%arg0: i32, %arg1: i32) -> (i32, i32) {
    %c0_i32 = arith.constant 0 : i32
    %c0_i32_0 = arith.constant 0 : i32
    return %c0_i32, %arg1 : i32, i32
  }
  func.func @transform_2(%arg0: i32, %arg1: i32) -> (i32, i32) {
    %c0_i32 = arith.constant 0 : i32
    %c0_i32_0 = arith.constant 0 : i32
    return %c0_i32, %arg1 : i32, i32
  }
  func.func @transform_3(%arg0: i32, %arg1: i32) -> (i32, i32) {
    %c0_i32 = arith.constant 0 : i32
    return %arg0, %arg1 : i32, i32
  }
}

module attributes {stable_mosaic.version = 11 : i64} {
  func.func @_ln_matmul_kernel(%arg0: i32, %arg1: i32, %arg2: memref<16x32xf32, #tpu.memory_space<vmem>>, %arg3: memref<1x32xf32, #tpu.memory_space<vmem>>, %arg4: memref<1x32xf32, #tpu.memory_space<vmem>>, %arg5: memref<32x128xbf16, #tpu.memory_space<vmem>>, %arg6: memref<1x128xf32, #tpu.memory_space<vmem>>, %arg7: memref<16x128xbf16, #tpu.memory_space<vmem>>, %arg8: memref<16x32xbf16, #tpu.memory_space<vmem>>) attributes {dimension_semantics = [#tpu.dimension_semantics<parallel>, #tpu.dimension_semantics<arbitrary>], iteration_bounds = array<i64: 1, 1>, scalar_prefetch = 0 : i64, scratch_operands = 1 : i64, tpu.core_type = #tpu.core_type<tc>, window_params = [{transform_indices = @transform_0, window_bounds = array<i64: 16, 32>}, {pipeline_mode = #tpu.pipeline_mode<synchronous>, transform_indices = @transform_1, window_bounds = array<i64: 1, 32>}, {pipeline_mode = #tpu.pipeline_mode<synchronous>, transform_indices = @transform_2, window_bounds = array<i64: 1, 32>}, {transform_indices = @transform_3, window_bounds = array<i64: 32, 128>}, {transform_indices = @transform_4, window_bounds = array<i64: 1, 128>}, {transform_indices = @transform_5, window_bounds = array<i64: 16, 128>}]} {
    %c0_i32 = arith.constant 0 : i32
    %0 = arith.cmpi eq, %arg1, %c0_i32 : i32
    %1 = arith.extui %0 : i1 to i32
    %c0_i32_0 = arith.constant 0 : i32
    %2 = arith.cmpi ne, %1, %c0_i32_0 : i32
    scf.if %2 {
      %c0_8 = arith.constant 0 : index
      %c0_9 = arith.constant 0 : index
      %11 = vector.load %arg2[%c0_8, %c0_9] : memref<16x32xf32, #tpu.memory_space<vmem>>, vector<16x32xf32>
      %cst_10 = arith.constant dense<0.000000e+00> : vector<16xf32>
      %12 = vector.multi_reduction <add>, %11, %cst_10 [1] : vector<16x32xf32> to vector<16xf32>
      %13 = vector.shape_cast %12 : vector<16xf32> to vector<16x1xf32>
      %cst_11 = arith.constant 3.200000e+01 : f32
      %14 = vector.broadcast %cst_11 : f32 to vector<16x1xf32>
      %15 = arith.divf %13, %14 : vector<16x1xf32>
      %16 = vector.broadcast %15 : vector<16x1xf32> to vector<16x32xf32>
      %17 = arith.subf %11, %16 : vector<16x32xf32>
      %18 = arith.mulf %17, %17 : vector<16x32xf32>
      %cst_12 = arith.constant dense<0.000000e+00> : vector<16xf32>
      %19 = vector.multi_reduction <add>, %18, %cst_12 [1] : vector<16x32xf32> to vector<16xf32>
      %20 = vector.shape_cast %19 : vector<16xf32> to vector<16x1xf32>
      %cst_13 = arith.constant 3.200000e+01 : f32
      %21 = vector.broadcast %cst_13 : f32 to vector<16x1xf32>
      %22 = arith.divf %20, %21 : vector<16x1xf32>
      %cst_14 = arith.constant 9.99999974E-6 : f32
      %23 = vector.broadcast %cst_14 : f32 to vector<16x1xf32>
      %24 = arith.addf %22, %23 : vector<16x1xf32>
      %25 = math.rsqrt %24 : vector<16x1xf32>
      %26 = vector.broadcast %25 : vector<16x1xf32> to vector<16x32xf32>
      %27 = arith.mulf %17, %26 : vector<16x32xf32>
      %c0_15 = arith.constant 0 : index
      %c0_16 = arith.constant 0 : index
      %28 = vector.load %arg3[%c0_15, %c0_16] : memref<1x32xf32, #tpu.memory_space<vmem>>, vector<1x32xf32>
      %29 = vector.broadcast %28 : vector<1x32xf32> to vector<16x32xf32>
      %30 = arith.mulf %27, %29 : vector<16x32xf32>
      %c0_17 = arith.constant 0 : index
      %c0_18 = arith.constant 0 : index
      %31 = vector.load %arg4[%c0_17, %c0_18] : memref<1x32xf32, #tpu.memory_space<vmem>>, vector<1x32xf32>
      %32 = vector.broadcast %31 : vector<1x32xf32> to vector<16x32xf32>
      %33 = arith.addf %30, %32 : vector<16x32xf32>
      %34 = arith.truncf %33 : vector<16x32xf32> to vector<16x32xbf16>
      %c0_19 = arith.constant 0 : index
      %c0_20 = arith.constant 0 : index
      %35 = vector.load %arg8[%c0_19, %c0_20] : memref<16x32xbf16, #tpu.memory_space<vmem>>, vector<16x32xbf16>
      tpu.vector_store %arg8[%c0_19, %c0_20], %34 {strides = array<i32>} : memref<16x32xbf16, #tpu.memory_space<vmem>>, vector<16x32xbf16>,
    } else {
    }
    %c0 = arith.constant 0 : index
    %c0_1 = arith.constant 0 : index
    %3 = vector.load %arg8[%c0, %c0_1] : memref<16x32xbf16, #tpu.memory_space<vmem>>, vector<16x32xbf16>
    %c0_2 = arith.constant 0 : index
    %c0_3 = arith.constant 0 : index
    %4 = vector.load %arg5[%c0_2, %c0_3] : memref<32x128xbf16, #tpu.memory_space<vmem>>, vector<32x128xbf16>
    %cst = arith.constant dense<0.000000e+00> : vector<16x128xf32>
    %5 = tpu.matmul %3, %4, %cst {dimension_numbers = #tpu.dot_dimension_numbers<[1], [0], [0], [1], [0, 0, 1, 1], [], []>} : vector<16x32xbf16>, vector<32x128xbf16>, vector<16x128xf32> -> vector<16x128xf32>
    %c0_4 = arith.constant 0 : index
    %c0_5 = arith.constant 0 : index
    %6 = vector.load %arg6[%c0_4, %c0_5] : memref<1x128xf32, #tpu.memory_space<vmem>>, vector<1x128xf32>
    %7 = vector.broadcast %6 : vector<1x128xf32> to vector<16x128xf32>
    %8 = arith.addf %5, %7 : vector<16x128xf32>
    %9 = arith.truncf %8 : vector<16x128xf32> to vector<16x128xbf16>
    %c0_6 = arith.constant 0 : index
    %c0_7 = arith.constant 0 : index
    %10 = vector.load %arg7[%c0_6, %c0_7] : memref<16x128xbf16, #tpu.memory_space<vmem>>, vector<16x128xbf16>
    tpu.vector_store %arg7[%c0_6, %c0_7], %9 {strides = array<i32>} : memref<16x128xbf16, #tpu.memory_space<vmem>>, vector<16x128xbf16>,
    return
  }
  func.func @transform_0(%arg0: i32, %arg1: i32) -> (i32, i32) {
    %c0_i32 = arith.constant 0 : i32
    %c0_i32_0 = arith.constant 0 : i32
    return %arg0, %c0_i32 : i32, i32
  }
  func.func @transform_1(%arg0: i32, %arg1: i32) -> (i32, i32) {
    %c0_i32 = arith.constant 0 : i32
    %c0_i32_0 = arith.constant 0 : i32
    %c0_i32_1 = arith.constant 0 : i32
    return %c0_i32, %c0_i32_0 : i32, i32
  }
  func.func @transform_2(%arg0: i32, %arg1: i32) -> (i32, i32) {
    %c0_i32 = arith.constant 0 : i32
    %c0_i32_0 = arith.constant 0 : i32
    %c0_i32_1 = arith.constant 0 : i32
    return %c0_i32, %c0_i32_0 : i32, i32
  }
  func.func @transform_3(%arg0: i32, %arg1: i32) -> (i32, i32) {
    %c0_i32 = arith.constant 0 : i32
    %c0_i32_0 = arith.constant 0 : i32
    return %c0_i32, %arg1 : i32, i32
  }
  func.func @transform_4(%arg0: i32, %arg1: i32) -> (i32, i32) {
    %c0_i32 = arith.constant 0 : i32
    %c0_i32_0 = arith.constant 0 : i32
    return %c0_i32, %arg1 : i32, i32
  }
  func.func @transform_5(%arg0: i32, %arg1: i32) -> (i32, i32) {
    %c0_i32 = arith.constant 0 : i32
    return %arg0, %arg1 : i32, i32
  }
}

module attributes {stable_mosaic.version = 11 : i64} {
  func.func @_mhsa_kernel(%arg0: i32, %arg1: memref<4x2x96xbf16, #tpu.memory_space<vmem>>, %arg2: memref<4x2x32xbf16, #tpu.memory_space<vmem>>) attributes {dimension_semantics = [#tpu.dimension_semantics<parallel>], iteration_bounds = array<i64: 2>, scalar_prefetch = 0 : i64, scratch_operands = 0 : i64, tpu.core_type = #tpu.core_type<tc>, window_params = [{transform_indices = @transform_0, window_bounds = array<i64: 4, 2, 96>}, {transform_indices = @transform_1, window_bounds = array<i64: 4, 2, 32>}]} {
    %c0 = arith.constant 0 : index
    %c0_0 = arith.constant 0 : index
    %c0_1 = arith.constant 0 : index
    %0 = vector.load %arg1[%c0, %c0_0, %c0_1] : memref<4x2x96xbf16, #tpu.memory_space<vmem>>, vector<4x2x96xbf16>
    %1 = vector.extract_strided_slice %0 {offsets = [0, 0, 0], sizes = [4, 2, 8], strides = [1, 1, 1]} : vector<4x2x96xbf16> to vector<4x2x8xbf16>
    %2 = vector.extract_strided_slice %0 {offsets = [0, 0, 32], sizes = [4, 2, 8], strides = [1, 1, 1]} : vector<4x2x96xbf16> to vector<4x2x8xbf16>
    %3 = vector.extract_strided_slice %0 {offsets = [0, 0, 64], sizes = [4, 2, 8], strides = [1, 1, 1]} : vector<4x2x96xbf16> to vector<4x2x8xbf16>
    "tpu.trace_start"() <{level = 10 : i32, message = "gqd,gkd->gqk"}> : () -> ()
    %cst = arith.constant dense<0.000000e+00> : vector<4x2x2xf32>
    %4 = tpu.matmul %1, %2, %cst {dimension_numbers = #tpu.dot_dimension_numbers<[2], [2], [1], [1], [0, 0, 0, 1, 1, 1], [0], [0]>} : vector<4x2x8xbf16>, vector<4x2x8xbf16>, vector<4x2x2xf32> -> vector<4x2x2xf32>
    "tpu.trace_stop"() : () -> ()
    %cst_2 = arith.constant 0.353553385 : f32
    %5 = vector.broadcast %cst_2 : f32 to vector<4x2x2xf32>
    %6 = arith.mulf %4, %5 : vector<4x2x2xf32>
    %cst_3 = arith.constant dense<0xFF800000> : vector<4x2xf32>
    %7 = vector.multi_reduction <maximumf>, %6, %cst_3 [2] : vector<4x2x2xf32> to vector<4x2xf32>
    %8 = vector.shape_cast %7 : vector<4x2xf32> to vector<4x2x1xf32>
    %9 = vector.broadcast %8 : vector<4x2x1xf32> to vector<4x2x2xf32>
    %10 = arith.subf %6, %9 : vector<4x2x2xf32>
    %11 = math.exp %10 : vector<4x2x2xf32>
    %cst_4 = arith.constant dense<0.000000e+00> : vector<4x2xf32>
    %12 = vector.multi_reduction <add>, %11, %cst_4 [2] : vector<4x2x2xf32> to vector<4x2xf32>
    %13 = vector.shape_cast %12 : vector<4x2xf32> to vector<4x2x1xf32>
    %14 = arith.truncf %11 : vector<4x2x2xf32> to vector<4x2x2xbf16>
    "tpu.trace_start"() <{level = 10 : i32, message = "gqk,gkd->gqd"}> : () -> ()
    %cst_5 = arith.constant dense<0.000000e+00> : vector<4x2x8xf32>
    %15 = tpu.matmul %14, %3, %cst_5 {dimension_numbers = #tpu.dot_dimension_numbers<[2], [1], [1], [2], [0, 0, 0, 1, 1, 2], [0], [0]>} : vector<4x2x2xbf16>, vector<4x2x8xbf16>, vector<4x2x8xf32> -> vector<4x2x8xf32>
    "tpu.trace_stop"() : () -> ()
    %16 = vector.broadcast %13 : vector<4x2x1xf32> to vector<4x2x8xf32>
    %17 = arith.divf %15, %16 : vector<4x2x8xf32>
    %18 = arith.truncf %17 : vector<4x2x8xf32> to vector<4x2x8xbf16>
    %c0_6 = arith.constant 0 : index
    %c0_7 = arith.constant 0 : index
    %c0_8 = arith.constant 0 : index
    %19 = vector.load %arg2[%c0_6, %c0_7, %c0_8] : memref<4x2x32xbf16, #tpu.memory_space<vmem>>, vector<4x2x8xbf16>
    tpu.vector_store %arg2[%c0_6, %c0_7, %c0_8], %18 {strides = array<i32>} : memref<4x2x32xbf16, #tpu.memory_space<vmem>>, vector<4x2x8xbf16>,
    %20 = vector.extract_strided_slice %0 {offsets = [0, 0, 8], sizes = [4, 2, 8], strides = [1, 1, 1]} : vector<4x2x96xbf16> to vector<4x2x8xbf16>
    %21 = vector.extract_strided_slice %0 {offsets = [0, 0, 40], sizes = [4, 2, 8], strides = [1, 1, 1]} : vector<4x2x96xbf16> to vector<4x2x8xbf16>
    %22 = vector.extract_strided_slice %0 {offsets = [0, 0, 72], sizes = [4, 2, 8], strides = [1, 1, 1]} : vector<4x2x96xbf16> to vector<4x2x8xbf16>
    "tpu.trace_start"() <{level = 10 : i32, message = "gqd,gkd->gqk"}> : () -> ()
    %cst_9 = arith.constant dense<0.000000e+00> : vector<4x2x2xf32>
    %23 = tpu.matmul %20, %21, %cst_9 {dimension_numbers = #tpu.dot_dimension_numbers<[2], [2], [1], [1], [0, 0, 0, 1, 1, 1], [0], [0]>} : vector<4x2x8xbf16>, vector<4x2x8xbf16>, vector<4x2x2xf32> -> vector<4x2x2xf32>
    "tpu.trace_stop"() : () -> ()
    %cst_10 = arith.constant 0.353553385 : f32
    %24 = vector.broadcast %cst_10 : f32 to vector<4x2x2xf32>
    %25 = arith.mulf %23, %24 : vector<4x2x2xf32>
    %cst_11 = arith.constant dense<0xFF800000> : vector<4x2xf32>
    %26 = vector.multi_reduction <maximumf>, %25, %cst_11 [2] : vector<4x2x2xf32> to vector<4x2xf32>
    %27 = vector.shape_cast %26 : vector<4x2xf32> to vector<4x2x1xf32>
    %28 = vector.broadcast %27 : vector<4x2x1xf32> to vector<4x2x2xf32>
    %29 = arith.subf %25, %28 : vector<4x2x2xf32>
    %30 = math.exp %29 : vector<4x2x2xf32>
    %cst_12 = arith.constant dense<0.000000e+00> : vector<4x2xf32>
    %31 = vector.multi_reduction <add>, %30, %cst_12 [2] : vector<4x2x2xf32> to vector<4x2xf32>
    %32 = vector.shape_cast %31 : vector<4x2xf32> to vector<4x2x1xf32>
    %33 = arith.truncf %30 : vector<4x2x2xf32> to vector<4x2x2xbf16>
    "tpu.trace_start"() <{level = 10 : i32, message = "gqk,gkd->gqd"}> : () -> ()
    %cst_13 = arith.constant dense<0.000000e+00> : vector<4x2x8xf32>
    %34 = tpu.matmul %33, %22, %cst_13 {dimension_numbers = #tpu.dot_dimension_numbers<[2], [1], [1], [2], [0, 0, 0, 1, 1, 2], [0], [0]>} : vector<4x2x2xbf16>, vector<4x2x8xbf16>, vector<4x2x8xf32> -> vector<4x2x8xf32>
    "tpu.trace_stop"() : () -> ()
    %35 = vector.broadcast %32 : vector<4x2x1xf32> to vector<4x2x8xf32>
    %36 = arith.divf %34, %35 : vector<4x2x8xf32>
    %37 = arith.truncf %36 : vector<4x2x8xf32> to vector<4x2x8xbf16>
    %c0_14 = arith.constant 0 : index
    %c0_15 = arith.constant 0 : index
    %c8 = arith.constant 8 : index
    %38 = vector.load %arg2[%c0_14, %c0_15, %c8] : memref<4x2x32xbf16, #tpu.memory_space<vmem>>, vector<4x2x8xbf16>
    tpu.vector_store %arg2[%c0_14, %c0_15, %c8], %37 {strides = array<i32>} : memref<4x2x32xbf16, #tpu.memory_space<vmem>>, vector<4x2x8xbf16>,
    %39 = vector.extract_strided_slice %0 {offsets = [0, 0, 16], sizes = [4, 2, 8], strides = [1, 1, 1]} : vector<4x2x96xbf16> to vector<4x2x8xbf16>
    %40 = vector.extract_strided_slice %0 {offsets = [0, 0, 48], sizes = [4, 2, 8], strides = [1, 1, 1]} : vector<4x2x96xbf16> to vector<4x2x8xbf16>
    %41 = vector.extract_strided_slice %0 {offsets = [0, 0, 80], sizes = [4, 2, 8], strides = [1, 1, 1]} : vector<4x2x96xbf16> to vector<4x2x8xbf16>
    "tpu.trace_start"() <{level = 10 : i32, message = "gqd,gkd->gqk"}> : () -> ()
    %cst_16 = arith.constant dense<0.000000e+00> : vector<4x2x2xf32>
    %42 = tpu.matmul %39, %40, %cst_16 {dimension_numbers = #tpu.dot_dimension_numbers<[2], [2], [1], [1], [0, 0, 0, 1, 1, 1], [0], [0]>} : vector<4x2x8xbf16>, vector<4x2x8xbf16>, vector<4x2x2xf32> -> vector<4x2x2xf32>
    "tpu.trace_stop"() : () -> ()
    %cst_17 = arith.constant 0.353553385 : f32
    %43 = vector.broadcast %cst_17 : f32 to vector<4x2x2xf32>
    %44 = arith.mulf %42, %43 : vector<4x2x2xf32>
    %cst_18 = arith.constant dense<0xFF800000> : vector<4x2xf32>
    %45 = vector.multi_reduction <maximumf>, %44, %cst_18 [2] : vector<4x2x2xf32> to vector<4x2xf32>
    %46 = vector.shape_cast %45 : vector<4x2xf32> to vector<4x2x1xf32>
    %47 = vector.broadcast %46 : vector<4x2x1xf32> to vector<4x2x2xf32>
    %48 = arith.subf %44, %47 : vector<4x2x2xf32>
    %49 = math.exp %48 : vector<4x2x2xf32>
    %cst_19 = arith.constant dense<0.000000e+00> : vector<4x2xf32>
    %50 = vector.multi_reduction <add>, %49, %cst_19 [2] : vector<4x2x2xf32> to vector<4x2xf32>
    %51 = vector.shape_cast %50 : vector<4x2xf32> to vector<4x2x1xf32>
    %52 = arith.truncf %49 : vector<4x2x2xf32> to vector<4x2x2xbf16>
    "tpu.trace_start"() <{level = 10 : i32, message = "gqk,gkd->gqd"}> : () -> ()
    %cst_20 = arith.constant dense<0.000000e+00> : vector<4x2x8xf32>
    %53 = tpu.matmul %52, %41, %cst_20 {dimension_numbers = #tpu.dot_dimension_numbers<[2], [1], [1], [2], [0, 0, 0, 1, 1, 2], [0], [0]>} : vector<4x2x2xbf16>, vector<4x2x8xbf16>, vector<4x2x8xf32> -> vector<4x2x8xf32>
    "tpu.trace_stop"() : () -> ()
    %54 = vector.broadcast %51 : vector<4x2x1xf32> to vector<4x2x8xf32>
    %55 = arith.divf %53, %54 : vector<4x2x8xf32>
    %56 = arith.truncf %55 : vector<4x2x8xf32> to vector<4x2x8xbf16>
    %c0_21 = arith.constant 0 : index
    %c0_22 = arith.constant 0 : index
    %c16 = arith.constant 16 : index
    %57 = vector.load %arg2[%c0_21, %c0_22, %c16] : memref<4x2x32xbf16, #tpu.memory_space<vmem>>, vector<4x2x8xbf16>
    tpu.vector_store %arg2[%c0_21, %c0_22, %c16], %56 {strides = array<i32>} : memref<4x2x32xbf16, #tpu.memory_space<vmem>>, vector<4x2x8xbf16>,
    %58 = vector.extract_strided_slice %0 {offsets = [0, 0, 24], sizes = [4, 2, 8], strides = [1, 1, 1]} : vector<4x2x96xbf16> to vector<4x2x8xbf16>
    %59 = vector.extract_strided_slice %0 {offsets = [0, 0, 56], sizes = [4, 2, 8], strides = [1, 1, 1]} : vector<4x2x96xbf16> to vector<4x2x8xbf16>
    %60 = vector.extract_strided_slice %0 {offsets = [0, 0, 88], sizes = [4, 2, 8], strides = [1, 1, 1]} : vector<4x2x96xbf16> to vector<4x2x8xbf16>
    "tpu.trace_start"() <{level = 10 : i32, message = "gqd,gkd->gqk"}> : () -> ()
    %cst_23 = arith.constant dense<0.000000e+00> : vector<4x2x2xf32>
    %61 = tpu.matmul %58, %59, %cst_23 {dimension_numbers = #tpu.dot_dimension_numbers<[2], [2], [1], [1], [0, 0, 0, 1, 1, 1], [0], [0]>} : vector<4x2x8xbf16>, vector<4x2x8xbf16>, vector<4x2x2xf32> -> vector<4x2x2xf32>
    "tpu.trace_stop"() : () -> ()
    %cst_24 = arith.constant 0.353553385 : f32
    %62 = vector.broadcast %cst_24 : f32 to vector<4x2x2xf32>
    %63 = arith.mulf %61, %62 : vector<4x2x2xf32>
    %cst_25 = arith.constant dense<0xFF800000> : vector<4x2xf32>
    %64 = vector.multi_reduction <maximumf>, %63, %cst_25 [2] : vector<4x2x2xf32> to vector<4x2xf32>
    %65 = vector.shape_cast %64 : vector<4x2xf32> to vector<4x2x1xf32>
    %66 = vector.broadcast %65 : vector<4x2x1xf32> to vector<4x2x2xf32>
    %67 = arith.subf %63, %66 : vector<4x2x2xf32>
    %68 = math.exp %67 : vector<4x2x2xf32>
    %cst_26 = arith.constant dense<0.000000e+00> : vector<4x2xf32>
    %69 = vector.multi_reduction <add>, %68, %cst_26 [2] : vector<4x2x2xf32> to vector<4x2xf32>
    %70 = vector.shape_cast %69 : vector<4x2xf32> to vector<4x2x1xf32>
    %71 = arith.truncf %68 : vector<4x2x2xf32> to vector<4x2x2xbf16>
    "tpu.trace_start"() <{level = 10 : i32, message = "gqk,gkd->gqd"}> : () -> ()
    %cst_27 = arith.constant dense<0.000000e+00> : vector<4x2x8xf32>
    %72 = tpu.matmul %71, %60, %cst_27 {dimension_numbers = #tpu.dot_dimension_numbers<[2], [1], [1], [2], [0, 0, 0, 1, 1, 2], [0], [0]>} : vector<4x2x2xbf16>, vector<4x2x8xbf16>, vector<4x2x8xf32> -> vector<4x2x8xf32>
    "tpu.trace_stop"() : () -> ()
    %73 = vector.broadcast %70 : vector<4x2x1xf32> to vector<4x2x8xf32>
    %74 = arith.divf %72, %73 : vector<4x2x8xf32>
    %75 = arith.truncf %74 : vector<4x2x8xf32> to vector<4x2x8xbf16>
    %c0_28 = arith.constant 0 : index
    %c0_29 = arith.constant 0 : index
    %c24 = arith.constant 24 : index
    %76 = vector.load %arg2[%c0_28, %c0_29, %c24] : memref<4x2x32xbf16, #tpu.memory_space<vmem>>, vector<4x2x8xbf16>
    tpu.vector_store %arg2[%c0_28, %c0_29, %c24], %75 {strides = array<i32>} : memref<4x2x32xbf16, #tpu.memory_space<vmem>>, vector<4x2x8xbf16>,
    return
  }
  func.func @transform_0(%arg0: i32) -> (i32, i32, i32) {
    %c0_i32 = arith.constant 0 : i32
    %c0_i32_0 = arith.constant 0 : i32
    %c0_i32_1 = arith.constant 0 : i32
    return %arg0, %c0_i32, %c0_i32_0 : i32, i32, i32
  }
  func.func @transform_1(%arg0: i32) -> (i32, i32, i32) {
    %c0_i32 = arith.constant 0 : i32
    %c0_i32_0 = arith.constant 0 : i32
    %c0_i32_1 = arith.constant 0 : i32
    return %arg0, %c0_i32, %c0_i32_0 : i32, i32, i32
  }
}

module attributes {stable_mosaic.version = 11 : i64} {
  func.func @_mhsa_kernel(%arg0: i32, %arg1: memref<2x5x96xbf16, #tpu.memory_space<vmem>>, %arg2: memref<2x5x32xbf16, #tpu.memory_space<vmem>>) attributes {dimension_semantics = [#tpu.dimension_semantics<parallel>], iteration_bounds = array<i64: 2>, scalar_prefetch = 0 : i64, scratch_operands = 0 : i64, tpu.core_type = #tpu.core_type<tc>, window_params = [{transform_indices = @transform_0, window_bounds = array<i64: 2, 5, 96>}, {transform_indices = @transform_1, window_bounds = array<i64: 2, 5, 32>}]} {
    %c0 = arith.constant 0 : index
    %c0_0 = arith.constant 0 : index
    %c0_1 = arith.constant 0 : index
    %0 = vector.load %arg1[%c0, %c0_0, %c0_1] : memref<2x5x96xbf16, #tpu.memory_space<vmem>>, vector<2x5x96xbf16>
    %1 = vector.extract_strided_slice %0 {offsets = [0, 0, 0], sizes = [2, 5, 8], strides = [1, 1, 1]} : vector<2x5x96xbf16> to vector<2x5x8xbf16>
    %2 = vector.extract_strided_slice %0 {offsets = [0, 0, 32], sizes = [2, 5, 8], strides = [1, 1, 1]} : vector<2x5x96xbf16> to vector<2x5x8xbf16>
    %3 = vector.extract_strided_slice %0 {offsets = [0, 0, 64], sizes = [2, 5, 8], strides = [1, 1, 1]} : vector<2x5x96xbf16> to vector<2x5x8xbf16>
    "tpu.trace_start"() <{level = 10 : i32, message = "gqd,gkd->gqk"}> : () -> ()
    %cst = arith.constant dense<0.000000e+00> : vector<2x5x5xf32>
    %4 = tpu.matmul %1, %2, %cst {dimension_numbers = #tpu.dot_dimension_numbers<[2], [2], [1], [1], [0, 0, 0, 1, 1, 1], [0], [0]>} : vector<2x5x8xbf16>, vector<2x5x8xbf16>, vector<2x5x5xf32> -> vector<2x5x5xf32>
    "tpu.trace_stop"() : () -> ()
    %cst_2 = arith.constant 0.353553385 : f32
    %5 = vector.broadcast %cst_2 : f32 to vector<2x5x5xf32>
    %6 = arith.mulf %4, %5 : vector<2x5x5xf32>
    %cst_3 = arith.constant dense<0xFF800000> : vector<2x5xf32>
    %7 = vector.multi_reduction <maximumf>, %6, %cst_3 [2] : vector<2x5x5xf32> to vector<2x5xf32>
    %8 = vector.shape_cast %7 : vector<2x5xf32> to vector<2x5x1xf32>
    %9 = vector.broadcast %8 : vector<2x5x1xf32> to vector<2x5x5xf32>
    %10 = arith.subf %6, %9 : vector<2x5x5xf32>
    %11 = math.exp %10 : vector<2x5x5xf32>
    %cst_4 = arith.constant dense<0.000000e+00> : vector<2x5xf32>
    %12 = vector.multi_reduction <add>, %11, %cst_4 [2] : vector<2x5x5xf32> to vector<2x5xf32>
    %13 = vector.shape_cast %12 : vector<2x5xf32> to vector<2x5x1xf32>
    %14 = arith.truncf %11 : vector<2x5x5xf32> to vector<2x5x5xbf16>
    "tpu.trace_start"() <{level = 10 : i32, message = "gqk,gkd->gqd"}> : () -> ()
    %cst_5 = arith.constant dense<0.000000e+00> : vector<2x5x8xf32>
    %15 = tpu.matmul %14, %3, %cst_5 {dimension_numbers = #tpu.dot_dimension_numbers<[2], [1], [1], [2], [0, 0, 0, 1, 1, 2], [0], [0]>} : vector<2x5x5xbf16>, vector<2x5x8xbf16>, vector<2x5x8xf32> -> vector<2x5x8xf32>
    "tpu.trace_stop"() : () -> ()
    %16 = vector.broadcast %13 : vector<2x5x1xf32> to vector<2x5x8xf32>
    %17 = arith.divf %15, %16 : vector<2x5x8xf32>
    %18 = arith.truncf %17 : vector<2x5x8xf32> to vector<2x5x8xbf16>
    %c0_6 = arith.constant 0 : index
    %c0_7 = arith.constant 0 : index
    %c0_8 = arith.constant 0 : index
    %19 = vector.load %arg2[%c0_6, %c0_7, %c0_8] : memref<2x5x32xbf16, #tpu.memory_space<vmem>>, vector<2x5x8xbf16>
    tpu.vector_store %arg2[%c0_6, %c0_7, %c0_8], %18 {strides = array<i32>} : memref<2x5x32xbf16, #tpu.memory_space<vmem>>, vector<2x5x8xbf16>,
    %20 = vector.extract_strided_slice %0 {offsets = [0, 0, 8], sizes = [2, 5, 8], strides = [1, 1, 1]} : vector<2x5x96xbf16> to vector<2x5x8xbf16>
    %21 = vector.extract_strided_slice %0 {offsets = [0, 0, 40], sizes = [2, 5, 8], strides = [1, 1, 1]} : vector<2x5x96xbf16> to vector<2x5x8xbf16>
    %22 = vector.extract_strided_slice %0 {offsets = [0, 0, 72], sizes = [2, 5, 8], strides = [1, 1, 1]} : vector<2x5x96xbf16> to vector<2x5x8xbf16>
    "tpu.trace_start"() <{level = 10 : i32, message = "gqd,gkd->gqk"}> : () -> ()
    %cst_9 = arith.constant dense<0.000000e+00> : vector<2x5x5xf32>
    %23 = tpu.matmul %20, %21, %cst_9 {dimension_numbers = #tpu.dot_dimension_numbers<[2], [2], [1], [1], [0, 0, 0, 1, 1, 1], [0], [0]>} : vector<2x5x8xbf16>, vector<2x5x8xbf16>, vector<2x5x5xf32> -> vector<2x5x5xf32>
    "tpu.trace_stop"() : () -> ()
    %cst_10 = arith.constant 0.353553385 : f32
    %24 = vector.broadcast %cst_10 : f32 to vector<2x5x5xf32>
    %25 = arith.mulf %23, %24 : vector<2x5x5xf32>
    %cst_11 = arith.constant dense<0xFF800000> : vector<2x5xf32>
    %26 = vector.multi_reduction <maximumf>, %25, %cst_11 [2] : vector<2x5x5xf32> to vector<2x5xf32>
    %27 = vector.shape_cast %26 : vector<2x5xf32> to vector<2x5x1xf32>
    %28 = vector.broadcast %27 : vector<2x5x1xf32> to vector<2x5x5xf32>
    %29 = arith.subf %25, %28 : vector<2x5x5xf32>
    %30 = math.exp %29 : vector<2x5x5xf32>
    %cst_12 = arith.constant dense<0.000000e+00> : vector<2x5xf32>
    %31 = vector.multi_reduction <add>, %30, %cst_12 [2] : vector<2x5x5xf32> to vector<2x5xf32>
    %32 = vector.shape_cast %31 : vector<2x5xf32> to vector<2x5x1xf32>
    %33 = arith.truncf %30 : vector<2x5x5xf32> to vector<2x5x5xbf16>
    "tpu.trace_start"() <{level = 10 : i32, message = "gqk,gkd->gqd"}> : () -> ()
    %cst_13 = arith.constant dense<0.000000e+00> : vector<2x5x8xf32>
    %34 = tpu.matmul %33, %22, %cst_13 {dimension_numbers = #tpu.dot_dimension_numbers<[2], [1], [1], [2], [0, 0, 0, 1, 1, 2], [0], [0]>} : vector<2x5x5xbf16>, vector<2x5x8xbf16>, vector<2x5x8xf32> -> vector<2x5x8xf32>
    "tpu.trace_stop"() : () -> ()
    %35 = vector.broadcast %32 : vector<2x5x1xf32> to vector<2x5x8xf32>
    %36 = arith.divf %34, %35 : vector<2x5x8xf32>
    %37 = arith.truncf %36 : vector<2x5x8xf32> to vector<2x5x8xbf16>
    %c0_14 = arith.constant 0 : index
    %c0_15 = arith.constant 0 : index
    %c8 = arith.constant 8 : index
    %38 = vector.load %arg2[%c0_14, %c0_15, %c8] : memref<2x5x32xbf16, #tpu.memory_space<vmem>>, vector<2x5x8xbf16>
    tpu.vector_store %arg2[%c0_14, %c0_15, %c8], %37 {strides = array<i32>} : memref<2x5x32xbf16, #tpu.memory_space<vmem>>, vector<2x5x8xbf16>,
    %39 = vector.extract_strided_slice %0 {offsets = [0, 0, 16], sizes = [2, 5, 8], strides = [1, 1, 1]} : vector<2x5x96xbf16> to vector<2x5x8xbf16>
    %40 = vector.extract_strided_slice %0 {offsets = [0, 0, 48], sizes = [2, 5, 8], strides = [1, 1, 1]} : vector<2x5x96xbf16> to vector<2x5x8xbf16>
    %41 = vector.extract_strided_slice %0 {offsets = [0, 0, 80], sizes = [2, 5, 8], strides = [1, 1, 1]} : vector<2x5x96xbf16> to vector<2x5x8xbf16>
    "tpu.trace_start"() <{level = 10 : i32, message = "gqd,gkd->gqk"}> : () -> ()
    %cst_16 = arith.constant dense<0.000000e+00> : vector<2x5x5xf32>
    %42 = tpu.matmul %39, %40, %cst_16 {dimension_numbers = #tpu.dot_dimension_numbers<[2], [2], [1], [1], [0, 0, 0, 1, 1, 1], [0], [0]>} : vector<2x5x8xbf16>, vector<2x5x8xbf16>, vector<2x5x5xf32> -> vector<2x5x5xf32>
    "tpu.trace_stop"() : () -> ()
    %cst_17 = arith.constant 0.353553385 : f32
    %43 = vector.broadcast %cst_17 : f32 to vector<2x5x5xf32>
    %44 = arith.mulf %42, %43 : vector<2x5x5xf32>
    %cst_18 = arith.constant dense<0xFF800000> : vector<2x5xf32>
    %45 = vector.multi_reduction <maximumf>, %44, %cst_18 [2] : vector<2x5x5xf32> to vector<2x5xf32>
    %46 = vector.shape_cast %45 : vector<2x5xf32> to vector<2x5x1xf32>
    %47 = vector.broadcast %46 : vector<2x5x1xf32> to vector<2x5x5xf32>
    %48 = arith.subf %44, %47 : vector<2x5x5xf32>
    %49 = math.exp %48 : vector<2x5x5xf32>
    %cst_19 = arith.constant dense<0.000000e+00> : vector<2x5xf32>
    %50 = vector.multi_reduction <add>, %49, %cst_19 [2] : vector<2x5x5xf32> to vector<2x5xf32>
    %51 = vector.shape_cast %50 : vector<2x5xf32> to vector<2x5x1xf32>
    %52 = arith.truncf %49 : vector<2x5x5xf32> to vector<2x5x5xbf16>
    "tpu.trace_start"() <{level = 10 : i32, message = "gqk,gkd->gqd"}> : () -> ()
    %cst_20 = arith.constant dense<0.000000e+00> : vector<2x5x8xf32>
    %53 = tpu.matmul %52, %41, %cst_20 {dimension_numbers = #tpu.dot_dimension_numbers<[2], [1], [1], [2], [0, 0, 0, 1, 1, 2], [0], [0]>} : vector<2x5x5xbf16>, vector<2x5x8xbf16>, vector<2x5x8xf32> -> vector<2x5x8xf32>
    "tpu.trace_stop"() : () -> ()
    %54 = vector.broadcast %51 : vector<2x5x1xf32> to vector<2x5x8xf32>
    %55 = arith.divf %53, %54 : vector<2x5x8xf32>
    %56 = arith.truncf %55 : vector<2x5x8xf32> to vector<2x5x8xbf16>
    %c0_21 = arith.constant 0 : index
    %c0_22 = arith.constant 0 : index
    %c16 = arith.constant 16 : index
    %57 = vector.load %arg2[%c0_21, %c0_22, %c16] : memref<2x5x32xbf16, #tpu.memory_space<vmem>>, vector<2x5x8xbf16>
    tpu.vector_store %arg2[%c0_21, %c0_22, %c16], %56 {strides = array<i32>} : memref<2x5x32xbf16, #tpu.memory_space<vmem>>, vector<2x5x8xbf16>,
    %58 = vector.extract_strided_slice %0 {offsets = [0, 0, 24], sizes = [2, 5, 8], strides = [1, 1, 1]} : vector<2x5x96xbf16> to vector<2x5x8xbf16>
    %59 = vector.extract_strided_slice %0 {offsets = [0, 0, 56], sizes = [2, 5, 8], strides = [1, 1, 1]} : vector<2x5x96xbf16> to vector<2x5x8xbf16>
    %60 = vector.extract_strided_slice %0 {offsets = [0, 0, 88], sizes = [2, 5, 8], strides = [1, 1, 1]} : vector<2x5x96xbf16> to vector<2x5x8xbf16>
    "tpu.trace_start"() <{level = 10 : i32, message = "gqd,gkd->gqk"}> : () -> ()
    %cst_23 = arith.constant dense<0.000000e+00> : vector<2x5x5xf32>
    %61 = tpu.matmul %58, %59, %cst_23 {dimension_numbers = #tpu.dot_dimension_numbers<[2], [2], [1], [1], [0, 0, 0, 1, 1, 1], [0], [0]>} : vector<2x5x8xbf16>, vector<2x5x8xbf16>, vector<2x5x5xf32> -> vector<2x5x5xf32>
    "tpu.trace_stop"() : () -> ()
    %cst_24 = arith.constant 0.353553385 : f32
    %62 = vector.broadcast %cst_24 : f32 to vector<2x5x5xf32>
    %63 = arith.mulf %61, %62 : vector<2x5x5xf32>
    %cst_25 = arith.constant dense<0xFF800000> : vector<2x5xf32>
    %64 = vector.multi_reduction <maximumf>, %63, %cst_25 [2] : vector<2x5x5xf32> to vector<2x5xf32>
    %65 = vector.shape_cast %64 : vector<2x5xf32> to vector<2x5x1xf32>
    %66 = vector.broadcast %65 : vector<2x5x1xf32> to vector<2x5x5xf32>
    %67 = arith.subf %63, %66 : vector<2x5x5xf32>
    %68 = math.exp %67 : vector<2x5x5xf32>
    %cst_26 = arith.constant dense<0.000000e+00> : vector<2x5xf32>
    %69 = vector.multi_reduction <add>, %68, %cst_26 [2] : vector<2x5x5xf32> to vector<2x5xf32>
    %70 = vector.shape_cast %69 : vector<2x5xf32> to vector<2x5x1xf32>
    %71 = arith.truncf %68 : vector<2x5x5xf32> to vector<2x5x5xbf16>
    "tpu.trace_start"() <{level = 10 : i32, message = "gqk,gkd->gqd"}> : () -> ()
    %cst_27 = arith.constant dense<0.000000e+00> : vector<2x5x8xf32>
    %72 = tpu.matmul %71, %60, %cst_27 {dimension_numbers = #tpu.dot_dimension_numbers<[2], [1], [1], [2], [0, 0, 0, 1, 1, 2], [0], [0]>} : vector<2x5x5xbf16>, vector<2x5x8xbf16>, vector<2x5x8xf32> -> vector<2x5x8xf32>
    "tpu.trace_stop"() : () -> ()
    %73 = vector.broadcast %70 : vector<2x5x1xf32> to vector<2x5x8xf32>
    %74 = arith.divf %72, %73 : vector<2x5x8xf32>
    %75 = arith.truncf %74 : vector<2x5x8xf32> to vector<2x5x8xbf16>
    %c0_28 = arith.constant 0 : index
    %c0_29 = arith.constant 0 : index
    %c24 = arith.constant 24 : index
    %76 = vector.load %arg2[%c0_28, %c0_29, %c24] : memref<2x5x32xbf16, #tpu.memory_space<vmem>>, vector<2x5x8xbf16>
    tpu.vector_store %arg2[%c0_28, %c0_29, %c24], %75 {strides = array<i32>} : memref<2x5x32xbf16, #tpu.memory_space<vmem>>, vector<2x5x8xbf16>,
    return
  }
  func.func @transform_0(%arg0: i32) -> (i32, i32, i32) {
    %c0_i32 = arith.constant 0 : i32
    %c0_i32_0 = arith.constant 0 : i32
    %c0_i32_1 = arith.constant 0 : i32
    return %arg0, %c0_i32, %c0_i32_0 : i32, i32, i32
  }
  func.func @transform_1(%arg0: i32) -> (i32, i32, i32) {
    %c0_i32 = arith.constant 0 : i32
    %c0_i32_0 = arith.constant 0 : i32
    %c0_i32_1 = arith.constant 0 : i32
    return %arg0, %c0_i32, %c0_i32_0 : i32, i32, i32
  }
}

module attributes {stable_mosaic.version = 11 : i64} {
  func.func @_matmul_kernel(%arg0: i32, %arg1: i32, %arg2: memref<16x32xbf16, #tpu.memory_space<vmem>>, %arg3: memref<32x128xbf16, #tpu.memory_space<vmem>>, %arg4: memref<1x128xf32, #tpu.memory_space<vmem>>, %arg5: memref<16x128xf32, #tpu.memory_space<vmem>>, %arg6: memref<16x128xf32, #tpu.memory_space<vmem>>) attributes {dimension_semantics = [#tpu.dimension_semantics<parallel>, #tpu.dimension_semantics<parallel>], iteration_bounds = array<i64: 1, 1>, scalar_prefetch = 0 : i64, scratch_operands = 0 : i64, tpu.core_type = #tpu.core_type<tc>, window_params = [{transform_indices = @transform_0, window_bounds = array<i64: 16, 32>}, {transform_indices = @transform_1, window_bounds = array<i64: 32, 128>}, {transform_indices = @transform_2, window_bounds = array<i64: 1, 128>}, {transform_indices = @transform_3, window_bounds = array<i64: 16, 128>}, {transform_indices = @transform_4, window_bounds = array<i64: 16, 128>}]} {
    %c0 = arith.constant 0 : index
    %c0_0 = arith.constant 0 : index
    %0 = vector.load %arg2[%c0, %c0_0] : memref<16x32xbf16, #tpu.memory_space<vmem>>, vector<16x32xbf16>
    %c0_1 = arith.constant 0 : index
    %c0_2 = arith.constant 0 : index
    %1 = vector.load %arg3[%c0_1, %c0_2] : memref<32x128xbf16, #tpu.memory_space<vmem>>, vector<32x128xbf16>
    %cst = arith.constant dense<0.000000e+00> : vector<16x128xf32>
    %2 = tpu.matmul %0, %1, %cst {dimension_numbers = #tpu.dot_dimension_numbers<[1], [0], [0], [1], [0, 0, 1, 1], [], []>} : vector<16x32xbf16>, vector<32x128xbf16>, vector<16x128xf32> -> vector<16x128xf32>
    %c0_3 = arith.constant 0 : index
    %c0_4 = arith.constant 0 : index
    %3 = vector.load %arg4[%c0_3, %c0_4] : memref<1x128xf32, #tpu.memory_space<vmem>>, vector<1x128xf32>
    %4 = vector.broadcast %3 : vector<1x128xf32> to vector<16x128xf32>
    %5 = arith.addf %2, %4 : vector<16x128xf32>
    %c0_5 = arith.constant 0 : index
    %c0_6 = arith.constant 0 : index
    %6 = vector.load %arg5[%c0_5, %c0_6] : memref<16x128xf32, #tpu.memory_space<vmem>>, vector<16x128xf32>
    %7 = arith.addf %5, %6 : vector<16x128xf32>
    %c0_7 = arith.constant 0 : index
    %c0_8 = arith.constant 0 : index
    %8 = vector.load %arg6[%c0_7, %c0_8] : memref<16x128xf32, #tpu.memory_space<vmem>>, vector<16x128xf32>
    tpu.vector_store %arg6[%c0_7, %c0_8], %7 {strides = array<i32>} : memref<16x128xf32, #tpu.memory_space<vmem>>, vector<16x128xf32>,
    return
  }
  func.func @transform_0(%arg0: i32, %arg1: i32) -> (i32, i32) {
    %c0_i32 = arith.constant 0 : i32
    %c0_i32_0 = arith.constant 0 : i32
    return %arg0, %c0_i32 : i32, i32
  }
  func.func @transform_1(%arg0: i32, %arg1: i32) -> (i32, i32) {
    %c0_i32 = arith.constant 0 : i32
    %c0_i32_0 = arith.constant 0 : i32
    return %c0_i32, %arg1 : i32, i32
  }
  func.func @transform_2(%arg0: i32, %arg1: i32) -> (i32, i32) {
    %c0_i32 = arith.constant 0 : i32
    %c0_i32_0 = arith.constant 0 : i32
    return %c0_i32, %arg1 : i32, i32
  }
  func.func @transform_3(%arg0: i32, %arg1: i32) -> (i32, i32) {
    %c0_i32 = arith.constant 0 : i32
    return %arg0, %arg1 : i32, i32
  }
  func.func @transform_4(%arg0: i32, %arg1: i32) -> (i32, i32) {
    %c0_i32 = arith.constant 0 : i32
    return %arg0, %arg1 : i32, i32
  }
}

module attributes {stable_mosaic.version = 11 : i64} {
  func.func @_ln_matmul_kernel(%arg0: i32, %arg1: i32, %arg2: memref<24x32xf32, #tpu.memory_space<vmem>>, %arg3: memref<1x32xf32, #tpu.memory_space<vmem>>, %arg4: memref<1x32xf32, #tpu.memory_space<vmem>>, %arg5: memref<32x128xbf16, #tpu.memory_space<vmem>>, %arg6: memref<1x128xf32, #tpu.memory_space<vmem>>, %arg7: memref<24x128xbf16, #tpu.memory_space<vmem>>, %arg8: memref<24x32xbf16, #tpu.memory_space<vmem>>) attributes {dimension_semantics = [#tpu.dimension_semantics<parallel>, #tpu.dimension_semantics<arbitrary>], iteration_bounds = array<i64: 1, 1>, scalar_prefetch = 0 : i64, scratch_operands = 1 : i64, tpu.core_type = #tpu.core_type<tc>, window_params = [{transform_indices = @transform_0, window_bounds = array<i64: 24, 32>}, {pipeline_mode = #tpu.pipeline_mode<synchronous>, transform_indices = @transform_1, window_bounds = array<i64: 1, 32>}, {pipeline_mode = #tpu.pipeline_mode<synchronous>, transform_indices = @transform_2, window_bounds = array<i64: 1, 32>}, {transform_indices = @transform_3, window_bounds = array<i64: 32, 128>}, {transform_indices = @transform_4, window_bounds = array<i64: 1, 128>}, {transform_indices = @transform_5, window_bounds = array<i64: 24, 128>}]} {
    %c0_i32 = arith.constant 0 : i32
    %0 = arith.cmpi eq, %arg1, %c0_i32 : i32
    %1 = arith.extui %0 : i1 to i32
    %c0_i32_0 = arith.constant 0 : i32
    %2 = arith.cmpi ne, %1, %c0_i32_0 : i32
    scf.if %2 {
      %c0_8 = arith.constant 0 : index
      %c0_9 = arith.constant 0 : index
      %11 = vector.load %arg2[%c0_8, %c0_9] : memref<24x32xf32, #tpu.memory_space<vmem>>, vector<24x32xf32>
      %cst_10 = arith.constant dense<0.000000e+00> : vector<24xf32>
      %12 = vector.multi_reduction <add>, %11, %cst_10 [1] : vector<24x32xf32> to vector<24xf32>
      %13 = vector.shape_cast %12 : vector<24xf32> to vector<24x1xf32>
      %cst_11 = arith.constant 3.200000e+01 : f32
      %14 = vector.broadcast %cst_11 : f32 to vector<24x1xf32>
      %15 = arith.divf %13, %14 : vector<24x1xf32>
      %16 = vector.broadcast %15 : vector<24x1xf32> to vector<24x32xf32>
      %17 = arith.subf %11, %16 : vector<24x32xf32>
      %18 = arith.mulf %17, %17 : vector<24x32xf32>
      %cst_12 = arith.constant dense<0.000000e+00> : vector<24xf32>
      %19 = vector.multi_reduction <add>, %18, %cst_12 [1] : vector<24x32xf32> to vector<24xf32>
      %20 = vector.shape_cast %19 : vector<24xf32> to vector<24x1xf32>
      %cst_13 = arith.constant 3.200000e+01 : f32
      %21 = vector.broadcast %cst_13 : f32 to vector<24x1xf32>
      %22 = arith.divf %20, %21 : vector<24x1xf32>
      %cst_14 = arith.constant 9.99999974E-6 : f32
      %23 = vector.broadcast %cst_14 : f32 to vector<24x1xf32>
      %24 = arith.addf %22, %23 : vector<24x1xf32>
      %25 = math.rsqrt %24 : vector<24x1xf32>
      %26 = vector.broadcast %25 : vector<24x1xf32> to vector<24x32xf32>
      %27 = arith.mulf %17, %26 : vector<24x32xf32>
      %c0_15 = arith.constant 0 : index
      %c0_16 = arith.constant 0 : index
      %28 = vector.load %arg3[%c0_15, %c0_16] : memref<1x32xf32, #tpu.memory_space<vmem>>, vector<1x32xf32>
      %29 = vector.broadcast %28 : vector<1x32xf32> to vector<24x32xf32>
      %30 = arith.mulf %27, %29 : vector<24x32xf32>
      %c0_17 = arith.constant 0 : index
      %c0_18 = arith.constant 0 : index
      %31 = vector.load %arg4[%c0_17, %c0_18] : memref<1x32xf32, #tpu.memory_space<vmem>>, vector<1x32xf32>
      %32 = vector.broadcast %31 : vector<1x32xf32> to vector<24x32xf32>
      %33 = arith.addf %30, %32 : vector<24x32xf32>
      %34 = arith.truncf %33 : vector<24x32xf32> to vector<24x32xbf16>
      %c0_19 = arith.constant 0 : index
      %c0_20 = arith.constant 0 : index
      %35 = vector.load %arg8[%c0_19, %c0_20] : memref<24x32xbf16, #tpu.memory_space<vmem>>, vector<24x32xbf16>
      tpu.vector_store %arg8[%c0_19, %c0_20], %34 {strides = array<i32>} : memref<24x32xbf16, #tpu.memory_space<vmem>>, vector<24x32xbf16>,
    } else {
    }
    %c0 = arith.constant 0 : index
    %c0_1 = arith.constant 0 : index
    %3 = vector.load %arg8[%c0, %c0_1] : memref<24x32xbf16, #tpu.memory_space<vmem>>, vector<24x32xbf16>
    %c0_2 = arith.constant 0 : index
    %c0_3 = arith.constant 0 : index
    %4 = vector.load %arg5[%c0_2, %c0_3] : memref<32x128xbf16, #tpu.memory_space<vmem>>, vector<32x128xbf16>
    %cst = arith.constant dense<0.000000e+00> : vector<24x128xf32>
    %5 = tpu.matmul %3, %4, %cst {dimension_numbers = #tpu.dot_dimension_numbers<[1], [0], [0], [1], [0, 0, 1, 1], [], []>} : vector<24x32xbf16>, vector<32x128xbf16>, vector<24x128xf32> -> vector<24x128xf32>
    %c0_4 = arith.constant 0 : index
    %c0_5 = arith.constant 0 : index
    %6 = vector.load %arg6[%c0_4, %c0_5] : memref<1x128xf32, #tpu.memory_space<vmem>>, vector<1x128xf32>
    %7 = vector.broadcast %6 : vector<1x128xf32> to vector<24x128xf32>
    %8 = arith.addf %5, %7 : vector<24x128xf32>
    %9 = arith.truncf %8 : vector<24x128xf32> to vector<24x128xbf16>
    %c0_6 = arith.constant 0 : index
    %c0_7 = arith.constant 0 : index
    %10 = vector.load %arg7[%c0_6, %c0_7] : memref<24x128xbf16, #tpu.memory_space<vmem>>, vector<24x128xbf16>
    tpu.vector_store %arg7[%c0_6, %c0_7], %9 {strides = array<i32>} : memref<24x128xbf16, #tpu.memory_space<vmem>>, vector<24x128xbf16>,
    return
  }
  func.func @transform_0(%arg0: i32, %arg1: i32) -> (i32, i32) {
    %c0_i32 = arith.constant 0 : i32
    %c0_i32_0 = arith.constant 0 : i32
    return %arg0, %c0_i32 : i32, i32
  }
  func.func @transform_1(%arg0: i32, %arg1: i32) -> (i32, i32) {
    %c0_i32 = arith.constant 0 : i32
    %c0_i32_0 = arith.constant 0 : i32
    %c0_i32_1 = arith.constant 0 : i32
    return %c0_i32, %c0_i32_0 : i32, i32
  }
  func.func @transform_2(%arg0: i32, %arg1: i32) -> (i32, i32) {
    %c0_i32 = arith.constant 0 : i32
    %c0_i32_0 = arith.constant 0 : i32
    %c0_i32_1 = arith.constant 0 : i32
    return %c0_i32, %c0_i32_0 : i32, i32
  }
  func.func @transform_3(%arg0: i32, %arg1: i32) -> (i32, i32) {
    %c0_i32 = arith.constant 0 : i32
    %c0_i32_0 = arith.constant 0 : i32
    return %c0_i32, %arg1 : i32, i32
  }
  func.func @transform_4(%arg0: i32, %arg1: i32) -> (i32, i32) {
    %c0_i32 = arith.constant 0 : i32
    %c0_i32_0 = arith.constant 0 : i32
    return %c0_i32, %arg1 : i32, i32
  }
  func.func @transform_5(%arg0: i32, %arg1: i32) -> (i32, i32) {
    %c0_i32 = arith.constant 0 : i32
    return %arg0, %arg1 : i32, i32
  }
}

module attributes {stable_mosaic.version = 11 : i64} {
  func.func @_matmul_kernel(%arg0: i32, %arg1: i32, %arg2: memref<24x32xbf16, #tpu.memory_space<vmem>>, %arg3: memref<32x128xbf16, #tpu.memory_space<vmem>>, %arg4: memref<1x128xf32, #tpu.memory_space<vmem>>, %arg5: memref<24x128xf32, #tpu.memory_space<vmem>>) attributes {dimension_semantics = [#tpu.dimension_semantics<parallel>, #tpu.dimension_semantics<parallel>], iteration_bounds = array<i64: 1, 1>, scalar_prefetch = 0 : i64, scratch_operands = 0 : i64, tpu.core_type = #tpu.core_type<tc>, window_params = [{transform_indices = @transform_0, window_bounds = array<i64: 24, 32>}, {transform_indices = @transform_1, window_bounds = array<i64: 32, 128>}, {transform_indices = @transform_2, window_bounds = array<i64: 1, 128>}, {transform_indices = @transform_3, window_bounds = array<i64: 24, 128>}]} {
    %c0 = arith.constant 0 : index
    %c0_0 = arith.constant 0 : index
    %0 = vector.load %arg2[%c0, %c0_0] : memref<24x32xbf16, #tpu.memory_space<vmem>>, vector<24x32xbf16>
    %c0_1 = arith.constant 0 : index
    %c0_2 = arith.constant 0 : index
    %1 = vector.load %arg3[%c0_1, %c0_2] : memref<32x128xbf16, #tpu.memory_space<vmem>>, vector<32x128xbf16>
    %cst = arith.constant dense<0.000000e+00> : vector<24x128xf32>
    %2 = tpu.matmul %0, %1, %cst {dimension_numbers = #tpu.dot_dimension_numbers<[1], [0], [0], [1], [0, 0, 1, 1], [], []>} : vector<24x32xbf16>, vector<32x128xbf16>, vector<24x128xf32> -> vector<24x128xf32>
    %c0_3 = arith.constant 0 : index
    %c0_4 = arith.constant 0 : index
    %3 = vector.load %arg4[%c0_3, %c0_4] : memref<1x128xf32, #tpu.memory_space<vmem>>, vector<1x128xf32>
    %4 = vector.broadcast %3 : vector<1x128xf32> to vector<24x128xf32>
    %5 = arith.addf %2, %4 : vector<24x128xf32>
    %c0_5 = arith.constant 0 : index
    %c0_6 = arith.constant 0 : index
    %6 = vector.load %arg5[%c0_5, %c0_6] : memref<24x128xf32, #tpu.memory_space<vmem>>, vector<24x128xf32>
    tpu.vector_store %arg5[%c0_5, %c0_6], %5 {strides = array<i32>} : memref<24x128xf32, #tpu.memory_space<vmem>>, vector<24x128xf32>,
    return
  }
  func.func @transform_0(%arg0: i32, %arg1: i32) -> (i32, i32) {
    %c0_i32 = arith.constant 0 : i32
    %c0_i32_0 = arith.constant 0 : i32
    return %arg0, %c0_i32 : i32, i32
  }
  func.func @transform_1(%arg0: i32, %arg1: i32) -> (i32, i32) {
    %c0_i32 = arith.constant 0 : i32
    %c0_i32_0 = arith.constant 0 : i32
    return %c0_i32, %arg1 : i32, i32
  }
  func.func @transform_2(%arg0: i32, %arg1: i32) -> (i32, i32) {
    %c0_i32 = arith.constant 0 : i32
    %c0_i32_0 = arith.constant 0 : i32
    return %c0_i32, %arg1 : i32, i32
  }
  func.func @transform_3(%arg0: i32, %arg1: i32) -> (i32, i32) {
    %c0_i32 = arith.constant 0 : i32
    return %arg0, %arg1 : i32, i32
  }
}

module attributes {stable_mosaic.version = 11 : i64} {
  func.func @_ln_matmul_kernel(%arg0: i32, %arg1: i32, %arg2: memref<24x32xf32, #tpu.memory_space<vmem>>, %arg3: memref<1x32xf32, #tpu.memory_space<vmem>>, %arg4: memref<1x32xf32, #tpu.memory_space<vmem>>, %arg5: memref<32x128xbf16, #tpu.memory_space<vmem>>, %arg6: memref<1x128xf32, #tpu.memory_space<vmem>>, %arg7: memref<24x128xbf16, #tpu.memory_space<vmem>>, %arg8: memref<24x32xbf16, #tpu.memory_space<vmem>>) attributes {dimension_semantics = [#tpu.dimension_semantics<parallel>, #tpu.dimension_semantics<arbitrary>], iteration_bounds = array<i64: 1, 1>, scalar_prefetch = 0 : i64, scratch_operands = 1 : i64, tpu.core_type = #tpu.core_type<tc>, window_params = [{transform_indices = @transform_0, window_bounds = array<i64: 24, 32>}, {pipeline_mode = #tpu.pipeline_mode<synchronous>, transform_indices = @transform_1, window_bounds = array<i64: 1, 32>}, {pipeline_mode = #tpu.pipeline_mode<synchronous>, transform_indices = @transform_2, window_bounds = array<i64: 1, 32>}, {transform_indices = @transform_3, window_bounds = array<i64: 32, 128>}, {transform_indices = @transform_4, window_bounds = array<i64: 1, 128>}, {transform_indices = @transform_5, window_bounds = array<i64: 24, 128>}]} {
    %c0_i32 = arith.constant 0 : i32
    %0 = arith.cmpi eq, %arg1, %c0_i32 : i32
    %1 = arith.extui %0 : i1 to i32
    %c0_i32_0 = arith.constant 0 : i32
    %2 = arith.cmpi ne, %1, %c0_i32_0 : i32
    scf.if %2 {
      %c0_12 = arith.constant 0 : index
      %c0_13 = arith.constant 0 : index
      %24 = vector.load %arg2[%c0_12, %c0_13] : memref<24x32xf32, #tpu.memory_space<vmem>>, vector<24x32xf32>
      %cst_14 = arith.constant dense<0.000000e+00> : vector<24xf32>
      %25 = vector.multi_reduction <add>, %24, %cst_14 [1] : vector<24x32xf32> to vector<24xf32>
      %26 = vector.shape_cast %25 : vector<24xf32> to vector<24x1xf32>
      %cst_15 = arith.constant 3.200000e+01 : f32
      %27 = vector.broadcast %cst_15 : f32 to vector<24x1xf32>
      %28 = arith.divf %26, %27 : vector<24x1xf32>
      %29 = vector.broadcast %28 : vector<24x1xf32> to vector<24x32xf32>
      %30 = arith.subf %24, %29 : vector<24x32xf32>
      %31 = arith.mulf %30, %30 : vector<24x32xf32>
      %cst_16 = arith.constant dense<0.000000e+00> : vector<24xf32>
      %32 = vector.multi_reduction <add>, %31, %cst_16 [1] : vector<24x32xf32> to vector<24xf32>
      %33 = vector.shape_cast %32 : vector<24xf32> to vector<24x1xf32>
      %cst_17 = arith.constant 3.200000e+01 : f32
      %34 = vector.broadcast %cst_17 : f32 to vector<24x1xf32>
      %35 = arith.divf %33, %34 : vector<24x1xf32>
      %cst_18 = arith.constant 9.99999974E-6 : f32
      %36 = vector.broadcast %cst_18 : f32 to vector<24x1xf32>
      %37 = arith.addf %35, %36 : vector<24x1xf32>
      %38 = math.rsqrt %37 : vector<24x1xf32>
      %39 = vector.broadcast %38 : vector<24x1xf32> to vector<24x32xf32>
      %40 = arith.mulf %30, %39 : vector<24x32xf32>
      %c0_19 = arith.constant 0 : index
      %c0_20 = arith.constant 0 : index
      %41 = vector.load %arg3[%c0_19, %c0_20] : memref<1x32xf32, #tpu.memory_space<vmem>>, vector<1x32xf32>
      %42 = vector.broadcast %41 : vector<1x32xf32> to vector<24x32xf32>
      %43 = arith.mulf %40, %42 : vector<24x32xf32>
      %c0_21 = arith.constant 0 : index
      %c0_22 = arith.constant 0 : index
      %44 = vector.load %arg4[%c0_21, %c0_22] : memref<1x32xf32, #tpu.memory_space<vmem>>, vector<1x32xf32>
      %45 = vector.broadcast %44 : vector<1x32xf32> to vector<24x32xf32>
      %46 = arith.addf %43, %45 : vector<24x32xf32>
      %47 = arith.truncf %46 : vector<24x32xf32> to vector<24x32xbf16>
      %c0_23 = arith.constant 0 : index
      %c0_24 = arith.constant 0 : index
      %48 = vector.load %arg8[%c0_23, %c0_24] : memref<24x32xbf16, #tpu.memory_space<vmem>>, vector<24x32xbf16>
      tpu.vector_store %arg8[%c0_23, %c0_24], %47 {strides = array<i32>} : memref<24x32xbf16, #tpu.memory_space<vmem>>, vector<24x32xbf16>,
    } else {
    }
    %c0 = arith.constant 0 : index
    %c0_1 = arith.constant 0 : index
    %3 = vector.load %arg8[%c0, %c0_1] : memref<24x32xbf16, #tpu.memory_space<vmem>>, vector<24x32xbf16>
    %c0_2 = arith.constant 0 : index
    %c0_3 = arith.constant 0 : index
    %4 = vector.load %arg5[%c0_2, %c0_3] : memref<32x128xbf16, #tpu.memory_space<vmem>>, vector<32x128xbf16>
    %cst = arith.constant dense<0.000000e+00> : vector<24x128xf32>
    %5 = tpu.matmul %3, %4, %cst {dimension_numbers = #tpu.dot_dimension_numbers<[1], [0], [0], [1], [0, 0, 1, 1], [], []>} : vector<24x32xbf16>, vector<32x128xbf16>, vector<24x128xf32> -> vector<24x128xf32>
    %c0_4 = arith.constant 0 : index
    %c0_5 = arith.constant 0 : index
    %6 = vector.load %arg6[%c0_4, %c0_5] : memref<1x128xf32, #tpu.memory_space<vmem>>, vector<1x128xf32>
    %7 = vector.broadcast %6 : vector<1x128xf32> to vector<24x128xf32>
    %8 = arith.addf %5, %7 : vector<24x128xf32>
    %cst_6 = arith.constant 5.000000e-01 : f32
    %9 = vector.broadcast %cst_6 : f32 to vector<24x128xf32>
    %10 = arith.mulf %9, %8 : vector<24x128xf32>
    %cst_7 = arith.constant 4.471500e-02 : f32
    %11 = vector.broadcast %cst_7 : f32 to vector<24x128xf32>
    %12 = arith.mulf %11, %8 : vector<24x128xf32>
    %13 = arith.mulf %12, %8 : vector<24x128xf32>
    %14 = arith.mulf %13, %8 : vector<24x128xf32>
    %15 = arith.addf %8, %14 : vector<24x128xf32>
    %cst_8 = arith.constant 0.797884583 : f32
    %16 = vector.broadcast %cst_8 : f32 to vector<24x128xf32>
    %17 = arith.mulf %16, %15 : vector<24x128xf32>
    %18 = math.tanh %17 : vector<24x128xf32>
    %cst_9 = arith.constant 1.000000e+00 : f32
    %19 = vector.broadcast %cst_9 : f32 to vector<24x128xf32>
    %20 = arith.addf %19, %18 : vector<24x128xf32>
    %21 = arith.mulf %10, %20 : vector<24x128xf32>
    %22 = arith.truncf %21 : vector<24x128xf32> to vector<24x128xbf16>
    %c0_10 = arith.constant 0 : index
    %c0_11 = arith.constant 0 : index
    %23 = vector.load %arg7[%c0_10, %c0_11] : memref<24x128xbf16, #tpu.memory_space<vmem>>, vector<24x128xbf16>
    tpu.vector_store %arg7[%c0_10, %c0_11], %22 {strides = array<i32>} : memref<24x128xbf16, #tpu.memory_space<vmem>>, vector<24x128xbf16>,
    return
  }
  func.func @transform_0(%arg0: i32, %arg1: i32) -> (i32, i32) {
    %c0_i32 = arith.constant 0 : i32
    %c0_i32_0 = arith.constant 0 : i32
    return %arg0, %c0_i32 : i32, i32
  }
  func.func @transform_1(%arg0: i32, %arg1: i32) -> (i32, i32) {
    %c0_i32 = arith.constant 0 : i32
    %c0_i32_0 = arith.constant 0 : i32
    %c0_i32_1 = arith.constant 0 : i32
    return %c0_i32, %c0_i32_0 : i32, i32
  }
  func.func @transform_2(%arg0: i32, %arg1: i32) -> (i32, i32) {
    %c0_i32 = arith.constant 0 : i32
    %c0_i32_0 = arith.constant 0 : i32
    %c0_i32_1 = arith.constant 0 : i32
    return %c0_i32, %c0_i32_0 : i32, i32
  }
  func.func @transform_3(%arg0: i32, %arg1: i32) -> (i32, i32) {
    %c0_i32 = arith.constant 0 : i32
    %c0_i32_0 = arith.constant 0 : i32
    return %c0_i32, %arg1 : i32, i32
  }
  func.func @transform_4(%arg0: i32, %arg1: i32) -> (i32, i32) {
    %c0_i32 = arith.constant 0 : i32
    %c0_i32_0 = arith.constant 0 : i32
    return %c0_i32, %arg1 : i32, i32
  }
  func.func @transform_5(%arg0: i32, %arg1: i32) -> (i32, i32) {
    %c0_i32 = arith.constant 0 : i32
    return %arg0, %arg1 : i32, i32
  }
}

module attributes {stable_mosaic.version = 11 : i64} {
  func.func @_matmul_kernel(%arg0: i32, %arg1: i32, %arg2: memref<24x128xbf16, #tpu.memory_space<vmem>>, %arg3: memref<128x128xbf16, #tpu.memory_space<vmem>>, %arg4: memref<1x128xf32, #tpu.memory_space<vmem>>, %arg5: memref<24x128xf32, #tpu.memory_space<vmem>>, %arg6: memref<24x128xf32, #tpu.memory_space<vmem>>) attributes {dimension_semantics = [#tpu.dimension_semantics<parallel>, #tpu.dimension_semantics<parallel>], iteration_bounds = array<i64: 1, 1>, scalar_prefetch = 0 : i64, scratch_operands = 0 : i64, tpu.core_type = #tpu.core_type<tc>, window_params = [{transform_indices = @transform_0, window_bounds = array<i64: 24, 128>}, {transform_indices = @transform_1, window_bounds = array<i64: 128, 128>}, {transform_indices = @transform_2, window_bounds = array<i64: 1, 128>}, {transform_indices = @transform_3, window_bounds = array<i64: 24, 128>}, {transform_indices = @transform_4, window_bounds = array<i64: 24, 128>}]} {
    %c0 = arith.constant 0 : index
    %c0_0 = arith.constant 0 : index
    %0 = vector.load %arg2[%c0, %c0_0] : memref<24x128xbf16, #tpu.memory_space<vmem>>, vector<24x128xbf16>
    %c0_1 = arith.constant 0 : index
    %c0_2 = arith.constant 0 : index
    %1 = vector.load %arg3[%c0_1, %c0_2] : memref<128x128xbf16, #tpu.memory_space<vmem>>, vector<128x128xbf16>
    %cst = arith.constant dense<0.000000e+00> : vector<24x128xf32>
    %2 = tpu.matmul %0, %1, %cst {dimension_numbers = #tpu.dot_dimension_numbers<[1], [0], [0], [1], [0, 0, 1, 1], [], []>} : vector<24x128xbf16>, vector<128x128xbf16>, vector<24x128xf32> -> vector<24x128xf32>
    %c0_3 = arith.constant 0 : index
    %c0_4 = arith.constant 0 : index
    %3 = vector.load %arg4[%c0_3, %c0_4] : memref<1x128xf32, #tpu.memory_space<vmem>>, vector<1x128xf32>
    %4 = vector.broadcast %3 : vector<1x128xf32> to vector<24x128xf32>
    %5 = arith.addf %2, %4 : vector<24x128xf32>
    %c0_5 = arith.constant 0 : index
    %c0_6 = arith.constant 0 : index
    %6 = vector.load %arg5[%c0_5, %c0_6] : memref<24x128xf32, #tpu.memory_space<vmem>>, vector<24x128xf32>
    %7 = arith.addf %5, %6 : vector<24x128xf32>
    %c0_7 = arith.constant 0 : index
    %c0_8 = arith.constant 0 : index
    %8 = vector.load %arg6[%c0_7, %c0_8] : memref<24x128xf32, #tpu.memory_space<vmem>>, vector<24x128xf32>
    tpu.vector_store %arg6[%c0_7, %c0_8], %7 {strides = array<i32>} : memref<24x128xf32, #tpu.memory_space<vmem>>, vector<24x128xf32>,
    return
  }
  func.func @transform_0(%arg0: i32, %arg1: i32) -> (i32, i32) {
    %c0_i32 = arith.constant 0 : i32
    %c0_i32_0 = arith.constant 0 : i32
    return %arg0, %c0_i32 : i32, i32
  }
  func.func @transform_1(%arg0: i32, %arg1: i32) -> (i32, i32) {
    %c0_i32 = arith.constant 0 : i32
    %c0_i32_0 = arith.constant 0 : i32
    return %c0_i32, %arg1 : i32, i32
  }
  func.func @transform_2(%arg0: i32, %arg1: i32) -> (i32, i32) {
    %c0_i32 = arith.constant 0 : i32
    %c0_i32_0 = arith.constant 0 : i32
    return %c0_i32, %arg1 : i32, i32
  }
  func.func @transform_3(%arg0: i32, %arg1: i32) -> (i32, i32) {
    %c0_i32 = arith.constant 0 : i32
    return %arg0, %arg1 : i32, i32
  }
  func.func @transform_4(%arg0: i32, %arg1: i32) -> (i32, i32) {
    %c0_i32 = arith.constant 0 : i32
    return %arg0, %arg1 : i32, i32
  }
}

module attributes {stable_mosaic.version = 11 : i64} {
  func.func @_layernorm_kernel(%arg0: i32, %arg1: memref<8x32xf32, #tpu.memory_space<vmem>>, %arg2: memref<1x32xf32, #tpu.memory_space<vmem>>, %arg3: memref<1x32xf32, #tpu.memory_space<vmem>>, %arg4: memref<8x32xf32, #tpu.memory_space<vmem>>) attributes {dimension_semantics = [#tpu.dimension_semantics<parallel>], iteration_bounds = array<i64: 1>, scalar_prefetch = 0 : i64, scratch_operands = 0 : i64, tpu.core_type = #tpu.core_type<tc>, window_params = [{transform_indices = @transform_0, window_bounds = array<i64: 8, 32>}, {pipeline_mode = #tpu.pipeline_mode<synchronous>, transform_indices = @transform_1, window_bounds = array<i64: 1, 32>}, {pipeline_mode = #tpu.pipeline_mode<synchronous>, transform_indices = @transform_2, window_bounds = array<i64: 1, 32>}, {transform_indices = @transform_3, window_bounds = array<i64: 8, 32>}]} {
    %c0 = arith.constant 0 : index
    %c0_0 = arith.constant 0 : index
    %0 = vector.load %arg1[%c0, %c0_0] : memref<8x32xf32, #tpu.memory_space<vmem>>, vector<8x32xf32>
    %cst = arith.constant dense<0.000000e+00> : vector<8xf32>
    %1 = vector.multi_reduction <add>, %0, %cst [1] : vector<8x32xf32> to vector<8xf32>
    %2 = vector.shape_cast %1 : vector<8xf32> to vector<8x1xf32>
    %cst_1 = arith.constant 3.200000e+01 : f32
    %3 = vector.broadcast %cst_1 : f32 to vector<8x1xf32>
    %4 = arith.divf %2, %3 : vector<8x1xf32>
    %5 = vector.broadcast %4 : vector<8x1xf32> to vector<8x32xf32>
    %6 = arith.subf %0, %5 : vector<8x32xf32>
    %7 = arith.mulf %6, %6 : vector<8x32xf32>
    %cst_2 = arith.constant dense<0.000000e+00> : vector<8xf32>
    %8 = vector.multi_reduction <add>, %7, %cst_2 [1] : vector<8x32xf32> to vector<8xf32>
    %9 = vector.shape_cast %8 : vector<8xf32> to vector<8x1xf32>
    %cst_3 = arith.constant 3.200000e+01 : f32
    %10 = vector.broadcast %cst_3 : f32 to vector<8x1xf32>
    %11 = arith.divf %9, %10 : vector<8x1xf32>
    %cst_4 = arith.constant 9.99999997E-7 : f32
    %12 = vector.broadcast %cst_4 : f32 to vector<8x1xf32>
    %13 = arith.addf %11, %12 : vector<8x1xf32>
    %14 = math.rsqrt %13 : vector<8x1xf32>
    %15 = vector.broadcast %14 : vector<8x1xf32> to vector<8x32xf32>
    %16 = arith.mulf %6, %15 : vector<8x32xf32>
    %c0_5 = arith.constant 0 : index
    %c0_6 = arith.constant 0 : index
    %17 = vector.load %arg2[%c0_5, %c0_6] : memref<1x32xf32, #tpu.memory_space<vmem>>, vector<1x32xf32>
    %18 = vector.broadcast %17 : vector<1x32xf32> to vector<8x32xf32>
    %19 = arith.mulf %16, %18 : vector<8x32xf32>
    %c0_7 = arith.constant 0 : index
    %c0_8 = arith.constant 0 : index
    %20 = vector.load %arg3[%c0_7, %c0_8] : memref<1x32xf32, #tpu.memory_space<vmem>>, vector<1x32xf32>
    %21 = vector.broadcast %20 : vector<1x32xf32> to vector<8x32xf32>
    %22 = arith.addf %19, %21 : vector<8x32xf32>
    %c0_9 = arith.constant 0 : index
    %c0_10 = arith.constant 0 : index
    %23 = vector.load %arg4[%c0_9, %c0_10] : memref<8x32xf32, #tpu.memory_space<vmem>>, vector<8x32xf32>
    tpu.vector_store %arg4[%c0_9, %c0_10], %22 {strides = array<i32>} : memref<8x32xf32, #tpu.memory_space<vmem>>, vector<8x32xf32>,
    return
  }
  func.func @transform_0(%arg0: i32) -> (i32, i32) {
    %c0_i32 = arith.constant 0 : i32
    %c0_i32_0 = arith.constant 0 : i32
    return %arg0, %c0_i32 : i32, i32
  }
  func.func @transform_1(%arg0: i32) -> (i32, i32) {
    %c0_i32 = arith.constant 0 : i32
    %c0_i32_0 = arith.constant 0 : i32
    %c0_i32_1 = arith.constant 0 : i32
    return %c0_i32, %c0_i32_0 : i32, i32
  }
  func.func @transform_2(%arg0: i32) -> (i32, i32) {
    %c0_i32 = arith.constant 0 : i32
    %c0_i32_0 = arith.constant 0 : i32
    %c0_i32_1 = arith.constant 0 : i32
    return %c0_i32, %c0_i32_0 : i32, i32
  }
  func.func @transform_3(%arg0: i32) -> (i32, i32) {
    %c0_i32 = arith.constant 0 : i32
    %c0_i32_0 = arith.constant 0 : i32
    return %arg0, %c0_i32 : i32, i32
  }
}

</mosaic_0001>

<llo_original>
// kernel: timesformer_forward.23
$region0: #{timesformer_forward.23}
  #allocation0 [shape = 'u32[]', space=smem, size = 0x4, offset = 0x4, fixed_abs, tag = 'smem constant byte address 0x4 - core index']
  #allocation1 [shape = 'u32[144,128]{1,0:T(1,128)}', space=vmem, size = 0x12000, scoped, tag = 'internal scratch']
  %s0 = inlined_call_operand.vmem [shape: bf16[16,32], index: 0, kind: input, shape index: {}]
  %s1 = inlined_call_operand.vmem [shape: bf16[32,128], index: 1, kind: input, shape index: {}]
  %s2 = inlined_call_operand.vmem [shape: f32[1,128], index: 2, kind: input, shape index: {}]
  %s3 = inlined_call_operand.vmem [shape: bf16[16,128], index: 3, kind: output, shape index: {}]
  %s4 = sld [smem:[#allocation0]]
  $region22: #{timesformer_forward.23} parent=0
    _
  %s6 = ssub.s32 1, %s4
  %s7 = scalar_select 0, %s6, %s4
  // Predicated region
  $region2: #{timesformer_forward.23} parent=0 // pred_check
    _
  $region3: #{timesformer_forward.23} parent=0 // pred_check_branch
    %9 = sbr.rel (0) target = $region5
  $region4: #{timesformer_forward.23} parent=0 // pred_region
    _
  $region5: #{timesformer_forward.23} parent=0 // pred_fallthru
    _
  // Predicated region
  $region6: #{timesformer_forward.23} parent=0 // pred_check
    _
  $region7: #{timesformer_forward.23} parent=0 // pred_check_branch
    %11 = sbr.rel (0) target = $region9
  $region8: #{timesformer_forward.23} parent=0 // pred_region
    _
  $region9: #{timesformer_forward.23} parent=0 // pred_fallthru
    _
  // Predicated region
  $region10: #{timesformer_forward.23} parent=0 // pred_check
    _
  $region11: #{timesformer_forward.23} parent=0 // pred_check_branch
    %13 = sbr.rel (0) target = $region13
  $region12: #{timesformer_forward.23} parent=0 // pred_region
    _
  $region13: #{timesformer_forward.23} parent=0 // pred_fallthru
    _
  %v15 = vld [vmem:[%s0] sm:$0xf]
  %v16 = vld [vmem:[%s0 + $0x4] sm:$0xf]
  %v17 = vld [vmem:[%s1] sm:$0xf]
  %v18 = vld [vmem:[%s1 + $0x4] sm:$0xf]
  %v19 = vld [vmem:[%s1 + $0x8] sm:$0xf]
  %v20 = vld [vmem:[%s1 + $0xc] sm:$0xf]
  %v21 = vld [vmem:[%s2] sm:$0x1]
  %v23 = vlaneseq
  %v24 = vshrl.u32 %v23, 7
  %v25 = vsub.s32 0, %v24
  %v26 = vrot.slane %v21, %v25
  %v30 = vunpack.c.l.b16 %v15
  %v31 = vunpack.c.l.b16 %v16
  %v32 = vpack.c.b16 %v31, %v30
  %v37 = vunpack.c.l.b16 %v17
  %v38 = vunpack.c.l.b16 %v18
  %v39 = vunpack.c.l.b16 %v19
  %v40 = vunpack.c.l.b16 %v20
  %v41 = vpack.c.b16 %v38, %v37
  %v42 = vpack.c.b16 %v40, %v39
  %vm45 = vcmask 261120
  %v47 = vsel %vm45, %v32, 0
  %49 = vmatprep.subr.bf16.mxu0 0
  %50 = vmatpush1.bf16.msra.mxu0 %v41
  %51 = vmatprep.subr.bf16.mxu0 0
  %52 = vmatpush1.bf16.msra.mxu0 %v42
  %53 = vmatprep.subr.bf16.mxu0 0
  %54 = vmatpush1.bf16.msra.mxu0 0
  %55 = vmatprep.subr.bf16.mxu0 0
  %56 = vmatpush1.bf16.msra.mxu0 0
  %57 = vmatprep.subr.bf16.mxu0 0
  %58 = vmatpush1.bf16.msra.mxu0 0
  %59 = vmatprep.subr.bf16.mxu0 0
  %60 = vmatpush1.bf16.msra.mxu0 0
  %61 = vmatprep.subr.bf16.mxu0 0
  %62 = vmatpush1.bf16.msra.mxu0 0
  %63 = vmatprep.subr.bf16.mxu0 0
  %64 = vmatpush1.bf16.msra.mxu0 0
  %65 = vmatprep.subr.bf16.mxu0 0
  %66 = vmatpush1.bf16.msra.mxu0 0
  %67 = vmatprep.subr.bf16.mxu0 0
  %68 = vmatpush1.bf16.msra.mxu0 0
  %69 = vmatprep.subr.bf16.mxu0 0
  %70 = vmatpush1.bf16.msra.mxu0 0
  %71 = vmatprep.subr.bf16.mxu0 0
  %72 = vmatpush1.bf16.msra.mxu0 0
  %73 = vmatprep.subr.bf16.mxu0 0
  %74 = vmatpush1.bf16.msra.mxu0 0
  %75 = vmatprep.subr.bf16.mxu0 0
  %76 = vmatpush1.bf16.msra.mxu0 0
  %77 = vmatprep.subr.bf16.mxu0 0
  %78 = vmatpush1.bf16.msra.mxu0 0
  %79 = vmatprep.subr.bf16.mxu0 0
  %80 = vmatpush1.bf16.msra.mxu0 0
  %81 = vmatprep.mubr.bf16.mxu0 0
  %82 = vmatmul.mubr.bf16.gmra.mrb[0].mxu0 %v47
  %v83 = vpop.f32.mrb[0].mxu0
  %v84 = vadd.f32 %v26, %v83
  %v85 = vpop.f32.mrb[0].mxu0
  %v86 = vpop.f32.mrb[0].mxu0
  %v87 = vadd.f32 %v26, %v86
  %v88 = vpop.f32.mrb[0].mxu0
  %89 = vdwg.mxu0
  %v90 = vpack.c.bf16 %v87, %v84
  %v92 = vunpack.c.l.b16 %v90
  %v93 = vunpack.c.h.b16 %v90
  %v94 = vpack.c.b16 %v92, %v92
  %v95 = vpack.c.b16 %v93, %v93
  %98 = vst [vmem:[%s3] sm:$0xf] %v94
  %99 = vst [vmem:[%s3 + $0x4] sm:$0xf] %v95
  // Predicated region
  $region14: #{timesformer_forward.23} parent=0 // pred_check
    _
  $region15: #{timesformer_forward.23} parent=0 // pred_check_branch
    %101 = sbr.rel (0) target = $region17
  $region16: #{timesformer_forward.23} parent=0 // pred_region
    _
  $region17: #{timesformer_forward.23} parent=0 // pred_fallthru
    _
  // Predicated region
  $region18: #{timesformer_forward.23} parent=0 // pred_check
    _
  $region19: #{timesformer_forward.23} parent=0 // pred_check_branch
    %103 = sbr.rel (0) target = $region21
  $region20: #{timesformer_forward.23} parent=0 // pred_region
    _
  $region21: #{timesformer_forward.23} parent=0 // pred_fallthru
    _

// kernel: timesformer_forward.20
$region0: #{timesformer_forward.20}
  #allocation0 [shape = 'u32[]', space=smem, size = 0x4, offset = 0x4, fixed_abs, tag = 'smem constant byte address 0x4 - core index']
  #allocation1 [shape = 'u32[144,128]{1,0:T(1,128)}', space=vmem, size = 0x12000, scoped, tag = 'internal scratch']
  %s0 = inlined_call_operand.vmem [shape: bf16[16,48], index: 0, kind: input, shape index: {}]
  %s1 = inlined_call_operand.vmem [shape: bf16[48,128], index: 1, kind: input, shape index: {}]
  %s2 = inlined_call_operand.vmem [shape: f32[1,128], index: 2, kind: input, shape index: {}]
  %s3 = inlined_call_operand.vmem [shape: f32[16,128], index: 3, kind: output, shape index: {}]
  %s4 = sld [smem:[#allocation0]]
  $region22: #{timesformer_forward.20} parent=0
    _
  %s6 = ssub.s32 1, %s4
  %s7 = scalar_select 0, %s6, %s4
  // Predicated region
  $region2: #{timesformer_forward.20} parent=0 // pred_check
    _
  $region3: #{timesformer_forward.20} parent=0 // pred_check_branch
    %9 = sbr.rel (0) target = $region5
  $region4: #{timesformer_forward.20} parent=0 // pred_region
    _
  $region5: #{timesformer_forward.20} parent=0 // pred_fallthru
    _
  // Predicated region
  $region6: #{timesformer_forward.20} parent=0 // pred_check
    _
  $region7: #{timesformer_forward.20} parent=0 // pred_check_branch
    %11 = sbr.rel (0) target = $region9
  $region8: #{timesformer_forward.20} parent=0 // pred_region
    _
  $region9: #{timesformer_forward.20} parent=0 // pred_fallthru
    _
  // Predicated region
  $region10: #{timesformer_forward.20} parent=0 // pred_check
    _
  $region11: #{timesformer_forward.20} parent=0 // pred_check_branch
    %13 = sbr.rel (0) target = $region13
  $region12: #{timesformer_forward.20} parent=0 // pred_region
    _
  $region13: #{timesformer_forward.20} parent=0 // pred_fallthru
    _
  %v15 = vld [vmem:[%s0] sm:$0xf]
  %v16 = vld [vmem:[%s0 + $0x4] sm:$0xf]
  %v17 = vld [vmem:[%s1] sm:$0xf]
  %v18 = vld [vmem:[%s1 + $0x4] sm:$0xf]
  %v19 = vld [vmem:[%s1 + $0x8] sm:$0xf]
  %v20 = vld [vmem:[%s1 + $0xc] sm:$0xf]
  %v21 = vld [vmem:[%s1 + $0x10] sm:$0xf]
  %v22 = vld [vmem:[%s1 + $0x14] sm:$0xf]
  %v23 = vld [vmem:[%s2] sm:$0x1]
  %v25 = vlaneseq
  %v26 = vshrl.u32 %v25, 7
  %v27 = vsub.s32 0, %v26
  %v28 = vrot.slane %v23, %v27
  %v32 = vunpack.c.l.b16 %v15
  %v33 = vunpack.c.l.b16 %v16
  %v34 = vpack.c.b16 %v33, %v32
  %v41 = vunpack.c.l.b16 %v17
  %v42 = vunpack.c.l.b16 %v18
  %v43 = vunpack.c.l.b16 %v19
  %v44 = vunpack.c.l.b16 %v20
  %v45 = vunpack.c.l.b16 %v21
  %v46 = vunpack.c.l.b16 %v22
  %v47 = vpack.c.b16 %v42, %v41
  %v48 = vpack.c.b16 %v44, %v43
  %v49 = vpack.c.b16 %v46, %v45
  %vm53 = vcmask 392192
  %v55 = vsel %vm53, %v34, 0
  %57 = vmatprep.subr.bf16.mxu0 0
  %58 = vmatpush1.bf16.msra.mxu0 %v47
  %59 = vmatprep.subr.bf16.mxu0 0
  %60 = vmatpush1.bf16.msra.mxu0 %v48
  %61 = vmatprep.subr.bf16.mxu0 0
  %62 = vmatpush1.bf16.msra.mxu0 %v49
  %63 = vmatprep.subr.bf16.mxu0 0
  %64 = vmatpush1.bf16.msra.mxu0 0
  %65 = vmatprep.subr.bf16.mxu0 0
  %66 = vmatpush1.bf16.msra.mxu0 0
  %67 = vmatprep.subr.bf16.mxu0 0
  %68 = vmatpush1.bf16.msra.mxu0 0
  %69 = vmatprep.subr.bf16.mxu0 0
  %70 = vmatpush1.bf16.msra.mxu0 0
  %71 = vmatprep.subr.bf16.mxu0 0
  %72 = vmatpush1.bf16.msra.mxu0 0
  %73 = vmatprep.subr.bf16.mxu0 0
  %74 = vmatpush1.bf16.msra.mxu0 0
  %75 = vmatprep.subr.bf16.mxu0 0
  %76 = vmatpush1.bf16.msra.mxu0 0
  %77 = vmatprep.subr.bf16.mxu0 0
  %78 = vmatpush1.bf16.msra.mxu0 0
  %79 = vmatprep.subr.bf16.mxu0 0
  %80 = vmatpush1.bf16.msra.mxu0 0
  %81 = vmatprep.subr.bf16.mxu0 0
  %82 = vmatpush1.bf16.msra.mxu0 0
  %83 = vmatprep.subr.bf16.mxu0 0
  %84 = vmatpush1.bf16.msra.mxu0 0
  %85 = vmatprep.subr.bf16.mxu0 0
  %86 = vmatpush1.bf16.msra.mxu0 0
  %87 = vmatprep.subr.bf16.mxu0 0
  %88 = vmatpush1.bf16.msra.mxu0 0
  %89 = vmatprep.mubr.bf16.mxu0 0
  %90 = vmatmul.mubr.bf16.gmra.mrb[0].mxu0 %v55
  %v91 = vpop.f32.mrb[0].mxu0
  %v92 = vadd.f32 %v28, %v91
  %v93 = vpop.f32.mrb[0].mxu0
  %v94 = vpop.f32.mrb[0].mxu0
  %v95 = vadd.f32 %v28, %v94
  %v96 = vpop.f32.mrb[0].mxu0
  %97 = vdwg.mxu0
  %98 = vst [vmem:[%s3] sm:$0xff] %v92
  %99 = vst [vmem:[%s3 + $0x8] sm:$0xff] %v95
  // Predicated region
  $region14: #{timesformer_forward.20} parent=0 // pred_check
    _
  $region15: #{timesformer_forward.20} parent=0 // pred_check_branch
    %101 = sbr.rel (0) target = $region17
  $region16: #{timesformer_forward.20} parent=0 // pred_region
    _
  $region17: #{timesformer_forward.20} parent=0 // pred_fallthru
    _
  // Predicated region
  $region18: #{timesformer_forward.20} parent=0 // pred_check
    _
  $region19: #{timesformer_forward.20} parent=0 // pred_check_branch
    %103 = sbr.rel (0) target = $region21
  $region20: #{timesformer_forward.20} parent=0 // pred_region
    _
  $region21: #{timesformer_forward.20} parent=0 // pred_fallthru
    _

// kernel: timesformer_forward.21
$region0: #{timesformer_forward.21}
  #allocation0 [shape = 'u32[]', space=smem, size = 0x4, offset = 0x4, fixed_abs, tag = 'smem constant byte address 0x4 - core index']
  #allocation1 [shape = 'u32[144,128]{1,0:T(1,128)}', space=vmem, size = 0x12000, scoped, tag = 'internal scratch']
  #allocation2 [shape = 'bf16[16,32]{1,0:T(16,128)(2,1)}', space=vmem, size = 0x1000, scoped, tag = 'scratch operand']
  %s0 = inlined_call_operand.vmem [shape: f32[16,32], index: 0, kind: input, shape index: {}]
  %s1 = inlined_call_operand.vmem [shape: f32[1,32], index: 1, kind: input, shape index: {}]
  %s2 = inlined_call_operand.vmem [shape: f32[1,32], index: 2, kind: input, shape index: {}]
  %s3 = inlined_call_operand.vmem [shape: bf16[32,128], index: 3, kind: input, shape index: {}]
  %s4 = inlined_call_operand.vmem [shape: f32[1,128], index: 4, kind: input, shape index: {}]
  %s5 = inlined_call_operand.vmem [shape: bf16[16,128], index: 5, kind: output, shape index: {}]
  %s6 = sld [smem:[#allocation0]]
  $region34: #{timesformer_forward.21} parent=0
    _
  %s8 = ssub.s32 1, %s6
  %s9 = scalar_select 0, %s8, %s6
  // Predicated region
  $region2: #{timesformer_forward.21} parent=0 // pred_check
    _
  $region3: #{timesformer_forward.21} parent=0 // pred_check_branch
    %11 = sbr.rel (0) target = $region5
  $region4: #{timesformer_forward.21} parent=0 // pred_region
    _
  $region5: #{timesformer_forward.21} parent=0 // pred_fallthru
    _
  // Predicated region
  $region6: #{timesformer_forward.21} parent=0 // pred_check
    _
  $region7: #{timesformer_forward.21} parent=0 // pred_check_branch
    %13 = sbr.rel (0) target = $region9
  $region8: #{timesformer_forward.21} parent=0 // pred_region
    _
  $region9: #{timesformer_forward.21} parent=0 // pred_fallthru
    _
  // Predicated region
  $region10: #{timesformer_forward.21} parent=0 // pred_check
    _
  $region11: #{timesformer_forward.21} parent=0 // pred_check_branch
    %15 = sbr.rel (0) target = $region13
  $region12: #{timesformer_forward.21} parent=0 // pred_region
    _
  $region13: #{timesformer_forward.21} parent=0 // pred_fallthru
    _
  // Predicated region
  $region14: #{timesformer_forward.21} parent=0 // pred_check
    _
  $region15: #{timesformer_forward.21} parent=0 // pred_check_branch
    %17 = sbr.rel (0) target = $region17
  $region16: #{timesformer_forward.21} parent=0 // pred_region
    _
  $region17: #{timesformer_forward.21} parent=0 // pred_fallthru
    _
  // Predicated region
  $region18: #{timesformer_forward.21} parent=0 // pred_check
    _
  $region19: #{timesformer_forward.21} parent=0 // pred_check_branch
    %19 = sbr.rel (0) target = $region21
  $region20: #{timesformer_forward.21} parent=0 // pred_region
    _
  $region21: #{timesformer_forward.21} parent=0 // pred_fallthru
    _
  %p21 = scmp.eq.s32.totalorder 0, 0
  // Predicated region
  $region22: #{timesformer_forward.21} parent=0 // pred_check
    %p22 = pneg %p21
  $region23: #{timesformer_forward.21} parent=0 // pred_check_branch
    %24 = sbr.rel (%p22) target = $region25
  $region24: #{timesformer_forward.21} parent=0 // pred_region
    %v25 = vld [vmem:[%s0] sm:$0xff]
    %v26 = vld [vmem:[%s0 + $0x8] sm:$0xff]
    %vm27 = vcmask 261120
    %v28 = vsel %vm27, %v25, 0.0
    %29 = vadd.xlane.f32.xlu0 %v28
    %v30 = vpop.xlane.xlu0 %29
    %v31 = vsel %vm27, %v26, 0.0
    %32 = vadd.xlane.f32.xlu0 %v31
    %v33 = vpop.xlane.xlu0 %32
    %v34 = vrcp.pop 32.0
    %v35 = vmul.f32 %v30, %v34
    %v36 = vmul.f32 %v33, %v34
    %v37 = vsub.f32 %v25, %v35
    %v38 = vsub.f32 %v26, %v36
    %v39 = vmul.f32 %v37, %v37
    %v40 = vmul.f32 %v38, %v38
    %v41 = vsel %vm27, %v39, 0.0
    %42 = vadd.xlane.f32.xlu0 %v41
    %v43 = vpop.xlane.xlu0 %42
    %v44 = vsel %vm27, %v40, 0.0
    %45 = vadd.xlane.f32.xlu0 %v44
    %v46 = vpop.xlane.xlu0 %45
    %v47 = vmul.f32 %v43, %v34
    %v48 = vmul.f32 %v46, %v34
    %v49 = vadd.f32 %v47, 1e-05
    %v50 = vadd.f32 %v48, 1e-05
    %v51 = vrsqrt.pop %v49
    %v52 = vrsqrt.pop %v50
    %v53 = vmul.f32 %v37, %v51
    %v54 = vmul.f32 %v38, %v52
    %v55 = vld [vmem:[%s1] sm:$0x1]
    %v57 = vlaneseq
    %v58 = vshrl.u32 %v57, 7
    %v59 = vsub.s32 0, %v58
    %v60 = vrot.slane %v55, %v59
    %v62 = vmul.f32 %v53, %v60
    %v63 = vmul.f32 %v54, %v60
    %v64 = vld [vmem:[%s2] sm:$0x1]
    %v66 = vlaneseq
    %v67 = vshrl.u32 %v66, 7
    %v68 = vsub.s32 0, %v67
    %v69 = vrot.slane %v64, %v68
    %v71 = vadd.f32 %v62, %v69
    %v72 = vadd.f32 %v63, %v69
    %v73 = vpack.c.bf16 %v72, %v71
    %74 = vst.msk [vmem:[#allocation2] sm:$0xff] %vm27, %v73
  $region25: #{timesformer_forward.21} parent=0 // pred_fallthru
    _
  %v75 = vld [vmem:[#allocation2] sm:$0xff]
  %v76 = vld [vmem:[%s3] sm:$0xf]
  %v77 = vld [vmem:[%s3 + $0x4] sm:$0xf]
  %v78 = vld [vmem:[%s3 + $0x8] sm:$0xf]
  %v79 = vld [vmem:[%s3 + $0xc] sm:$0xf]
  %v80 = vld [vmem:[%s4] sm:$0x1]
  %v82 = vlaneseq
  %v83 = vshrl.u32 %v82, 7
  %v84 = vsub.s32 0, %v83
  %v85 = vrot.slane %v80, %v84
  %v91 = vunpack.c.l.b16 %v76
  %v92 = vunpack.c.l.b16 %v77
  %v93 = vunpack.c.l.b16 %v78
  %v94 = vunpack.c.l.b16 %v79
  %v95 = vpack.c.b16 %v92, %v91
  %v96 = vpack.c.b16 %v94, %v93
  %vm99 = vcmask 261120
  %v101 = vsel %vm99, %v75, 0
  %103 = vmatprep.subr.bf16.mxu0 0
  %104 = vmatpush1.bf16.msra.mxu0 %v95
  %105 = vmatprep.subr.bf16.mxu0 0
  %106 = vmatpush1.bf16.msra.mxu0 %v96
  %107 = vmatprep.subr.bf16.mxu0 0
  %108 = vmatpush1.bf16.msra.mxu0 0
  %109 = vmatprep.subr.bf16.mxu0 0
  %110 = vmatpush1.bf16.msra.mxu0 0
  %111 = vmatprep.subr.bf16.mxu0 0
  %112 = vmatpush1.bf16.msra.mxu0 0
  %113 = vmatprep.subr.bf16.mxu0 0
  %114 = vmatpush1.bf16.msra.mxu0 0
  %115 = vmatprep.subr.bf16.mxu0 0
  %116 = vmatpush1.bf16.msra.mxu0 0
  %117 = vmatprep.subr.bf16.mxu0 0
  %118 = vmatpush1.bf16.msra.mxu0 0
  %119 = vmatprep.subr.bf16.mxu0 0
  %120 = vmatpush1.bf16.msra.mxu0 0
  %121 = vmatprep.subr.bf16.mxu0 0
  %122 = vmatpush1.bf16.msra.mxu0 0
  %123 = vmatprep.subr.bf16.mxu0 0
  %124 = vmatpush1.bf16.msra.mxu0 0
  %125 = vmatprep.subr.bf16.mxu0 0
  %126 = vmatpush1.bf16.msra.mxu0 0
  %127 = vmatprep.subr.bf16.mxu0 0
  %128 = vmatpush1.bf16.msra.mxu0 0
  %129 = vmatprep.subr.bf16.mxu0 0
  %130 = vmatpush1.bf16.msra.mxu0 0
  %131 = vmatprep.subr.bf16.mxu0 0
  %132 = vmatpush1.bf16.msra.mxu0 0
  %133 = vmatprep.subr.bf16.mxu0 0
  %134 = vmatpush1.bf16.msra.mxu0 0
  %135 = vmatprep.mubr.bf16.mxu0 0
  %136 = vmatmul.mubr.bf16.gmra.mrb[0].mxu0 %v101
  %v137 = vpop.f32.mrb[0].mxu0
  %v138 = vadd.f32 %v85, %v137
  %v139 = vpop.f32.mrb[0].mxu0
  %v140 = vpop.f32.mrb[0].mxu0
  %v141 = vadd.f32 %v85, %v140
  %v142 = vpop.f32.mrb[0].mxu0
  %143 = vdwg.mxu0
  %v144 = vpack.c.bf16 %v141, %v138
  %v146 = vunpack.c.l.b16 %v144
  %v147 = vunpack.c.h.b16 %v144
  %v148 = vpack.c.b16 %v146, %v146
  %v149 = vpack.c.b16 %v147, %v147
  %152 = vst [vmem:[%s5] sm:$0xf] %v148
  %153 = vst [vmem:[%s5 + $0x4] sm:$0xf] %v149
  // Predicated region
  $region26: #{timesformer_forward.21} parent=0 // pred_check
    _
  $region27: #{timesformer_forward.21} parent=0 // pred_check_branch
    %155 = sbr.rel (0) target = $region29
  $region28: #{timesformer_forward.21} parent=0 // pred_region
    _
  $region29: #{timesformer_forward.21} parent=0 // pred_fallthru
    _
  // Predicated region
  $region30: #{timesformer_forward.21} parent=0 // pred_check
    _
  $region31: #{timesformer_forward.21} parent=0 // pred_check_branch
    %157 = sbr.rel (0) target = $region33
  $region32: #{timesformer_forward.21} parent=0 // pred_region
    _
  $region33: #{timesformer_forward.21} parent=0 // pred_fallthru
    _

// kernel: timesformer_forward.24
$region0: #{timesformer_forward.24}
  #allocation0 [shape = 'u32[]', space=smem, size = 0x4, offset = 0x4, fixed_abs, tag = 'smem constant byte address 0x4 - core index']
  #allocation1 [shape = 'u32[144,128]{1,0:T(1,128)}', space=vmem, size = 0x12000, scoped, tag = 'internal scratch']
  %s0 = inlined_call_operand.vmem [shape: bf16[16,32], index: 0, kind: input, shape index: {}]
  %s1 = inlined_call_operand.vmem [shape: bf16[32,128], index: 1, kind: input, shape index: {}]
  %s2 = inlined_call_operand.vmem [shape: f32[1,128], index: 2, kind: input, shape index: {}]
  %s3 = inlined_call_operand.vmem [shape: f32[16,128], index: 3, kind: input, shape index: {}]
  %s4 = inlined_call_operand.vmem [shape: f32[16,128], index: 4, kind: output, shape index: {}]
  %s5 = sld [smem:[#allocation0]]
  $region26: #{timesformer_forward.24} parent=0
    _
  %s7 = ssub.s32 1, %s5
  %s8 = scalar_select 0, %s7, %s5
  // Predicated region
  $region2: #{timesformer_forward.24} parent=0 // pred_check
    _
  $region3: #{timesformer_forward.24} parent=0 // pred_check_branch
    %10 = sbr.rel (0) target = $region5
  $region4: #{timesformer_forward.24} parent=0 // pred_region
    _
  $region5: #{timesformer_forward.24} parent=0 // pred_fallthru
    _
  // Predicated region
  $region6: #{timesformer_forward.24} parent=0 // pred_check
    _
  $region7: #{timesformer_forward.24} parent=0 // pred_check_branch
    %12 = sbr.rel (0) target = $region9
  $region8: #{timesformer_forward.24} parent=0 // pred_region
    _
  $region9: #{timesformer_forward.24} parent=0 // pred_fallthru
    _
  // Predicated region
  $region10: #{timesformer_forward.24} parent=0 // pred_check
    _
  $region11: #{timesformer_forward.24} parent=0 // pred_check_branch
    %14 = sbr.rel (0) target = $region13
  $region12: #{timesformer_forward.24} parent=0 // pred_region
    _
  $region13: #{timesformer_forward.24} parent=0 // pred_fallthru
    _
  // Predicated region
  $region14: #{timesformer_forward.24} parent=0 // pred_check
    _
  $region15: #{timesformer_forward.24} parent=0 // pred_check_branch
    %16 = sbr.rel (0) target = $region17
  $region16: #{timesformer_forward.24} parent=0 // pred_region
    _
  $region17: #{timesformer_forward.24} parent=0 // pred_fallthru
    _
  %v18 = vld [vmem:[%s0] sm:$0xf]
  %v19 = vld [vmem:[%s0 + $0x4] sm:$0xf]
  %v20 = vld [vmem:[%s1] sm:$0xf]
  %v21 = vld [vmem:[%s1 + $0x4] sm:$0xf]
  %v22 = vld [vmem:[%s1 + $0x8] sm:$0xf]
  %v23 = vld [vmem:[%s1 + $0xc] sm:$0xf]
  %v24 = vld [vmem:[%s2] sm:$0x1]
  %v26 = vlaneseq
  %v27 = vshrl.u32 %v26, 7
  %v28 = vsub.s32 0, %v27
  %v29 = vrot.slane %v24, %v28
  %v33 = vunpack.c.l.b16 %v18
  %v34 = vunpack.c.l.b16 %v19
  %v35 = vpack.c.b16 %v34, %v33
  %v40 = vunpack.c.l.b16 %v20
  %v41 = vunpack.c.l.b16 %v21
  %v42 = vunpack.c.l.b16 %v22
  %v43 = vunpack.c.l.b16 %v23
  %v44 = vpack.c.b16 %v41, %v40
  %v45 = vpack.c.b16 %v43, %v42
  %vm48 = vcmask 261120
  %v50 = vsel %vm48, %v35, 0
  %52 = vmatprep.subr.bf16.mxu0 0
  %53 = vmatpush1.bf16.msra.mxu0 %v44
  %54 = vmatprep.subr.bf16.mxu0 0
  %55 = vmatpush1.bf16.msra.mxu0 %v45
  %56 = vmatprep.subr.bf16.mxu0 0
  %57 = vmatpush1.bf16.msra.mxu0 0
  %58 = vmatprep.subr.bf16.mxu0 0
  %59 = vmatpush1.bf16.msra.mxu0 0
  %60 = vmatprep.subr.bf16.mxu0 0
  %61 = vmatpush1.bf16.msra.mxu0 0
  %62 = vmatprep.subr.bf16.mxu0 0
  %63 = vmatpush1.bf16.msra.mxu0 0
  %64 = vmatprep.subr.bf16.mxu0 0
  %65 = vmatpush1.bf16.msra.mxu0 0
  %66 = vmatprep.subr.bf16.mxu0 0
  %67 = vmatpush1.bf16.msra.mxu0 0
  %68 = vmatprep.subr.bf16.mxu0 0
  %69 = vmatpush1.bf16.msra.mxu0 0
  %70 = vmatprep.subr.bf16.mxu0 0
  %71 = vmatpush1.bf16.msra.mxu0 0
  %72 = vmatprep.subr.bf16.mxu0 0
  %73 = vmatpush1.bf16.msra.mxu0 0
  %74 = vmatprep.subr.bf16.mxu0 0
  %75 = vmatpush1.bf16.msra.mxu0 0
  %76 = vmatprep.subr.bf16.mxu0 0
  %77 = vmatpush1.bf16.msra.mxu0 0
  %78 = vmatprep.subr.bf16.mxu0 0
  %79 = vmatpush1.bf16.msra.mxu0 0
  %80 = vmatprep.subr.bf16.mxu0 0
  %81 = vmatpush1.bf16.msra.mxu0 0
  %82 = vmatprep.subr.bf16.mxu0 0
  %83 = vmatpush1.bf16.msra.mxu0 0
  %84 = vmatprep.mubr.bf16.mxu0 0
  %85 = vmatmul.mubr.bf16.gmra.mrb[0].mxu0 %v50
  %v86 = vpop.f32.mrb[0].mxu0
  %v87 = vadd.f32 %v29, %v86
  %v88 = vpop.f32.mrb[0].mxu0
  %v89 = vpop.f32.mrb[0].mxu0
  %v90 = vadd.f32 %v29, %v89
  %v91 = vpop.f32.mrb[0].mxu0
  %92 = vdwg.mxu0
  %v93 = vld [vmem:[%s3] sm:$0xff]
  %v94 = vld [vmem:[%s3 + $0x8] sm:$0xff]
  %v95 = vadd.f32 %v87, %v93
  %v96 = vadd.f32 %v90, %v94
  %97 = vst [vmem:[%s4] sm:$0xff] %v95
  %98 = vst [vmem:[%s4 + $0x8] sm:$0xff] %v96
  // Predicated region
  $region18: #{timesformer_forward.24} parent=0 // pred_check
    _
  $region19: #{timesformer_forward.24} parent=0 // pred_check_branch
    %100 = sbr.rel (0) target = $region21
  $region20: #{timesformer_forward.24} parent=0 // pred_region
    _
  $region21: #{timesformer_forward.24} parent=0 // pred_fallthru
    _
  // Predicated region
  $region22: #{timesformer_forward.24} parent=0 // pred_check
    _
  $region23: #{timesformer_forward.24} parent=0 // pred_check_branch
    %102 = sbr.rel (0) target = $region25
  $region24: #{timesformer_forward.24} parent=0 // pred_region
    _
  $region25: #{timesformer_forward.24} parent=0 // pred_fallthru
    _

// kernel: timesformer_forward.26
$region0: #{timesformer_forward.26}
  #allocation0 [shape = 'u32[]', space=smem, size = 0x4, offset = 0x4, fixed_abs, tag = 'smem constant byte address 0x4 - core index']
  #allocation1 [shape = 'u32[144,128]{1,0:T(1,128)}', space=vmem, size = 0x12000, scoped, tag = 'internal scratch']
  %s0 = inlined_call_operand.vmem [shape: bf16[4,5,96], index: 0, kind: input, shape index: {}]
  %s1 = inlined_call_operand.vmem [shape: bf16[4,5,32], index: 1, kind: output, shape index: {}]
  %s2 = sld [smem:[#allocation0]]
  $region37: #{timesformer_forward.26} parent=0
    _
  %s4 = ssub.s32 1, %s2
  %s5 = scalar_select 0, %s4, %s2
  loop: start=0, step=1, limit=4
  $region2: #{timesformer_forward.26} parent=0 // loop_pre_header
    _
  $region3: #{timesformer_forward.26} parent=0 // loop_header
    %s7 = sphi 0, %s11
    %p8 = scmp.ge.s32.totalorder %s7, 4
    %s17 = sphi 0, %s19
    %s20 = sphi 0, %s17
    %s21 = sphi 0, %s20
    %s37 = sphi 0, %s21
    %s43 = sphi 0, %s45
    %s46 = sphi 0, %s43
    %s47 = sphi 0, %s46
    %s63 = sphi 0, %s47
  $region4: #{timesformer_forward.26} parent=0 // loop_header_branch
    %10 = sbr.rel (%p8) target = $region8
  $region5: #{timesformer_forward.26} parent=0 // loop_body
    %s12 = ssub.s32 %s7, 1
    %s13 = ssub.s32 %s7, 2
    %s14 = sadd.s32 %s7, 1
    %s15 = ssub.s32 %s7, %s14
    %p16 = scmp.eq.s32.totalorder %s15, 0
    %s18 = sadd.s32 %s17, 1
    %s19 = scalar_select %p16, %s17, %s18
    %p22 = pneg %p16
    %p23 = scmp.eq.s32.totalorder %s7, 1
    %p24 = por %p22, %p23
    %p25 = scmp.ne.s32.totalorder %s17, %s20
    %p26 = scmp.eq.s32.totalorder %s7, 0
    %p27 = por %p25, %p26
    %p28 = scmp.ne.s32.totalorder %s17, %s20
    %p29 = scmp.eq.s32.totalorder %s12, 1
    %p30 = por %p28, %p29
    %p31 = scmp.ne.s32.totalorder %s20, %s21
    %p32 = scmp.eq.s32.totalorder %s12, 0
    %p33 = por %p31, %p32
    %p34 = scmp.ne.s32.totalorder %s20, %s21
    %p35 = scmp.eq.s32.totalorder %s13, 1
    %p36 = por %p34, %p35
    %p38 = scmp.ne.s32.totalorder %s21, %s37
    %p39 = scmp.eq.s32.totalorder %s13, 0
    %p40 = por %p38, %p39
    %s41 = ssub.s32 %s7, %s14
    %p42 = scmp.eq.s32.totalorder %s41, 0
    %s44 = sadd.s32 %s43, 1
    %s45 = scalar_select %p42, %s43, %s44
    %p48 = pneg %p42
    %p49 = scmp.eq.s32.totalorder %s7, 1
    %p50 = por %p48, %p49
    %p51 = scmp.ne.s32.totalorder %s43, %s46
    %p52 = scmp.eq.s32.totalorder %s7, 0
    %p53 = por %p51, %p52
    %p54 = scmp.ne.s32.totalorder %s43, %s46
    %p55 = scmp.eq.s32.totalorder %s12, 1
    %p56 = por %p54, %p55
    %p57 = scmp.ne.s32.totalorder %s46, %s47
    %p58 = scmp.eq.s32.totalorder %s12, 0
    %p59 = por %p57, %p58
    %p60 = scmp.ne.s32.totalorder %s46, %s47
    %p61 = scmp.eq.s32.totalorder %s13, 1
    %p62 = por %p60, %p61
    %p64 = scmp.ne.s32.totalorder %s47, %s63
    %p65 = scmp.eq.s32.totalorder %s13, 0
    %p66 = por %p64, %p65
    %p67 = scmp.le.s32.totalorder 1, %s7
    %p68 = scmp.lt.s32.totalorder %s7, 3
    %p69 = pnand %p67, %p68
    %p70 = pneg %p69
    // Predicated region
    $region9: #{timesformer_forward.26} parent=5 // pred_check
      _
    $region10: #{timesformer_forward.26} parent=5 // pred_check_branch
      %72 = sbr.rel (%p69) target = $region12
    $region11: #{timesformer_forward.26} parent=5 // pred_region
      %s73 = ssub.s32 %s7, 1
    $region12: #{timesformer_forward.26} parent=5 // pred_fallthru
      _
    %p74 = scmp.lt.s32.totalorder %s7, 2
    // Predicated region
    $region13: #{timesformer_forward.26} parent=5 // pred_check
      %p75 = pneg %p74
    $region14: #{timesformer_forward.26} parent=5 // pred_check_branch
      %77 = sbr.rel (%p75) target = $region16
    $region15: #{timesformer_forward.26} parent=5 // pred_region
      // Predicated region
      $region17: #{timesformer_forward.26} parent=15 // pred_check
        %p78 = pneg %p27
      $region18: #{timesformer_forward.26} parent=15 // pred_check_branch
        %80 = sbr.rel (%p78) target = $region20
      $region19: #{timesformer_forward.26} parent=15 // pred_region
        %s81 = smul.u32 2, %s7
        %p82 = scmp.lt.s32.totalorder %s81, 3
        %s83 = scalar_select %p82, %s81, 3
        %s84 = smul.addr %s83, 4
        %s85 = scalar_lea.vmem %s0, %s84
        %s86 = smul.u32 2, %s7
      $region20: #{timesformer_forward.26} parent=15 // pred_fallthru
        _
    $region16: #{timesformer_forward.26} parent=5 // pred_fallthru
      _
    %p87 = scmp.le.s32.totalorder 1, %s7
    %p88 = scmp.lt.s32.totalorder %s7, 3
    %p89 = pnand %p87, %p88
    %p90 = pneg %p89
    // Predicated region
    $region21: #{timesformer_forward.26} parent=5 // pred_check
      _
    $region22: #{timesformer_forward.26} parent=5 // pred_check_branch
      %92 = sbr.rel (%p89) target = $region24
    $region23: #{timesformer_forward.26} parent=5 // pred_region
      %s93 = ssub.s32 %s7, 1
      %s94 = smul.u32 2, %s12
      %p95 = scmp.lt.s32.totalorder %s94, 3
      %s96 = scalar_select %p95, %s94, 3
      %s97 = smul.addr %s96, 4
      %s98 = scalar_lea.vmem %s0, %s97
      %p99 = pneg %p33
      %p100 = pneg %p30
      %p101 = pneg %p59
      %p102 = pneg %p56
      %s103 = smul.u32 2, %s12
      %p104 = scmp.lt.s32.totalorder %s103, 3
      %s105 = scalar_select %p104, %s103, 3
      %s106 = smul.addr %s105, 4
      %s107 = scalar_lea.vmem %s1, %s106
      %s108 = smul.u32 2, %s12
      %p109 = scmp.lt.s32.totalorder %s108, 3
      %s110 = scalar_select %p109, %s108, 3
      %s111 = smul.addr %s110, 4
      %s112 = scalar_lea.vmem %s0, %s111
      %s113 = smul.u32 2, %s12
      %s114 = smul.u32 2, %s12
      %p115 = scmp.lt.s32.totalorder %s114, 3
      %s116 = scalar_select %p115, %s114, 3
      %s117 = smul.addr %s116, 4
      %s118 = scalar_lea.vmem %s1, %s117
      %s119 = smul.u32 2, %s12
      %v121 = vld [vmem:[%s112] sm:$0x7]
      %v122 = vld [vmem:[%s112 + $0x4] sm:$0x7]
      %v124 = vunpack.c.l.b16 %v121
      %v125 = vpack.c.b16 %v124, %v124
      %126 = vrot.lane.b32.xlu0 %v125, 96
      %v127 = vpop.permute.xlu0 %126
      %vm128 = vcmask 64512
      %v130 = vsel %vm128, %v121, 0
      %v133 = vsel %vm128, %v127, 0
      %135 = vmatprep.subr.bf16.mxu0 0
      %136 = vmatpush1.bf16.xpose.msra.mxu0 %v133
      %137 = vmatprep.subr.bf16.mxu0 0
      %138 = vmatpush1.bf16.xpose.msra.mxu0 0
      %139 = vmatprep.subr.bf16.mxu0 0
      %140 = vmatpush1.bf16.xpose.msra.mxu0 0
      %141 = vmatprep.subr.bf16.mxu0 0
      %142 = vmatpush1.bf16.xpose.msra.mxu0 0
      %143 = vmatprep.subr.bf16.mxu0 0
      %144 = vmatpush1.bf16.xpose.msra.mxu0 0
      %145 = vmatprep.subr.bf16.mxu0 0
      %146 = vmatpush1.bf16.xpose.msra.mxu0 0
      %147 = vmatprep.subr.bf16.mxu0 0
      %148 = vmatpush1.bf16.xpose.msra.mxu0 0
      %149 = vmatprep.subr.bf16.mxu0 0
      %150 = vmatpush1.bf16.xpose.msra.mxu0 0
      %151 = vmatprep.subr.bf16.mxu0 0
      %152 = vmatpush1.bf16.xpose.msra.mxu0 0
      %153 = vmatprep.subr.bf16.mxu0 0
      %154 = vmatpush1.bf16.xpose.msra.mxu0 0
      %155 = vmatprep.subr.bf16.mxu0 0
      %156 = vmatpush1.bf16.xpose.msra.mxu0 0
      %157 = vmatprep.subr.bf16.mxu0 0
      %158 = vmatpush1.bf16.xpose.msra.mxu0 0
      %159 = vmatprep.subr.bf16.mxu0 0
      %160 = vmatpush1.bf16.xpose.msra.mxu0 0
      %161 = vmatprep.subr.bf16.mxu0 0
      %162 = vmatpush1.bf16.xpose.msra.mxu0 0
      %163 = vmatprep.subr.bf16.mxu0 0
      %164 = vmatpush1.bf16.xpose.msra.mxu0 0
      %165 = vmatprep.subr.bf16.mxu0 0
      %166 = vmatpush1.bf16.xpose.msra.mxu0 0
      %167 = vmatprep.mubr.bf16.mxu0 0
      %168 = vmatmul.mubr.bf16.gmra.mrb[0].mxu0 %v130
      %v169 = vpop.f32.mrb[0].mxu0
      %v170 = vadd.f32 0.0, %v169
      %v171 = vpop.f32.mrb[0].mxu0
      %v172 = vpop.f32.mrb[0].mxu0
      %v173 = vpop.f32.mrb[0].mxu0
      %174 = vdwg.mxu0
      %v176 = vunpack.c.l.b16 %v122
      %v177 = vpack.c.b16 %v176, %v176
      %178 = vrot.lane.b32.xlu0 %v177, 96
      %v179 = vpop.permute.xlu0 %178
      %v181 = vsel %vm128, %v122, 0
      %v184 = vsel %vm128, %v179, 0
      %186 = vmatprep.subr.bf16.mxu0 0
      %187 = vmatpush1.bf16.xpose.msra.mxu0 %v184
      %188 = vmatprep.subr.bf16.mxu0 0
      %189 = vmatpush1.bf16.xpose.msra.mxu0 0
      %190 = vmatprep.subr.bf16.mxu0 0
      %191 = vmatpush1.bf16.xpose.msra.mxu0 0
      %192 = vmatprep.subr.bf16.mxu0 0
      %193 = vmatpush1.bf16.xpose.msra.mxu0 0
      %194 = vmatprep.subr.bf16.mxu0 0
      %195 = vmatpush1.bf16.xpose.msra.mxu0 0
      %196 = vmatprep.subr.bf16.mxu0 0
      %197 = vmatpush1.bf16.xpose.msra.mxu0 0
      %198 = vmatprep.subr.bf16.mxu0 0
      %199 = vmatpush1.bf16.xpose.msra.mxu0 0
      %200 = vmatprep.subr.bf16.mxu0 0
      %201 = vmatpush1.bf16.xpose.msra.mxu0 0
      %202 = vmatprep.subr.bf16.mxu0 0
      %203 = vmatpush1.bf16.xpose.msra.mxu0 0
      %204 = vmatprep.subr.bf16.mxu0 0
      %205 = vmatpush1.bf16.xpose.msra.mxu0 0
      %206 = vmatprep.subr.bf16.mxu0 0
      %207 = vmatpush1.bf16.xpose.msra.mxu0 0
      %208 = vmatprep.subr.bf16.mxu0 0
      %209 = vmatpush1.bf16.xpose.msra.mxu0 0
      %210 = vmatprep.subr.bf16.mxu0 0
      %211 = vmatpush1.bf16.xpose.msra.mxu0 0
      %212 = vmatprep.subr.bf16.mxu0 0
      %213 = vmatpush1.bf16.xpose.msra.mxu0 0
      %214 = vmatprep.subr.bf16.mxu0 0
      %215 = vmatpush1.bf16.xpose.msra.mxu0 0
      %216 = vmatprep.subr.bf16.mxu0 0
      %217 = vmatpush1.bf16.xpose.msra.mxu0 0
      %218 = vmatprep.mubr.bf16.mxu0 0
      %219 = vmatmul.mubr.bf16.gmra.mrb[0].mxu0 %v181
      %v220 = vpop.f32.mrb[0].mxu0
      %v221 = vadd.f32 0.0, %v220
      %v222 = vpop.f32.mrb[0].mxu0
      %v223 = vpop.f32.mrb[0].mxu0
      %v224 = vpop.f32.mrb[0].mxu0
      %225 = vdwg.mxu0
      %v226 = vmul.f32 %v170, 0.35355338
      %v227 = vmul.f32 %v221, 0.35355338
      %vm228 = vcmask 36864
      %v229 = vsel %vm228, %v226, -inf
      %230 = vmax.xlane.f32.xlu0 %v229
      %v231 = vpop.xlane.xlu0 %230
      %v232 = vsel %vm228, %v227, -inf
      %233 = vmax.xlane.f32.xlu0 %v232
      %v234 = vpop.xlane.xlu0 %233
      %v235 = vsub.f32 %v226, %v231
      %v236 = vsub.f32 %v227, %v234
      %v237 = vmul.f32 %v235, 1.442695
      %v238 = vpow.pop %v237
      %v239 = vmul.f32 %v236, 1.442695
      %v240 = vpow.pop %v239
      %v241 = vsel %vm228, %v238, 0.0
      %242 = vadd.xlane.f32.xlu0 %v241
      %v243 = vpop.xlane.xlu0 %242
      %v244 = vsel %vm228, %v240, 0.0
      %245 = vadd.xlane.f32.xlu0 %v244
      %v246 = vpop.xlane.xlu0 %245
      %v247 = vpack.c.bf16 %v238, %v238
      %v248 = vpack.c.bf16 %v240, %v240
      %249 = vrot.lane.b32.xlu0 %v125, 64
      %v250 = vpop.permute.xlu0 %249
      %vm251 = vcmask 39936
      %v253 = vsel %vm251, %v247, 0
      %vm255 = vcmask 1041408
      %vm256 = vcmask 1042432
      %v257 = vsel %vm255, 4294967295, 65535
      %v258 = vsel %vm256, %v257, 0
      %v260 = vand.u32 %v250, %v258
      %262 = vmatprep.subr.bf16.mxu0 0
      %263 = vmatpush1.bf16.msra.mxu0 %v260
      %264 = vmatprep.subr.bf16.mxu0 0
      %265 = vmatpush1.bf16.msra.mxu0 0
      %266 = vmatprep.subr.bf16.mxu0 0
      %267 = vmatpush1.bf16.msra.mxu0 0
      %268 = vmatprep.subr.bf16.mxu0 0
      %269 = vmatpush1.bf16.msra.mxu0 0
      %270 = vmatprep.subr.bf16.mxu0 0
      %271 = vmatpush1.bf16.msra.mxu0 0
      %272 = vmatprep.subr.bf16.mxu0 0
      %273 = vmatpush1.bf16.msra.mxu0 0
      %274 = vmatprep.subr.bf16.mxu0 0
      %275 = vmatpush1.bf16.msra.mxu0 0
      %276 = vmatprep.subr.bf16.mxu0 0
      %277 = vmatpush1.bf16.msra.mxu0 0
      %278 = vmatprep.subr.bf16.mxu0 0
      %279 = vmatpush1.bf16.msra.mxu0 0
      %280 = vmatprep.subr.bf16.mxu0 0
      %281 = vmatpush1.bf16.msra.mxu0 0
      %282 = vmatprep.subr.bf16.mxu0 0
      %283 = vmatpush1.bf16.msra.mxu0 0
      %284 = vmatprep.subr.bf16.mxu0 0
      %285 = vmatpush1.bf16.msra.mxu0 0
      %286 = vmatprep.subr.bf16.mxu0 0
      %287 = vmatpush1.bf16.msra.mxu0 0
      %288 = vmatprep.subr.bf16.mxu0 0
      %289 = vmatpush1.bf16.msra.mxu0 0
      %290 = vmatprep.subr.bf16.mxu0 0
      %291 = vmatpush1.bf16.msra.mxu0 0
      %292 = vmatprep.subr.bf16.mxu0 0
      %293 = vmatpush1.bf16.msra.mxu0 0
      %294 = vmatprep.mubr.bf16.mxu0 0
      %295 = vmatmul.mubr.bf16.gmra.mrb[0].mxu0 %v253
      %v296 = vpop.f32.mrb[0].mxu0
      %v297 = vadd.f32 0.0, %v296
      %v298 = vpop.f32.mrb[0].mxu0
      %v299 = vpop.f32.mrb[0].mxu0
      %v300 = vpop.f32.mrb[0].mxu0
      %301 = vdwg.mxu0
      %302 = vrot.lane.b32.xlu0 %v177, 64
      %v303 = vpop.permute.xlu0 %302
      %v305 = vsel %vm251, %v248, 0
      %v308 = vand.u32 %v303, %v258
      %310 = vmatprep.subr.bf16.mxu0 0
      %311 = vmatpush1.bf16.msra.mxu0 %v308
      %312 = vmatprep.subr.bf16.mxu0 0
      %313 = vmatpush1.bf16.msra.mxu0 0
      %314 = vmatprep.subr.bf16.mxu0 0
      %315 = vmatpush1.bf16.msra.mxu0 0
      %316 = vmatprep.subr.bf16.mxu0 0
      %317 = vmatpush1.bf16.msra.mxu0 0
      %318 = vmatprep.subr.bf16.mxu0 0
      %319 = vmatpush1.bf16.msra.mxu0 0
      %320 = vmatprep.subr.bf16.mxu0 0
      %321 = vmatpush1.bf16.msra.mxu0 0
      %322 = vmatprep.subr.bf16.mxu0 0
      %323 = vmatpush1.bf16.msra.mxu0 0
      %324 = vmatprep.subr.bf16.mxu0 0
      %325 = vmatpush1.bf16.msra.mxu0 0
      %326 = vmatprep.subr.bf16.mxu0 0
      %327 = vmatpush1.bf16.msra.mxu0 0
      %328 = vmatprep.subr.bf16.mxu0 0
      %329 = vmatpush1.bf16.msra.mxu0 0
      %330 = vmatprep.subr.bf16.mxu0 0
      %331 = vmatpush1.bf16.msra.mxu0 0
      %332 = vmatprep.subr.bf16.mxu0 0
      %333 = vmatpush1.bf16.msra.mxu0 0
      %334 = vmatprep.subr.bf16.mxu0 0
      %335 = vmatpush1.bf16.msra.mxu0 0
      %336 = vmatprep.subr.bf16.mxu0 0
      %337 = vmatpush1.bf16.msra.mxu0 0
      %338 = vmatprep.subr.bf16.mxu0 0
      %339 = vmatpush1.bf16.msra.mxu0 0
      %340 = vmatprep.subr.bf16.mxu0 0
      %341 = vmatpush1.bf16.msra.mxu0 0
      %342 = vmatprep.mubr.bf16.mxu0 0
      %343 = vmatmul.mubr.bf16.gmra.mrb[0].mxu0 %v305
      %v344 = vpop.f32.mrb[0].mxu0
      %v345 = vadd.f32 0.0, %v344
      %v346 = vpop.f32.mrb[0].mxu0
      %v347 = vpop.f32.mrb[0].mxu0
      %v348 = vpop.f32.mrb[0].mxu0
      %349 = vdwg.mxu0
      %v350 = vrcp.pop %v243
      %v351 = vmul.f32 %v297, %v350
      %v352 = vrcp.pop %v246
      %v353 = vmul.f32 %v345, %v352
      %v354 = vpack.c.bf16 %v351, %v351
      %v355 = vpack.c.bf16 %v353, %v353
      %vm356 = vcmask 59392
      %vm357 = vsmask.f32 2304
      %vm358 = vmand %vm356, %vm357
      %v359 = vld [vmem:[%s118] sm:$0x7]
      %v360 = vsel %vm358, %v354, %v359
      %361 = vst [vmem:[%s118] sm:$0x7] %v360
      %v362 = vld [vmem:[%s118 + $0x4] sm:$0x7]
      %v363 = vsel %vm358, %v355, %v362
      %364 = vst [vmem:[%s118 + $0x4] sm:$0x7] %v363
      %365 = vrot.lane.b32.xlu0 %v125, 120
      %v366 = vpop.permute.xlu0 %365
      %367 = vrot.lane.b32.xlu0 %v125, 88
      %v368 = vpop.permute.xlu0 %367
      %v370 = vsel %vm128, %v366, 0
      %v373 = vsel %vm128, %v368, 0
      %375 = vmatprep.subr.bf16.mxu0 0
      %376 = vmatpush1.bf16.xpose.msra.mxu0 %v373
      %377 = vmatprep.subr.bf16.mxu0 0
      %378 = vmatpush1.bf16.xpose.msra.mxu0 0
      %379 = vmatprep.subr.bf16.mxu0 0
      %380 = vmatpush1.bf16.xpose.msra.mxu0 0
      %381 = vmatprep.subr.bf16.mxu0 0
      %382 = vmatpush1.bf16.xpose.msra.mxu0 0
      %383 = vmatprep.subr.bf16.mxu0 0
      %384 = vmatpush1.bf16.xpose.msra.mxu0 0
      %385 = vmatprep.subr.bf16.mxu0 0
      %386 = vmatpush1.bf16.xpose.msra.mxu0 0
      %387 = vmatprep.subr.bf16.mxu0 0
      %388 = vmatpush1.bf16.xpose.msra.mxu0 0
      %389 = vmatprep.subr.bf16.mxu0 0
      %390 = vmatpush1.bf16.xpose.msra.mxu0 0
      %391 = vmatprep.subr.bf16.mxu0 0
      %392 = vmatpush1.bf16.xpose.msra.mxu0 0
      %393 = vmatprep.subr.bf16.mxu0 0
      %394 = vmatpush1.bf16.xpose.msra.mxu0 0
      %395 = vmatprep.subr.bf16.mxu0 0
      %396 = vmatpush1.bf16.xpose.msra.mxu0 0
      %397 = vmatprep.subr.bf16.mxu0 0
      %398 = vmatpush1.bf16.xpose.msra.mxu0 0
      %399 = vmatprep.subr.bf16.mxu0 0
      %400 = vmatpush1.bf16.xpose.msra.mxu0 0
      %401 = vmatprep.subr.bf16.mxu0 0
      %402 = vmatpush1.bf16.xpose.msra.mxu0 0
      %403 = vmatprep.subr.bf16.mxu0 0
      %404 = vmatpush1.bf16.xpose.msra.mxu0 0
      %405 = vmatprep.subr.bf16.mxu0 0
      %406 = vmatpush1.bf16.xpose.msra.mxu0 0
      %407 = vmatprep.mubr.bf16.mxu0 0
      %408 = vmatmul.mubr.bf16.gmra.mrb[0].mxu0 %v370
      %v409 = vpop.f32.mrb[0].mxu0
      %v410 = vadd.f32 0.0, %v409
      %v411 = vpop.f32.mrb[0].mxu0
      %v412 = vpop.f32.mrb[0].mxu0
      %v413 = vpop.f32.mrb[0].mxu0
      %414 = vdwg.mxu0
      %415 = vrot.lane.b32.xlu0 %v177, 120
      %v416 = vpop.permute.xlu0 %415
      %417 = vrot.lane.b32.xlu0 %v177, 88
      %v418 = vpop.permute.xlu0 %417
      %v420 = vsel %vm128, %v416, 0
      %v423 = vsel %vm128, %v418, 0
      %425 = vmatprep.subr.bf16.mxu0 0
      %426 = vmatpush1.bf16.xpose.msra.mxu0 %v423
      %427 = vmatprep.subr.bf16.mxu0 0
      %428 = vmatpush1.bf16.xpose.msra.mxu0 0
      %429 = vmatprep.subr.bf16.mxu0 0
      %430 = vmatpush1.bf16.xpose.msra.mxu0 0
      %431 = vmatprep.subr.bf16.mxu0 0
      %432 = vmatpush1.bf16.xpose.msra.mxu0 0
      %433 = vmatprep.subr.bf16.mxu0 0
      %434 = vmatpush1.bf16.xpose.msra.mxu0 0
      %435 = vmatprep.subr.bf16.mxu0 0
      %436 = vmatpush1.bf16.xpose.msra.mxu0 0
      %437 = vmatprep.subr.bf16.mxu0 0
      %438 = vmatpush1.bf16.xpose.msra.mxu0 0
      %439 = vmatprep.subr.bf16.mxu0 0
      %440 = vmatpush1.bf16.xpose.msra.mxu0 0
      %441 = vmatprep.subr.bf16.mxu0 0
      %442 = vmatpush1.bf16.xpose.msra.mxu0 0
      %443 = vmatprep.subr.bf16.mxu0 0
      %444 = vmatpush1.bf16.xpose.msra.mxu0 0
      %445 = vmatprep.subr.bf16.mxu0 0
      %446 = vmatpush1.bf16.xpose.msra.mxu0 0
      %447 = vmatprep.subr.bf16.mxu0 0
      %448 = vmatpush1.bf16.xpose.msra.mxu0 0
      %449 = vmatprep.subr.bf16.mxu0 0
      %450 = vmatpush1.bf16.xpose.msra.mxu0 0
      %451 = vmatprep.subr.bf16.mxu0 0
      %452 = vmatpush1.bf16.xpose.msra.mxu0 0
      %453 = vmatprep.subr.bf16.mxu0 0
      %454 = vmatpush1.bf16.xpose.msra.mxu0 0
      %455 = vmatprep.subr.bf16.mxu0 0
      %456 = vmatpush1.bf16.xpose.msra.mxu0 0
      %457 = vmatprep.mubr.bf16.mxu0 0
      %458 = vmatmul.mubr.bf16.gmra.mrb[0].mxu0 %v420
      %v459 = vpop.f32.mrb[0].mxu0
      %v460 = vadd.f32 0.0, %v459
      %v461 = vpop.f32.mrb[0].mxu0
      %v462 = vpop.f32.mrb[0].mxu0
      %v463 = vpop.f32.mrb[0].mxu0
      %464 = vdwg.mxu0
      %v465 = vmul.f32 %v410, 0.35355338
      %v466 = vmul.f32 %v460, 0.35355338
      %v467 = vsel %vm228, %v465, -inf
      %468 = vmax.xlane.f32.xlu0 %v467
      %v469 = vpop.xlane.xlu0 %468
      %v470 = vsel %vm228, %v466, -inf
      %471 = vmax.xlane.f32.xlu0 %v470
      %v472 = vpop.xlane.xlu0 %471
      %v473 = vsub.f32 %v465, %v469
      %v474 = vsub.f32 %v466, %v472
      %v475 = vmul.f32 %v473, 1.442695
      %v476 = vpow.pop %v475
      %v477 = vmul.f32 %v474, 1.442695
      %v478 = vpow.pop %v477
      %v479 = vsel %vm228, %v476, 0.0
      %480 = vadd.xlane.f32.xlu0 %v479
      %v481 = vpop.xlane.xlu0 %480
      %v482 = vsel %vm228, %v478, 0.0
      %483 = vadd.xlane.f32.xlu0 %v482
      %v484 = vpop.xlane.xlu0 %483
      %v485 = vpack.c.bf16 %v476, %v476
      %v486 = vpack.c.bf16 %v478, %v478
      %487 = vrot.lane.b32.xlu0 %v125, 56
      %v488 = vpop.permute.xlu0 %487
      %v490 = vsel %vm251, %v485, 0
      %v493 = vand.u32 %v488, %v258
      %495 = vmatprep.subr.bf16.mxu0 0
      %496 = vmatpush1.bf16.msra.mxu0 %v493
      %497 = vmatprep.subr.bf16.mxu0 0
      %498 = vmatpush1.bf16.msra.mxu0 0
      %499 = vmatprep.subr.bf16.mxu0 0
      %500 = vmatpush1.bf16.msra.mxu0 0
      %501 = vmatprep.subr.bf16.mxu0 0
      %502 = vmatpush1.bf16.msra.mxu0 0
      %503 = vmatprep.subr.bf16.mxu0 0
      %504 = vmatpush1.bf16.msra.mxu0 0
      %505 = vmatprep.subr.bf16.mxu0 0
      %506 = vmatpush1.bf16.msra.mxu0 0
      %507 = vmatprep.subr.bf16.mxu0 0
      %508 = vmatpush1.bf16.msra.mxu0 0
      %509 = vmatprep.subr.bf16.mxu0 0
      %510 = vmatpush1.bf16.msra.mxu0 0
      %511 = vmatprep.subr.bf16.mxu0 0
      %512 = vmatpush1.bf16.msra.mxu0 0
      %513 = vmatprep.subr.bf16.mxu0 0
      %514 = vmatpush1.bf16.msra.mxu0 0
      %515 = vmatprep.subr.bf16.mxu0 0
      %516 = vmatpush1.bf16.msra.mxu0 0
      %517 = vmatprep.subr.bf16.mxu0 0
      %518 = vmatpush1.bf16.msra.mxu0 0
      %519 = vmatprep.subr.bf16.mxu0 0
      %520 = vmatpush1.bf16.msra.mxu0 0
      %521 = vmatprep.subr.bf16.mxu0 0
      %522 = vmatpush1.bf16.msra.mxu0 0
      %523 = vmatprep.subr.bf16.mxu0 0
      %524 = vmatpush1.bf16.msra.mxu0 0
      %525 = vmatprep.subr.bf16.mxu0 0
      %526 = vmatpush1.bf16.msra.mxu0 0
      %527 = vmatprep.mubr.bf16.mxu0 0
      %528 = vmatmul.mubr.bf16.gmra.mrb[0].mxu0 %v490
      %v529 = vpop.f32.mrb[0].mxu0
      %v530 = vadd.f32 0.0, %v529
      %v531 = vpop.f32.mrb[0].mxu0
      %v532 = vpop.f32.mrb[0].mxu0
      %v533 = vpop.f32.mrb[0].mxu0
      %534 = vdwg.mxu0
      %535 = vrot.lane.b32.xlu0 %v177, 56
      %v536 = vpop.permute.xlu0 %535
      %v538 = vsel %vm251, %v486, 0
      %v541 = vand.u32 %v536, %v258
      %543 = vmatprep.subr.bf16.mxu0 0
      %544 = vmatpush1.bf16.msra.mxu0 %v541
      %545 = vmatprep.subr.bf16.mxu0 0
      %546 = vmatpush1.bf16.msra.mxu0 0
      %547 = vmatprep.subr.bf16.mxu0 0
      %548 = vmatpush1.bf16.msra.mxu0 0
      %549 = vmatprep.subr.bf16.mxu0 0
      %550 = vmatpush1.bf16.msra.mxu0 0
      %551 = vmatprep.subr.bf16.mxu0 0
      %552 = vmatpush1.bf16.msra.mxu0 0
      %553 = vmatprep.subr.bf16.mxu0 0
      %554 = vmatpush1.bf16.msra.mxu0 0
      %555 = vmatprep.subr.bf16.mxu0 0
      %556 = vmatpush1.bf16.msra.mxu0 0
      %557 = vmatprep.subr.bf16.mxu0 0
      %558 = vmatpush1.bf16.msra.mxu0 0
      %559 = vmatprep.subr.bf16.mxu0 0
      %560 = vmatpush1.bf16.msra.mxu0 0
      %561 = vmatprep.subr.bf16.mxu0 0
      %562 = vmatpush1.bf16.msra.mxu0 0
      %563 = vmatprep.subr.bf16.mxu0 0
      %564 = vmatpush1.bf16.msra.mxu0 0
      %565 = vmatprep.subr.bf16.mxu0 0
      %566 = vmatpush1.bf16.msra.mxu0 0
      %567 = vmatprep.subr.bf16.mxu0 0
      %568 = vmatpush1.bf16.msra.mxu0 0
      %569 = vmatprep.subr.bf16.mxu0 0
      %570 = vmatpush1.bf16.msra.mxu0 0
      %571 = vmatprep.subr.bf16.mxu0 0
      %572 = vmatpush1.bf16.msra.mxu0 0
      %573 = vmatprep.subr.bf16.mxu0 0
      %574 = vmatpush1.bf16.msra.mxu0 0
      %575 = vmatprep.mubr.bf16.mxu0 0
      %576 = vmatmul.mubr.bf16.gmra.mrb[0].mxu0 %v538
      %v577 = vpop.f32.mrb[0].mxu0
      %v578 = vadd.f32 0.0, %v577
      %v579 = vpop.f32.mrb[0].mxu0
      %v580 = vpop.f32.mrb[0].mxu0
      %v581 = vpop.f32.mrb[0].mxu0
      %582 = vdwg.mxu0
      %v583 = vrcp.pop %v481
      %v584 = vmul.f32 %v530, %v583
      %v585 = vrcp.pop %v484
      %v586 = vmul.f32 %v578, %v585
      %v587 = vpack.c.bf16 %v584, %v584
      %v588 = vpack.c.bf16 %v586, %v586
      %v591 = vunpack.c.l.b16 %v587
      %v592 = vunpack.c.l.b16 %v588
      %v593 = vpack.c.b16 %v591, %v591
      %v594 = vpack.c.b16 %v592, %v592
      %595 = vrot.lane.b32.xlu0 %v593, 8
      %v596 = vpop.permute.xlu0 %595
      %597 = vrot.lane.b32.xlu0 %v594, 8
      %v598 = vpop.permute.xlu0 %597
      %vm601 = vcmask 124992
      %vm602 = vmand %vm601, %vm357
      %v603 = vld [vmem:[%s118] sm:$0x7]
      %v604 = vsel %vm602, %v596, %v603
      %605 = vst [vmem:[%s118] sm:$0x7] %v604
      %v606 = vld [vmem:[%s118 + $0x4] sm:$0x7]
      %v607 = vsel %vm602, %v598, %v606
      %608 = vst [vmem:[%s118 + $0x4] sm:$0x7] %v607
      %609 = vrot.lane.b32.xlu0 %v125, 112
      %v610 = vpop.permute.xlu0 %609
      %611 = vrot.lane.b32.xlu0 %v125, 80
      %v612 = vpop.permute.xlu0 %611
      %v614 = vsel %vm128, %v610, 0
      %v617 = vsel %vm128, %v612, 0
      %619 = vmatprep.subr.bf16.mxu0 0
      %620 = vmatpush1.bf16.xpose.msra.mxu0 %v617
      %621 = vmatprep.subr.bf16.mxu0 0
      %622 = vmatpush1.bf16.xpose.msra.mxu0 0
      %623 = vmatprep.subr.bf16.mxu0 0
      %624 = vmatpush1.bf16.xpose.msra.mxu0 0
      %625 = vmatprep.subr.bf16.mxu0 0
      %626 = vmatpush1.bf16.xpose.msra.mxu0 0
      %627 = vmatprep.subr.bf16.mxu0 0
      %628 = vmatpush1.bf16.xpose.msra.mxu0 0
      %629 = vmatprep.subr.bf16.mxu0 0
      %630 = vmatpush1.bf16.xpose.msra.mxu0 0
      %631 = vmatprep.subr.bf16.mxu0 0
      %632 = vmatpush1.bf16.xpose.msra.mxu0 0
      %633 = vmatprep.subr.bf16.mxu0 0
      %634 = vmatpush1.bf16.xpose.msra.mxu0 0
      %635 = vmatprep.subr.bf16.mxu0 0
      %636 = vmatpush1.bf16.xpose.msra.mxu0 0
      %637 = vmatprep.subr.bf16.mxu0 0
      %638 = vmatpush1.bf16.xpose.msra.mxu0 0
      %639 = vmatprep.subr.bf16.mxu0 0
      %640 = vmatpush1.bf16.xpose.msra.mxu0 0
      %641 = vmatprep.subr.bf16.mxu0 0
      %642 = vmatpush1.bf16.xpose.msra.mxu0 0
      %643 = vmatprep.subr.bf16.mxu0 0
      %644 = vmatpush1.bf16.xpose.msra.mxu0 0
      %645 = vmatprep.subr.bf16.mxu0 0
      %646 = vmatpush1.bf16.xpose.msra.mxu0 0
      %647 = vmatprep.subr.bf16.mxu0 0
      %648 = vmatpush1.bf16.xpose.msra.mxu0 0
      %649 = vmatprep.subr.bf16.mxu0 0
      %650 = vmatpush1.bf16.xpose.msra.mxu0 0
      %651 = vmatprep.mubr.bf16.mxu0 0
      %652 = vmatmul.mubr.bf16.gmra.mrb[0].mxu0 %v614
      %v653 = vpop.f32.mrb[0].mxu0
      %v654 = vadd.f32 0.0, %v653
      %v655 = vpop.f32.mrb[0].mxu0
      %v656 = vpop.f32.mrb[0].mxu0
      %v657 = vpop.f32.mrb[0].mxu0
      %658 = vdwg.mxu0
      %659 = vrot.lane.b32.xlu0 %v177, 112
      %v660 = vpop.permute.xlu0 %659
      %661 = vrot.lane.b32.xlu0 %v177, 80
      %v662 = vpop.permute.xlu0 %661
      %v664 = vsel %vm128, %v660, 0
      %v667 = vsel %vm128, %v662, 0
      %669 = vmatprep.subr.bf16.mxu0 0
      %670 = vmatpush1.bf16.xpose.msra.mxu0 %v667
      %671 = vmatprep.subr.bf16.mxu0 0
      %672 = vmatpush1.bf16.xpose.msra.mxu0 0
      %673 = vmatprep.subr.bf16.mxu0 0
      %674 = vmatpush1.bf16.xpose.msra.mxu0 0
      %675 = vmatprep.subr.bf16.mxu0 0
      %676 = vmatpush1.bf16.xpose.msra.mxu0 0
      %677 = vmatprep.subr.bf16.mxu0 0
      %678 = vmatpush1.bf16.xpose.msra.mxu0 0
      %679 = vmatprep.subr.bf16.mxu0 0
      %680 = vmatpush1.bf16.xpose.msra.mxu0 0
      %681 = vmatprep.subr.bf16.mxu0 0
      %682 = vmatpush1.bf16.xpose.msra.mxu0 0
      %683 = vmatprep.subr.bf16.mxu0 0
      %684 = vmatpush1.bf16.xpose.msra.mxu0 0
      %685 = vmatprep.subr.bf16.mxu0 0
      %686 = vmatpush1.bf16.xpose.msra.mxu0 0
      %687 = vmatprep.subr.bf16.mxu0 0
      %688 = vmatpush1.bf16.xpose.msra.mxu0 0
      %689 = vmatprep.subr.bf16.mxu0 0
      %690 = vmatpush1.bf16.xpose.msra.mxu0 0
      %691 = vmatprep.subr.bf16.mxu0 0
      %692 = vmatpush1.bf16.xpose.msra.mxu0 0
      %693 = vmatprep.subr.bf16.mxu0 0
      %694 = vmatpush1.bf16.xpose.msra.mxu0 0
      %695 = vmatprep.subr.bf16.mxu0 0
      %696 = vmatpush1.bf16.xpose.msra.mxu0 0
      %697 = vmatprep.subr.bf16.mxu0 0
      %698 = vmatpush1.bf16.xpose.msra.mxu0 0
      %699 = vmatprep.subr.bf16.mxu0 0
      %700 = vmatpush1.bf16.xpose.msra.mxu0 0
      %701 = vmatprep.mubr.bf16.mxu0 0
      %702 = vmatmul.mubr.bf16.gmra.mrb[0].mxu0 %v664
      %v703 = vpop.f32.mrb[0].mxu0
      %v704 = vadd.f32 0.0, %v703
      %v705 = vpop.f32.mrb[0].mxu0
      %v706 = vpop.f32.mrb[0].mxu0
      %v707 = vpop.f32.mrb[0].mxu0
      %708 = vdwg.mxu0
      %v709 = vmul.f32 %v654, 0.35355338
      %v710 = vmul.f32 %v704, 0.35355338
      %v711 = vsel %vm228, %v709, -inf
      %712 = vmax.xlane.f32.xlu0 %v711
      %v713 = vpop.xlane.xlu0 %712
      %v714 = vsel %vm228, %v710, -inf
      %715 = vmax.xlane.f32.xlu0 %v714
      %v716 = vpop.xlane.xlu0 %715
      %v717 = vsub.f32 %v709, %v713
      %v718 = vsub.f32 %v710, %v716
      %v719 = vmul.f32 %v717, 1.442695
      %v720 = vpow.pop %v719
      %v721 = vmul.f32 %v718, 1.442695
      %v722 = vpow.pop %v721
      %v723 = vsel %vm228, %v720, 0.0
      %724 = vadd.xlane.f32.xlu0 %v723
      %v725 = vpop.xlane.xlu0 %724
      %v726 = vsel %vm228, %v722, 0.0
      %727 = vadd.xlane.f32.xlu0 %v726
      %v728 = vpop.xlane.xlu0 %727
      %v729 = vpack.c.bf16 %v720, %v720
      %v730 = vpack.c.bf16 %v722, %v722
      %731 = vrot.lane.b32.xlu0 %v125, 48
      %v732 = vpop.permute.xlu0 %731
      %v734 = vsel %vm251, %v729, 0
      %v737 = vand.u32 %v732, %v258
      %739 = vmatprep.subr.bf16.mxu0 0
      %740 = vmatpush1.bf16.msra.mxu0 %v737
      %741 = vmatprep.subr.bf16.mxu0 0
      %742 = vmatpush1.bf16.msra.mxu0 0
      %743 = vmatprep.subr.bf16.mxu0 0
      %744 = vmatpush1.bf16.msra.mxu0 0
      %745 = vmatprep.subr.bf16.mxu0 0
      %746 = vmatpush1.bf16.msra.mxu0 0
      %747 = vmatprep.subr.bf16.mxu0 0
      %748 = vmatpush1.bf16.msra.mxu0 0
      %749 = vmatprep.subr.bf16.mxu0 0
      %750 = vmatpush1.bf16.msra.mxu0 0
      %751 = vmatprep.subr.bf16.mxu0 0
      %752 = vmatpush1.bf16.msra.mxu0 0
      %753 = vmatprep.subr.bf16.mxu0 0
      %754 = vmatpush1.bf16.msra.mxu0 0
      %755 = vmatprep.subr.bf16.mxu0 0
      %756 = vmatpush1.bf16.msra.mxu0 0
      %757 = vmatprep.subr.bf16.mxu0 0
      %758 = vmatpush1.bf16.msra.mxu0 0
      %759 = vmatprep.subr.bf16.mxu0 0
      %760 = vmatpush1.bf16.msra.mxu0 0
      %761 = vmatprep.subr.bf16.mxu0 0
      %762 = vmatpush1.bf16.msra.mxu0 0
      %763 = vmatprep.subr.bf16.mxu0 0
      %764 = vmatpush1.bf16.msra.mxu0 0
      %765 = vmatprep.subr.bf16.mxu0 0
      %766 = vmatpush1.bf16.msra.mxu0 0
      %767 = vmatprep.subr.bf16.mxu0 0
      %768 = vmatpush1.bf16.msra.mxu0 0
      %769 = vmatprep.subr.bf16.mxu0 0
      %770 = vmatpush1.bf16.msra.mxu0 0
      %771 = vmatprep.mubr.bf16.mxu0 0
      %772 = vmatmul.mubr.bf16.gmra.mrb[0].mxu0 %v734
      %v773 = vpop.f32.mrb[0].mxu0
      %v774 = vadd.f32 0.0, %v773
      %v775 = vpop.f32.mrb[0].mxu0
      %v776 = vpop.f32.mrb[0].mxu0
      %v777 = vpop.f32.mrb[0].mxu0
      %778 = vdwg.mxu0
      %779 = vrot.lane.b32.xlu0 %v177, 48
      %v780 = vpop.permute.xlu0 %779
      %v782 = vsel %vm251, %v730, 0
      %v785 = vand.u32 %v780, %v258
      %787 = vmatprep.subr.bf16.mxu0 0
      %788 = vmatpush1.bf16.msra.mxu0 %v785
      %789 = vmatprep.subr.bf16.mxu0 0
      %790 = vmatpush1.bf16.msra.mxu0 0
      %791 = vmatprep.subr.bf16.mxu0 0
      %792 = vmatpush1.bf16.msra.mxu0 0
      %793 = vmatprep.subr.bf16.mxu0 0
      %794 = vmatpush1.bf16.msra.mxu0 0
      %795 = vmatprep.subr.bf16.mxu0 0
      %796 = vmatpush1.bf16.msra.mxu0 0
      %797 = vmatprep.subr.bf16.mxu0 0
      %798 = vmatpush1.bf16.msra.mxu0 0
      %799 = vmatprep.subr.bf16.mxu0 0
      %800 = vmatpush1.bf16.msra.mxu0 0
      %801 = vmatprep.subr.bf16.mxu0 0
      %802 = vmatpush1.bf16.msra.mxu0 0
      %803 = vmatprep.subr.bf16.mxu0 0
      %804 = vmatpush1.bf16.msra.mxu0 0
      %805 = vmatprep.subr.bf16.mxu0 0
      %806 = vmatpush1.bf16.msra.mxu0 0
      %807 = vmatprep.subr.bf16.mxu0 0
      %808 = vmatpush1.bf16.msra.mxu0 0
      %809 = vmatprep.subr.bf16.mxu0 0
      %810 = vmatpush1.bf16.msra.mxu0 0
      %811 = vmatprep.subr.bf16.mxu0 0
      %812 = vmatpush1.bf16.msra.mxu0 0
      %813 = vmatprep.subr.bf16.mxu0 0
      %814 = vmatpush1.bf16.msra.mxu0 0
      %815 = vmatprep.subr.bf16.mxu0 0
      %816 = vmatpush1.bf16.msra.mxu0 0
      %817 = vmatprep.subr.bf16.mxu0 0
      %818 = vmatpush1.bf16.msra.mxu0 0
      %819 = vmatprep.mubr.bf16.mxu0 0
      %820 = vmatmul.mubr.bf16.gmra.mrb[0].mxu0 %v782
      %v821 = vpop.f32.mrb[0].mxu0
      %v822 = vadd.f32 0.0, %v821
      %v823 = vpop.f32.mrb[0].mxu0
      %v824 = vpop.f32.mrb[0].mxu0
      %v825 = vpop.f32.mrb[0].mxu0
      %826 = vdwg.mxu0
      %v827 = vrcp.pop %v725
      %v828 = vmul.f32 %v774, %v827
      %v829 = vrcp.pop %v728
      %v830 = vmul.f32 %v822, %v829
      %v831 = vpack.c.bf16 %v828, %v828
      %v832 = vpack.c.bf16 %v830, %v830
      %v835 = vunpack.c.l.b16 %v831
      %v836 = vunpack.c.l.b16 %v832
      %v837 = vpack.c.b16 %v835, %v835
      %v838 = vpack.c.b16 %v836, %v836
      %839 = vrot.lane.b32.xlu0 %v837, 16
      %v840 = vpop.permute.xlu0 %839
      %841 = vrot.lane.b32.xlu0 %v838, 16
      %v842 = vpop.permute.xlu0 %841
      %vm845 = vcmask 190592
      %vm846 = vmand %vm845, %vm357
      %v847 = vld [vmem:[%s118] sm:$0x7]
      %v848 = vsel %vm846, %v840, %v847
      %849 = vst [vmem:[%s118] sm:$0x7] %v848
      %v850 = vld [vmem:[%s118 + $0x4] sm:$0x7]
      %v851 = vsel %vm846, %v842, %v850
      %852 = vst [vmem:[%s118 + $0x4] sm:$0x7] %v851
      %853 = vrot.lane.b32.xlu0 %v125, 104
      %v854 = vpop.permute.xlu0 %853
      %855 = vrot.lane.b32.xlu0 %v125, 72
      %v856 = vpop.permute.xlu0 %855
      %v858 = vsel %vm128, %v854, 0
      %v861 = vsel %vm128, %v856, 0
      %863 = vmatprep.subr.bf16.mxu0 0
      %864 = vmatpush1.bf16.xpose.msra.mxu0 %v861
      %865 = vmatprep.subr.bf16.mxu0 0
      %866 = vmatpush1.bf16.xpose.msra.mxu0 0
      %867 = vmatprep.subr.bf16.mxu0 0
      %868 = vmatpush1.bf16.xpose.msra.mxu0 0
      %869 = vmatprep.subr.bf16.mxu0 0
      %870 = vmatpush1.bf16.xpose.msra.mxu0 0
      %871 = vmatprep.subr.bf16.mxu0 0
      %872 = vmatpush1.bf16.xpose.msra.mxu0 0
      %873 = vmatprep.subr.bf16.mxu0 0
      %874 = vmatpush1.bf16.xpose.msra.mxu0 0
      %875 = vmatprep.subr.bf16.mxu0 0
      %876 = vmatpush1.bf16.xpose.msra.mxu0 0
      %877 = vmatprep.subr.bf16.mxu0 0
      %878 = vmatpush1.bf16.xpose.msra.mxu0 0
      %879 = vmatprep.subr.bf16.mxu0 0
      %880 = vmatpush1.bf16.xpose.msra.mxu0 0
      %881 = vmatprep.subr.bf16.mxu0 0
      %882 = vmatpush1.bf16.xpose.msra.mxu0 0
      %883 = vmatprep.subr.bf16.mxu0 0
      %884 = vmatpush1.bf16.xpose.msra.mxu0 0
      %885 = vmatprep.subr.bf16.mxu0 0
      %886 = vmatpush1.bf16.xpose.msra.mxu0 0
      %887 = vmatprep.subr.bf16.mxu0 0
      %888 = vmatpush1.bf16.xpose.msra.mxu0 0
      %889 = vmatprep.subr.bf16.mxu0 0
      %890 = vmatpush1.bf16.xpose.msra.mxu0 0
      %891 = vmatprep.subr.bf16.mxu0 0
      %892 = vmatpush1.bf16.xpose.msra.mxu0 0
      %893 = vmatprep.subr.bf16.mxu0 0
      %894 = vmatpush1.bf16.xpose.msra.mxu0 0
      %895 = vmatprep.mubr.bf16.mxu0 0
      %896 = vmatmul.mubr.bf16.gmra.mrb[0].mxu0 %v858
      %v897 = vpop.f32.mrb[0].mxu0
      %v898 = vadd.f32 0.0, %v897
      %v899 = vpop.f32.mrb[0].mxu0
      %v900 = vpop.f32.mrb[0].mxu0
      %v901 = vpop.f32.mrb[0].mxu0
      %902 = vdwg.mxu0
      %903 = vrot.lane.b32.xlu0 %v177, 104
      %v904 = vpop.permute.xlu0 %903
      %905 = vrot.lane.b32.xlu0 %v177, 72
      %v906 = vpop.permute.xlu0 %905
      %v908 = vsel %vm128, %v904, 0
      %v911 = vsel %vm128, %v906, 0
      %913 = vmatprep.subr.bf16.mxu0 0
      %914 = vmatpush1.bf16.xpose.msra.mxu0 %v911
      %915 = vmatprep.subr.bf16.mxu0 0
      %916 = vmatpush1.bf16.xpose.msra.mxu0 0
      %917 = vmatprep.subr.bf16.mxu0 0
      %918 = vmatpush1.bf16.xpose.msra.mxu0 0
      %919 = vmatprep.subr.bf16.mxu0 0
      %920 = vmatpush1.bf16.xpose.msra.mxu0 0
      %921 = vmatprep.subr.bf16.mxu0 0
      %922 = vmatpush1.bf16.xpose.msra.mxu0 0
      %923 = vmatprep.subr.bf16.mxu0 0
      %924 = vmatpush1.bf16.xpose.msra.mxu0 0
      %925 = vmatprep.subr.bf16.mxu0 0
      %926 = vmatpush1.bf16.xpose.msra.mxu0 0
      %927 = vmatprep.subr.bf16.mxu0 0
      %928 = vmatpush1.bf16.xpose.msra.mxu0 0
      %929 = vmatprep.subr.bf16.mxu0 0
      %930 = vmatpush1.bf16.xpose.msra.mxu0 0
      %931 = vmatprep.subr.bf16.mxu0 0
      %932 = vmatpush1.bf16.xpose.msra.mxu0 0
      %933 = vmatprep.subr.bf16.mxu0 0
      %934 = vmatpush1.bf16.xpose.msra.mxu0 0
      %935 = vmatprep.subr.bf16.mxu0 0
      %936 = vmatpush1.bf16.xpose.msra.mxu0 0
      %937 = vmatprep.subr.bf16.mxu0 0
      %938 = vmatpush1.bf16.xpose.msra.mxu0 0
      %939 = vmatprep.subr.bf16.mxu0 0
      %940 = vmatpush1.bf16.xpose.msra.mxu0 0
      %941 = vmatprep.subr.bf16.mxu0 0
      %942 = vmatpush1.bf16.xpose.msra.mxu0 0
      %943 = vmatprep.subr.bf16.mxu0 0
      %944 = vmatpush1.bf16.xpose.msra.mxu0 0
      %945 = vmatprep.mubr.bf16.mxu0 0
      %946 = vmatmul.mubr.bf16.gmra.mrb[0].mxu0 %v908
      %v947 = vpop.f32.mrb[0].mxu0
      %v948 = vadd.f32 0.0, %v947
      %v949 = vpop.f32.mrb[0].mxu0
      %v950 = vpop.f32.mrb[0].mxu0
      %v951 = vpop.f32.mrb[0].mxu0
      %952 = vdwg.mxu0
      %v953 = vmul.f32 %v898, 0.35355338
      %v954 = vmul.f32 %v948, 0.35355338
      %v955 = vsel %vm228, %v953, -inf
      %956 = vmax.xlane.f32.xlu0 %v955
      %v957 = vpop.xlane.xlu0 %956
      %v958 = vsel %vm228, %v954, -inf
      %959 = vmax.xlane.f32.xlu0 %v958
      %v960 = vpop.xlane.xlu0 %959
      %v961 = vsub.f32 %v953, %v957
      %v962 = vsub.f32 %v954, %v960
      %v963 = vmul.f32 %v961, 1.442695
      %v964 = vpow.pop %v963
      %v965 = vmul.f32 %v962, 1.442695
      %v966 = vpow.pop %v965
      %v967 = vsel %vm228, %v964, 0.0
      %968 = vadd.xlane.f32.xlu0 %v967
      %v969 = vpop.xlane.xlu0 %968
      %v970 = vsel %vm228, %v966, 0.0
      %971 = vadd.xlane.f32.xlu0 %v970
      %v972 = vpop.xlane.xlu0 %971
      %v973 = vpack.c.bf16 %v964, %v964
      %v974 = vpack.c.bf16 %v966, %v966
      %975 = vrot.lane.b32.xlu0 %v125, 40
      %v976 = vpop.permute.xlu0 %975
      %v978 = vsel %vm251, %v973, 0
      %v981 = vand.u32 %v976, %v258
      %983 = vmatprep.subr.bf16.mxu0 0
      %984 = vmatpush1.bf16.msra.mxu0 %v981
      %985 = vmatprep.subr.bf16.mxu0 0
      %986 = vmatpush1.bf16.msra.mxu0 0
      %987 = vmatprep.subr.bf16.mxu0 0
      %988 = vmatpush1.bf16.msra.mxu0 0
      %989 = vmatprep.subr.bf16.mxu0 0
      %990 = vmatpush1.bf16.msra.mxu0 0
      %991 = vmatprep.subr.bf16.mxu0 0
      %992 = vmatpush1.bf16.msra.mxu0 0
      %993 = vmatprep.subr.bf16.mxu0 0
      %994 = vmatpush1.bf16.msra.mxu0 0
      %995 = vmatprep.subr.bf16.mxu0 0
      %996 = vmatpush1.bf16.msra.mxu0 0
      %997 = vmatprep.subr.bf16.mxu0 0
      %998 = vmatpush1.bf16.msra.mxu0 0
      %999 = vmatprep.subr.bf16.mxu0 0
      %1000 = vmatpush1.bf16.msra.mxu0 0
      %1001 = vmatprep.subr.bf16.mxu0 0
      %1002 = vmatpush1.bf16.msra.mxu0 0
      %1003 = vmatprep.subr.bf16.mxu0 0
      %1004 = vmatpush1.bf16.msra.mxu0 0
      %1005 = vmatprep.subr.bf16.mxu0 0
      %1006 = vmatpush1.bf16.msra.mxu0 0
      %1007 = vmatprep.subr.bf16.mxu0 0
      %1008 = vmatpush1.bf16.msra.mxu0 0
      %1009 = vmatprep.subr.bf16.mxu0 0
      %1010 = vmatpush1.bf16.msra.mxu0 0
      %1011 = vmatprep.subr.bf16.mxu0 0
      %1012 = vmatpush1.bf16.msra.mxu0 0
      %1013 = vmatprep.subr.bf16.mxu0 0
      %1014 = vmatpush1.bf16.msra.mxu0 0
      %1015 = vmatprep.mubr.bf16.mxu0 0
      %1016 = vmatmul.mubr.bf16.gmra.mrb[0].mxu0 %v978
      %v1017 = vpop.f32.mrb[0].mxu0
      %v1018 = vadd.f32 0.0, %v1017
      %v1019 = vpop.f32.mrb[0].mxu0
      %v1020 = vpop.f32.mrb[0].mxu0
      %v1021 = vpop.f32.mrb[0].mxu0
      %1022 = vdwg.mxu0
      %1023 = vrot.lane.b32.xlu0 %v177, 40
      %v1024 = vpop.permute.xlu0 %1023
      %v1026 = vsel %vm251, %v974, 0
      %v1029 = vand.u32 %v1024, %v258
      %1031 = vmatprep.subr.bf16.mxu0 0
      %1032 = vmatpush1.bf16.msra.mxu0 %v1029
      %1033 = vmatprep.subr.bf16.mxu0 0
      %1034 = vmatpush1.bf16.msra.mxu0 0
      %1035 = vmatprep.subr.bf16.mxu0 0
      %1036 = vmatpush1.bf16.msra.mxu0 0
      %1037 = vmatprep.subr.bf16.mxu0 0
      %1038 = vmatpush1.bf16.msra.mxu0 0
      %1039 = vmatprep.subr.bf16.mxu0 0
      %1040 = vmatpush1.bf16.msra.mxu0 0
      %1041 = vmatprep.subr.bf16.mxu0 0
      %1042 = vmatpush1.bf16.msra.mxu0 0
      %1043 = vmatprep.subr.bf16.mxu0 0
      %1044 = vmatpush1.bf16.msra.mxu0 0
      %1045 = vmatprep.subr.bf16.mxu0 0
      %1046 = vmatpush1.bf16.msra.mxu0 0
      %1047 = vmatprep.subr.bf16.mxu0 0
      %1048 = vmatpush1.bf16.msra.mxu0 0
      %1049 = vmatprep.subr.bf16.mxu0 0
      %1050 = vmatpush1.bf16.msra.mxu0 0
      %1051 = vmatprep.subr.bf16.mxu0 0
      %1052 = vmatpush1.bf16.msra.mxu0 0
      %1053 = vmatprep.subr.bf16.mxu0 0
      %1054 = vmatpush1.bf16.msra.mxu0 0
      %1055 = vmatprep.subr.bf16.mxu0 0
      %1056 = vmatpush1.bf16.msra.mxu0 0
      %1057 = vmatprep.subr.bf16.mxu0 0
      %1058 = vmatpush1.bf16.msra.mxu0 0
      %1059 = vmatprep.subr.bf16.mxu0 0
      %1060 = vmatpush1.bf16.msra.mxu0 0
      %1061 = vmatprep.subr.bf16.mxu0 0
      %1062 = vmatpush1.bf16.msra.mxu0 0
      %1063 = vmatprep.mubr.bf16.mxu0 0
      %1064 = vmatmul.mubr.bf16.gmra.mrb[0].mxu0 %v1026
      %v1065 = vpop.f32.mrb[0].mxu0
      %v1066 = vadd.f32 0.0, %v1065
      %v1067 = vpop.f32.mrb[0].mxu0
      %v1068 = vpop.f32.mrb[0].mxu0
      %v1069 = vpop.f32.mrb[0].mxu0
      %1070 = vdwg.mxu0
      %v1071 = vrcp.pop %v969
      %v1072 = vmul.f32 %v1018, %v1071
      %v1073 = vrcp.pop %v972
      %v1074 = vmul.f32 %v1066, %v1073
      %v1075 = vpack.c.bf16 %v1072, %v1072
      %v1076 = vpack.c.bf16 %v1074, %v1074
      %v1079 = vunpack.c.l.b16 %v1075
      %v1080 = vunpack.c.l.b16 %v1076
      %v1081 = vpack.c.b16 %v1079, %v1079
      %v1082 = vpack.c.b16 %v1080, %v1080
      %1083 = vrot.lane.b32.xlu0 %v1081, 24
      %v1084 = vpop.permute.xlu0 %1083
      %1085 = vrot.lane.b32.xlu0 %v1082, 24
      %v1086 = vpop.permute.xlu0 %1085
      %vm1089 = vcmask 256192
      %vm1090 = vmand %vm1089, %vm357
      %v1091 = vld [vmem:[%s118] sm:$0x7]
      %v1092 = vsel %vm1090, %v1084, %v1091
      %1093 = vst [vmem:[%s118] sm:$0x7] %v1092
      %v1094 = vld [vmem:[%s118 + $0x4] sm:$0x7]
      %v1095 = vsel %vm1090, %v1086, %v1094
      %1096 = vst [vmem:[%s118 + $0x4] sm:$0x7] %v1095
      %s1097 = smul.u32 2, %s12
      %p1098 = scmp.lt.s32.totalorder %s1097, 3
      %s1099 = scalar_select %p1098, %s1097, 3
      %s1100 = smul.addr %s1099, 4
      %s1101 = scalar_lea.vmem %s1, %s1100
      // Predicated region
      $region25: #{timesformer_forward.26} parent=23 // pred_check
        %p1102 = pneg %p56
      $region26: #{timesformer_forward.26} parent=23 // pred_check_branch
        %1104 = sbr.rel (%p1102) target = $region28
      $region27: #{timesformer_forward.26} parent=23 // pred_region
        %s1105 = smul.u32 2, %s12
      $region28: #{timesformer_forward.26} parent=23 // pred_fallthru
        _
    $region24: #{timesformer_forward.26} parent=5 // pred_fallthru
      _
    %p1106 = scmp.le.s32.totalorder 2, %s7
    // Predicated region
    $region29: #{timesformer_forward.26} parent=5 // pred_check
      %p1107 = pneg %p1106
    $region30: #{timesformer_forward.26} parent=5 // pred_check_branch
      %1109 = sbr.rel (%p1107) target = $region32
    $region31: #{timesformer_forward.26} parent=5 // pred_region
      %s1110 = ssub.s32 %s7, 2
      // Predicated region
      $region33: #{timesformer_forward.26} parent=31 // pred_check
        %p1111 = pneg %p62
      $region34: #{timesformer_forward.26} parent=31 // pred_check_branch
        %1113 = sbr.rel (%p1111) target = $region36
      $region35: #{timesformer_forward.26} parent=31 // pred_region
        %s1114 = smul.u32 2, %s13
        %p1115 = scmp.lt.s32.totalorder %s1114, 3
        %s1116 = scalar_select %p1115, %s1114, 3
        %s1117 = smul.addr %s1116, 4
        %s1118 = scalar_lea.vmem %s1, %s1117
      $region36: #{timesformer_forward.26} parent=31 // pred_fallthru
        _
    $region32: #{timesformer_forward.26} parent=5 // pred_fallthru
      _
  $region6: #{timesformer_forward.26} parent=0 // loop_footer
    %s11 = sadd.s32 1, %s7
  $region7: #{timesformer_forward.26} parent=0 // loop_footer_branch
    %6 = sbr.rel target = $region3
  $region8: #{timesformer_forward.26} parent=0 // loop_exit
    _

// kernel: timesformer_forward.22
$region0: #{timesformer_forward.22}
  #allocation0 [shape = 'u32[]', space=smem, size = 0x4, offset = 0x4, fixed_abs, tag = 'smem constant byte address 0x4 - core index']
  #allocation1 [shape = 'u32[144,128]{1,0:T(1,128)}', space=vmem, size = 0x12000, scoped, tag = 'internal scratch']
  %s0 = inlined_call_operand.vmem [shape: bf16[8,2,96], index: 0, kind: input, shape index: {}]
  %s1 = inlined_call_operand.vmem [shape: bf16[8,2,32], index: 1, kind: output, shape index: {}]
  %s2 = sld [smem:[#allocation0]]
  $region37: #{timesformer_forward.22} parent=0
    _
  %s4 = ssub.s32 1, %s2
  %s5 = scalar_select 0, %s4, %s2
  loop: start=0, step=1, limit=4
  $region2: #{timesformer_forward.22} parent=0 // loop_pre_header
    _
  $region3: #{timesformer_forward.22} parent=0 // loop_header
    %s7 = sphi 0, %s11
    %p8 = scmp.ge.s32.totalorder %s7, 4
    %s17 = sphi 0, %s19
    %s20 = sphi 0, %s17
    %s21 = sphi 0, %s20
    %s37 = sphi 0, %s21
    %s43 = sphi 0, %s45
    %s46 = sphi 0, %s43
    %s47 = sphi 0, %s46
    %s63 = sphi 0, %s47
  $region4: #{timesformer_forward.22} parent=0 // loop_header_branch
    %10 = sbr.rel (%p8) target = $region8
  $region5: #{timesformer_forward.22} parent=0 // loop_body
    %s12 = ssub.s32 %s7, 1
    %s13 = ssub.s32 %s7, 2
    %s14 = sadd.s32 %s7, 1
    %s15 = ssub.s32 %s7, %s14
    %p16 = scmp.eq.s32.totalorder %s15, 0
    %s18 = sadd.s32 %s17, 1
    %s19 = scalar_select %p16, %s17, %s18
    %p22 = pneg %p16
    %p23 = scmp.eq.s32.totalorder %s7, 1
    %p24 = por %p22, %p23
    %p25 = scmp.ne.s32.totalorder %s17, %s20
    %p26 = scmp.eq.s32.totalorder %s7, 0
    %p27 = por %p25, %p26
    %p28 = scmp.ne.s32.totalorder %s17, %s20
    %p29 = scmp.eq.s32.totalorder %s12, 1
    %p30 = por %p28, %p29
    %p31 = scmp.ne.s32.totalorder %s20, %s21
    %p32 = scmp.eq.s32.totalorder %s12, 0
    %p33 = por %p31, %p32
    %p34 = scmp.ne.s32.totalorder %s20, %s21
    %p35 = scmp.eq.s32.totalorder %s13, 1
    %p36 = por %p34, %p35
    %p38 = scmp.ne.s32.totalorder %s21, %s37
    %p39 = scmp.eq.s32.totalorder %s13, 0
    %p40 = por %p38, %p39
    %s41 = ssub.s32 %s7, %s14
    %p42 = scmp.eq.s32.totalorder %s41, 0
    %s44 = sadd.s32 %s43, 1
    %s45 = scalar_select %p42, %s43, %s44
    %p48 = pneg %p42
    %p49 = scmp.eq.s32.totalorder %s7, 1
    %p50 = por %p48, %p49
    %p51 = scmp.ne.s32.totalorder %s43, %s46
    %p52 = scmp.eq.s32.totalorder %s7, 0
    %p53 = por %p51, %p52
    %p54 = scmp.ne.s32.totalorder %s43, %s46
    %p55 = scmp.eq.s32.totalorder %s12, 1
    %p56 = por %p54, %p55
    %p57 = scmp.ne.s32.totalorder %s46, %s47
    %p58 = scmp.eq.s32.totalorder %s12, 0
    %p59 = por %p57, %p58
    %p60 = scmp.ne.s32.totalorder %s46, %s47
    %p61 = scmp.eq.s32.totalorder %s13, 1
    %p62 = por %p60, %p61
    %p64 = scmp.ne.s32.totalorder %s47, %s63
    %p65 = scmp.eq.s32.totalorder %s13, 0
    %p66 = por %p64, %p65
    %p67 = scmp.le.s32.totalorder 1, %s7
    %p68 = scmp.lt.s32.totalorder %s7, 3
    %p69 = pnand %p67, %p68
    %p70 = pneg %p69
    // Predicated region
    $region9: #{timesformer_forward.22} parent=5 // pred_check
      _
    $region10: #{timesformer_forward.22} parent=5 // pred_check_branch
      %72 = sbr.rel (%p69) target = $region12
    $region11: #{timesformer_forward.22} parent=5 // pred_region
      %s73 = ssub.s32 %s7, 1
    $region12: #{timesformer_forward.22} parent=5 // pred_fallthru
      _
    %p74 = scmp.lt.s32.totalorder %s7, 2
    // Predicated region
    $region13: #{timesformer_forward.22} parent=5 // pred_check
      %p75 = pneg %p74
    $region14: #{timesformer_forward.22} parent=5 // pred_check_branch
      %77 = sbr.rel (%p75) target = $region16
    $region15: #{timesformer_forward.22} parent=5 // pred_region
      // Predicated region
      $region17: #{timesformer_forward.22} parent=15 // pred_check
        %p78 = pneg %p27
      $region18: #{timesformer_forward.22} parent=15 // pred_check_branch
        %80 = sbr.rel (%p78) target = $region20
      $region19: #{timesformer_forward.22} parent=15 // pred_region
        %s81 = smul.u32 4, %s7
        %p82 = scmp.lt.s32.totalorder %s81, 7
        %s83 = scalar_select %p82, %s81, 7
        %s84 = scalar_lea.vmem %s0, %s83
        %s85 = smul.u32 4, %s7
      $region20: #{timesformer_forward.22} parent=15 // pred_fallthru
        _
    $region16: #{timesformer_forward.22} parent=5 // pred_fallthru
      _
    %p86 = scmp.le.s32.totalorder 1, %s7
    %p87 = scmp.lt.s32.totalorder %s7, 3
    %p88 = pnand %p86, %p87
    %p89 = pneg %p88
    // Predicated region
    $region21: #{timesformer_forward.22} parent=5 // pred_check
      _
    $region22: #{timesformer_forward.22} parent=5 // pred_check_branch
      %91 = sbr.rel (%p88) target = $region24
    $region23: #{timesformer_forward.22} parent=5 // pred_region
      %s92 = ssub.s32 %s7, 1
      %s93 = smul.u32 4, %s12
      %p94 = scmp.lt.s32.totalorder %s93, 7
      %s95 = scalar_select %p94, %s93, 7
      %s96 = scalar_lea.vmem %s0, %s95
      %p97 = pneg %p33
      %p98 = pneg %p30
      %p99 = pneg %p59
      %p100 = pneg %p56
      %s101 = smul.u32 4, %s12
      %p102 = scmp.lt.s32.totalorder %s101, 7
      %s103 = scalar_select %p102, %s101, 7
      %s104 = scalar_lea.vmem %s1, %s103
      %s105 = smul.u32 4, %s12
      %p106 = scmp.lt.s32.totalorder %s105, 7
      %s107 = scalar_select %p106, %s105, 7
      %s108 = scalar_lea.vmem %s0, %s107
      %s109 = smul.u32 4, %s12
      %s110 = smul.u32 4, %s12
      %p111 = scmp.lt.s32.totalorder %s110, 7
      %s112 = scalar_select %p111, %s110, 7
      %s113 = scalar_lea.vmem %s1, %s112
      %s114 = smul.u32 4, %s12
      %v116 = vld [vmem:[%s108] sm:$0x1]
      %v117 = vld [vmem:[%s108 + $0x1] sm:$0x1]
      %v118 = vld [vmem:[%s108 + $0x2] sm:$0x1]
      %v119 = vld [vmem:[%s108 + $0x3] sm:$0x1]
      %v122 = vunpack.c.l.s4 1966171168
      %v123 = vunpack.c.0.s8 %v122
      %v124 = vlaneseq
      %v125 = vshrl.u32 %v124, 7
      %v126 = vsub.s32 %v123, %v125
      %v127 = vrot.slane %v116, %v126
      %v129 = vunpack.c.l.s4 1966171168
      %v130 = vunpack.c.0.s8 %v129
      %v131 = vlaneseq
      %v132 = vshrl.u32 %v131, 7
      %v133 = vsub.s32 %v130, %v132
      %v134 = vrot.slane %v127, %v133
      %135 = vrot.lane.b32.xlu0 %v134, 96
      %v136 = vpop.permute.xlu0 %135
      %vm137 = vcmask 64512
      %v139 = vsel %vm137, %v116, 0
      %v142 = vsel %vm137, %v136, 0
      %144 = vmatprep.subr.bf16.mxu0 0
      %145 = vmatpush1.bf16.xpose.msra.mxu0 %v142
      %146 = vmatprep.subr.bf16.mxu0 0
      %147 = vmatpush1.bf16.xpose.msra.mxu0 0
      %148 = vmatprep.subr.bf16.mxu0 0
      %149 = vmatpush1.bf16.xpose.msra.mxu0 0
      %150 = vmatprep.subr.bf16.mxu0 0
      %151 = vmatpush1.bf16.xpose.msra.mxu0 0
      %152 = vmatprep.subr.bf16.mxu0 0
      %153 = vmatpush1.bf16.xpose.msra.mxu0 0
      %154 = vmatprep.subr.bf16.mxu0 0
      %155 = vmatpush1.bf16.xpose.msra.mxu0 0
      %156 = vmatprep.subr.bf16.mxu0 0
      %157 = vmatpush1.bf16.xpose.msra.mxu0 0
      %158 = vmatprep.subr.bf16.mxu0 0
      %159 = vmatpush1.bf16.xpose.msra.mxu0 0
      %160 = vmatprep.subr.bf16.mxu0 0
      %161 = vmatpush1.bf16.xpose.msra.mxu0 0
      %162 = vmatprep.subr.bf16.mxu0 0
      %163 = vmatpush1.bf16.xpose.msra.mxu0 0
      %164 = vmatprep.subr.bf16.mxu0 0
      %165 = vmatpush1.bf16.xpose.msra.mxu0 0
      %166 = vmatprep.subr.bf16.mxu0 0
      %167 = vmatpush1.bf16.xpose.msra.mxu0 0
      %168 = vmatprep.subr.bf16.mxu0 0
      %169 = vmatpush1.bf16.xpose.msra.mxu0 0
      %170 = vmatprep.subr.bf16.mxu0 0
      %171 = vmatpush1.bf16.xpose.msra.mxu0 0
      %172 = vmatprep.subr.bf16.mxu0 0
      %173 = vmatpush1.bf16.xpose.msra.mxu0 0
      %174 = vmatprep.subr.bf16.mxu0 0
      %175 = vmatpush1.bf16.xpose.msra.mxu0 0
      %176 = vmatprep.mubr.bf16.mxu0 0
      %177 = vmatmul.mubr.bf16.gmra.mrb[0].mxu0 %v139
      %v178 = vpop.f32.mrb[0].mxu0
      %v179 = vadd.f32 0.0, %v178
      %v180 = vpop.f32.mrb[0].mxu0
      %v181 = vpop.f32.mrb[0].mxu0
      %v182 = vpop.f32.mrb[0].mxu0
      %183 = vdwg.mxu0
      %v186 = vunpack.c.l.s4 1966171168
      %v187 = vunpack.c.0.s8 %v186
      %v188 = vlaneseq
      %v189 = vshrl.u32 %v188, 7
      %v190 = vsub.s32 %v187, %v189
      %v191 = vrot.slane %v117, %v190
      %v193 = vunpack.c.l.s4 1966171168
      %v194 = vunpack.c.0.s8 %v193
      %v195 = vlaneseq
      %v196 = vshrl.u32 %v195, 7
      %v197 = vsub.s32 %v194, %v196
      %v198 = vrot.slane %v191, %v197
      %199 = vrot.lane.b32.xlu0 %v198, 96
      %v200 = vpop.permute.xlu0 %199
      %v202 = vsel %vm137, %v117, 0
      %v205 = vsel %vm137, %v200, 0
      %207 = vmatprep.subr.bf16.mxu0 0
      %208 = vmatpush1.bf16.xpose.msra.mxu0 %v205
      %209 = vmatprep.subr.bf16.mxu0 0
      %210 = vmatpush1.bf16.xpose.msra.mxu0 0
      %211 = vmatprep.subr.bf16.mxu0 0
      %212 = vmatpush1.bf16.xpose.msra.mxu0 0
      %213 = vmatprep.subr.bf16.mxu0 0
      %214 = vmatpush1.bf16.xpose.msra.mxu0 0
      %215 = vmatprep.subr.bf16.mxu0 0
      %216 = vmatpush1.bf16.xpose.msra.mxu0 0
      %217 = vmatprep.subr.bf16.mxu0 0
      %218 = vmatpush1.bf16.xpose.msra.mxu0 0
      %219 = vmatprep.subr.bf16.mxu0 0
      %220 = vmatpush1.bf16.xpose.msra.mxu0 0
      %221 = vmatprep.subr.bf16.mxu0 0
      %222 = vmatpush1.bf16.xpose.msra.mxu0 0
      %223 = vmatprep.subr.bf16.mxu0 0
      %224 = vmatpush1.bf16.xpose.msra.mxu0 0
      %225 = vmatprep.subr.bf16.mxu0 0
      %226 = vmatpush1.bf16.xpose.msra.mxu0 0
      %227 = vmatprep.subr.bf16.mxu0 0
      %228 = vmatpush1.bf16.xpose.msra.mxu0 0
      %229 = vmatprep.subr.bf16.mxu0 0
      %230 = vmatpush1.bf16.xpose.msra.mxu0 0
      %231 = vmatprep.subr.bf16.mxu0 0
      %232 = vmatpush1.bf16.xpose.msra.mxu0 0
      %233 = vmatprep.subr.bf16.mxu0 0
      %234 = vmatpush1.bf16.xpose.msra.mxu0 0
      %235 = vmatprep.subr.bf16.mxu0 0
      %236 = vmatpush1.bf16.xpose.msra.mxu0 0
      %237 = vmatprep.subr.bf16.mxu0 0
      %238 = vmatpush1.bf16.xpose.msra.mxu0 0
      %239 = vmatprep.mubr.bf16.mxu0 0
      %240 = vmatmul.mubr.bf16.gmra.mrb[0].mxu0 %v202
      %v241 = vpop.f32.mrb[0].mxu0
      %v242 = vadd.f32 0.0, %v241
      %v243 = vpop.f32.mrb[0].mxu0
      %v244 = vpop.f32.mrb[0].mxu0
      %v245 = vpop.f32.mrb[0].mxu0
      %246 = vdwg.mxu0
      %v249 = vunpack.c.l.s4 1966171168
      %v250 = vunpack.c.0.s8 %v249
      %v251 = vlaneseq
      %v252 = vshrl.u32 %v251, 7
      %v253 = vsub.s32 %v250, %v252
      %v254 = vrot.slane %v118, %v253
      %v256 = vunpack.c.l.s4 1966171168
      %v257 = vunpack.c.0.s8 %v256
      %v258 = vlaneseq
      %v259 = vshrl.u32 %v258, 7
      %v260 = vsub.s32 %v257, %v259
      %v261 = vrot.slane %v254, %v260
      %262 = vrot.lane.b32.xlu0 %v261, 96
      %v263 = vpop.permute.xlu0 %262
      %v265 = vsel %vm137, %v118, 0
      %v268 = vsel %vm137, %v263, 0
      %270 = vmatprep.subr.bf16.mxu0 0
      %271 = vmatpush1.bf16.xpose.msra.mxu0 %v268
      %272 = vmatprep.subr.bf16.mxu0 0
      %273 = vmatpush1.bf16.xpose.msra.mxu0 0
      %274 = vmatprep.subr.bf16.mxu0 0
      %275 = vmatpush1.bf16.xpose.msra.mxu0 0
      %276 = vmatprep.subr.bf16.mxu0 0
      %277 = vmatpush1.bf16.xpose.msra.mxu0 0
      %278 = vmatprep.subr.bf16.mxu0 0
      %279 = vmatpush1.bf16.xpose.msra.mxu0 0
      %280 = vmatprep.subr.bf16.mxu0 0
      %281 = vmatpush1.bf16.xpose.msra.mxu0 0
      %282 = vmatprep.subr.bf16.mxu0 0
      %283 = vmatpush1.bf16.xpose.msra.mxu0 0
      %284 = vmatprep.subr.bf16.mxu0 0
      %285 = vmatpush1.bf16.xpose.msra.mxu0 0
      %286 = vmatprep.subr.bf16.mxu0 0
      %287 = vmatpush1.bf16.xpose.msra.mxu0 0
      %288 = vmatprep.subr.bf16.mxu0 0
      %289 = vmatpush1.bf16.xpose.msra.mxu0 0
      %290 = vmatprep.subr.bf16.mxu0 0
      %291 = vmatpush1.bf16.xpose.msra.mxu0 0
      %292 = vmatprep.subr.bf16.mxu0 0
      %293 = vmatpush1.bf16.xpose.msra.mxu0 0
      %294 = vmatprep.subr.bf16.mxu0 0
      %295 = vmatpush1.bf16.xpose.msra.mxu0 0
      %296 = vmatprep.subr.bf16.mxu0 0
      %297 = vmatpush1.bf16.xpose.msra.mxu0 0
      %298 = vmatprep.subr.bf16.mxu0 0
      %299 = vmatpush1.bf16.xpose.msra.mxu0 0
      %300 = vmatprep.subr.bf16.mxu0 0
      %301 = vmatpush1.bf16.xpose.msra.mxu0 0
      %302 = vmatprep.mubr.bf16.mxu0 0
      %303 = vmatmul.mubr.bf16.gmra.mrb[0].mxu0 %v265
      %v304 = vpop.f32.mrb[0].mxu0
      %v305 = vadd.f32 0.0, %v304
      %v306 = vpop.f32.mrb[0].mxu0
      %v307 = vpop.f32.mrb[0].mxu0
      %v308 = vpop.f32.mrb[0].mxu0
      %309 = vdwg.mxu0
      %v312 = vunpack.c.l.s4 1966171168
      %v313 = vunpack.c.0.s8 %v312
      %v314 = vlaneseq
      %v315 = vshrl.u32 %v314, 7
      %v316 = vsub.s32 %v313, %v315
      %v317 = vrot.slane %v119, %v316
      %v319 = vunpack.c.l.s4 1966171168
      %v320 = vunpack.c.0.s8 %v319
      %v321 = vlaneseq
      %v322 = vshrl.u32 %v321, 7
      %v323 = vsub.s32 %v320, %v322
      %v324 = vrot.slane %v317, %v323
      %325 = vrot.lane.b32.xlu0 %v324, 96
      %v326 = vpop.permute.xlu0 %325
      %v328 = vsel %vm137, %v119, 0
      %v331 = vsel %vm137, %v326, 0
      %333 = vmatprep.subr.bf16.mxu0 0
      %334 = vmatpush1.bf16.xpose.msra.mxu0 %v331
      %335 = vmatprep.subr.bf16.mxu0 0
      %336 = vmatpush1.bf16.xpose.msra.mxu0 0
      %337 = vmatprep.subr.bf16.mxu0 0
      %338 = vmatpush1.bf16.xpose.msra.mxu0 0
      %339 = vmatprep.subr.bf16.mxu0 0
      %340 = vmatpush1.bf16.xpose.msra.mxu0 0
      %341 = vmatprep.subr.bf16.mxu0 0
      %342 = vmatpush1.bf16.xpose.msra.mxu0 0
      %343 = vmatprep.subr.bf16.mxu0 0
      %344 = vmatpush1.bf16.xpose.msra.mxu0 0
      %345 = vmatprep.subr.bf16.mxu0 0
      %346 = vmatpush1.bf16.xpose.msra.mxu0 0
      %347 = vmatprep.subr.bf16.mxu0 0
      %348 = vmatpush1.bf16.xpose.msra.mxu0 0
      %349 = vmatprep.subr.bf16.mxu0 0
      %350 = vmatpush1.bf16.xpose.msra.mxu0 0
      %351 = vmatprep.subr.bf16.mxu0 0
      %352 = vmatpush1.bf16.xpose.msra.mxu0 0
      %353 = vmatprep.subr.bf16.mxu0 0
      %354 = vmatpush1.bf16.xpose.msra.mxu0 0
      %355 = vmatprep.subr.bf16.mxu0 0
      %356 = vmatpush1.bf16.xpose.msra.mxu0 0
      %357 = vmatprep.subr.bf16.mxu0 0
      %358 = vmatpush1.bf16.xpose.msra.mxu0 0
      %359 = vmatprep.subr.bf16.mxu0 0
      %360 = vmatpush1.bf16.xpose.msra.mxu0 0
      %361 = vmatprep.subr.bf16.mxu0 0
      %362 = vmatpush1.bf16.xpose.msra.mxu0 0
      %363 = vmatprep.subr.bf16.mxu0 0
      %364 = vmatpush1.bf16.xpose.msra.mxu0 0
      %365 = vmatprep.mubr.bf16.mxu0 0
      %366 = vmatmul.mubr.bf16.gmra.mrb[0].mxu0 %v328
      %v367 = vpop.f32.mrb[0].mxu0
      %v368 = vadd.f32 0.0, %v367
      %v369 = vpop.f32.mrb[0].mxu0
      %v370 = vpop.f32.mrb[0].mxu0
      %v371 = vpop.f32.mrb[0].mxu0
      %372 = vdwg.mxu0
      %v373 = vmul.f32 %v179, 0.35355338
      %v374 = vmul.f32 %v242, 0.35355338
      %v375 = vmul.f32 %v305, 0.35355338
      %v376 = vmul.f32 %v368, 0.35355338
      %vm377 = vcmask 9216
      %v378 = vsel %vm377, %v373, -inf
      %379 = vmax.xlane.f32.xlu0 %v378
      %v380 = vpop.xlane.xlu0 %379
      %v381 = vsel %vm377, %v374, -inf
      %382 = vmax.xlane.f32.xlu0 %v381
      %v383 = vpop.xlane.xlu0 %382
      %v384 = vsel %vm377, %v375, -inf
      %385 = vmax.xlane.f32.xlu0 %v384
      %v386 = vpop.xlane.xlu0 %385
      %v387 = vsel %vm377, %v376, -inf
      %388 = vmax.xlane.f32.xlu0 %v387
      %v389 = vpop.xlane.xlu0 %388
      %v390 = vsub.f32 %v373, %v380
      %v391 = vsub.f32 %v374, %v383
      %v392 = vsub.f32 %v375, %v386
      %v393 = vsub.f32 %v376, %v389
      %v394 = vmul.f32 %v390, 1.442695
      %v395 = vpow.pop %v394
      %v396 = vmul.f32 %v391, 1.442695
      %v397 = vpow.pop %v396
      %v398 = vmul.f32 %v392, 1.442695
      %v399 = vpow.pop %v398
      %v400 = vmul.f32 %v393, 1.442695
      %v401 = vpow.pop %v400
      %v402 = vsel %vm377, %v395, 0.0
      %403 = vadd.xlane.f32.xlu0 %v402
      %v404 = vpop.xlane.xlu0 %403
      %v405 = vsel %vm377, %v397, 0.0
      %406 = vadd.xlane.f32.xlu0 %v405
      %v407 = vpop.xlane.xlu0 %406
      %v408 = vsel %vm377, %v399, 0.0
      %409 = vadd.xlane.f32.xlu0 %v408
      %v410 = vpop.xlane.xlu0 %409
      %v411 = vsel %vm377, %v401, 0.0
      %412 = vadd.xlane.f32.xlu0 %v411
      %v413 = vpop.xlane.xlu0 %412
      %v414 = vpack.c.bf16 %v395, %v395
      %v415 = vpack.c.bf16 %v397, %v397
      %v416 = vpack.c.bf16 %v399, %v399
      %v417 = vpack.c.bf16 %v401, %v401
      %418 = vrot.lane.b32.xlu0 %v134, 64
      %v419 = vpop.permute.xlu0 %418
      %vm420 = vcmask 15360
      %v422 = vsel %vm420, %v414, 0
      %vm424 = vcmask 1040384
      %v426 = vsel %vm424, %v419, 0
      %428 = vmatprep.subr.bf16.mxu0 0
      %429 = vmatpush1.bf16.msra.mxu0 %v426
      %430 = vmatprep.subr.bf16.mxu0 0
      %431 = vmatpush1.bf16.msra.mxu0 0
      %432 = vmatprep.subr.bf16.mxu0 0
      %433 = vmatpush1.bf16.msra.mxu0 0
      %434 = vmatprep.subr.bf16.mxu0 0
      %435 = vmatpush1.bf16.msra.mxu0 0
      %436 = vmatprep.subr.bf16.mxu0 0
      %437 = vmatpush1.bf16.msra.mxu0 0
      %438 = vmatprep.subr.bf16.mxu0 0
      %439 = vmatpush1.bf16.msra.mxu0 0
      %440 = vmatprep.subr.bf16.mxu0 0
      %441 = vmatpush1.bf16.msra.mxu0 0
      %442 = vmatprep.subr.bf16.mxu0 0
      %443 = vmatpush1.bf16.msra.mxu0 0
      %444 = vmatprep.subr.bf16.mxu0 0
      %445 = vmatpush1.bf16.msra.mxu0 0
      %446 = vmatprep.subr.bf16.mxu0 0
      %447 = vmatpush1.bf16.msra.mxu0 0
      %448 = vmatprep.subr.bf16.mxu0 0
      %449 = vmatpush1.bf16.msra.mxu0 0
      %450 = vmatprep.subr.bf16.mxu0 0
      %451 = vmatpush1.bf16.msra.mxu0 0
      %452 = vmatprep.subr.bf16.mxu0 0
      %453 = vmatpush1.bf16.msra.mxu0 0
      %454 = vmatprep.subr.bf16.mxu0 0
      %455 = vmatpush1.bf16.msra.mxu0 0
      %456 = vmatprep.subr.bf16.mxu0 0
      %457 = vmatpush1.bf16.msra.mxu0 0
      %458 = vmatprep.subr.bf16.mxu0 0
      %459 = vmatpush1.bf16.msra.mxu0 0
      %460 = vmatprep.mubr.bf16.mxu0 0
      %461 = vmatmul.mubr.bf16.gmra.mrb[0].mxu0 %v422
      %v462 = vpop.f32.mrb[0].mxu0
      %v463 = vadd.f32 0.0, %v462
      %v464 = vpop.f32.mrb[0].mxu0
      %v465 = vpop.f32.mrb[0].mxu0
      %v466 = vpop.f32.mrb[0].mxu0
      %467 = vdwg.mxu0
      %468 = vrot.lane.b32.xlu0 %v198, 64
      %v469 = vpop.permute.xlu0 %468
      %v471 = vsel %vm420, %v415, 0
      %v474 = vsel %vm424, %v469, 0
      %476 = vmatprep.subr.bf16.mxu0 0
      %477 = vmatpush1.bf16.msra.mxu0 %v474
      %478 = vmatprep.subr.bf16.mxu0 0
      %479 = vmatpush1.bf16.msra.mxu0 0
      %480 = vmatprep.subr.bf16.mxu0 0
      %481 = vmatpush1.bf16.msra.mxu0 0
      %482 = vmatprep.subr.bf16.mxu0 0
      %483 = vmatpush1.bf16.msra.mxu0 0
      %484 = vmatprep.subr.bf16.mxu0 0
      %485 = vmatpush1.bf16.msra.mxu0 0
      %486 = vmatprep.subr.bf16.mxu0 0
      %487 = vmatpush1.bf16.msra.mxu0 0
      %488 = vmatprep.subr.bf16.mxu0 0
      %489 = vmatpush1.bf16.msra.mxu0 0
      %490 = vmatprep.subr.bf16.mxu0 0
      %491 = vmatpush1.bf16.msra.mxu0 0
      %492 = vmatprep.subr.bf16.mxu0 0
      %493 = vmatpush1.bf16.msra.mxu0 0
      %494 = vmatprep.subr.bf16.mxu0 0
      %495 = vmatpush1.bf16.msra.mxu0 0
      %496 = vmatprep.subr.bf16.mxu0 0
      %497 = vmatpush1.bf16.msra.mxu0 0
      %498 = vmatprep.subr.bf16.mxu0 0
      %499 = vmatpush1.bf16.msra.mxu0 0
      %500 = vmatprep.subr.bf16.mxu0 0
      %501 = vmatpush1.bf16.msra.mxu0 0
      %502 = vmatprep.subr.bf16.mxu0 0
      %503 = vmatpush1.bf16.msra.mxu0 0
      %504 = vmatprep.subr.bf16.mxu0 0
      %505 = vmatpush1.bf16.msra.mxu0 0
      %506 = vmatprep.subr.bf16.mxu0 0
      %507 = vmatpush1.bf16.msra.mxu0 0
      %508 = vmatprep.mubr.bf16.mxu0 0
      %509 = vmatmul.mubr.bf16.gmra.mrb[0].mxu0 %v471
      %v510 = vpop.f32.mrb[0].mxu0
      %v511 = vadd.f32 0.0, %v510
      %v512 = vpop.f32.mrb[0].mxu0
      %v513 = vpop.f32.mrb[0].mxu0
      %v514 = vpop.f32.mrb[0].mxu0
      %515 = vdwg.mxu0
      %516 = vrot.lane.b32.xlu0 %v261, 64
      %v517 = vpop.permute.xlu0 %516
      %v519 = vsel %vm420, %v416, 0
      %v522 = vsel %vm424, %v517, 0
      %524 = vmatprep.subr.bf16.mxu0 0
      %525 = vmatpush1.bf16.msra.mxu0 %v522
      %526 = vmatprep.subr.bf16.mxu0 0
      %527 = vmatpush1.bf16.msra.mxu0 0
      %528 = vmatprep.subr.bf16.mxu0 0
      %529 = vmatpush1.bf16.msra.mxu0 0
      %530 = vmatprep.subr.bf16.mxu0 0
      %531 = vmatpush1.bf16.msra.mxu0 0
      %532 = vmatprep.subr.bf16.mxu0 0
      %533 = vmatpush1.bf16.msra.mxu0 0
      %534 = vmatprep.subr.bf16.mxu0 0
      %535 = vmatpush1.bf16.msra.mxu0 0
      %536 = vmatprep.subr.bf16.mxu0 0
      %537 = vmatpush1.bf16.msra.mxu0 0
      %538 = vmatprep.subr.bf16.mxu0 0
      %539 = vmatpush1.bf16.msra.mxu0 0
      %540 = vmatprep.subr.bf16.mxu0 0
      %541 = vmatpush1.bf16.msra.mxu0 0
      %542 = vmatprep.subr.bf16.mxu0 0
      %543 = vmatpush1.bf16.msra.mxu0 0
      %544 = vmatprep.subr.bf16.mxu0 0
      %545 = vmatpush1.bf16.msra.mxu0 0
      %546 = vmatprep.subr.bf16.mxu0 0
      %547 = vmatpush1.bf16.msra.mxu0 0
      %548 = vmatprep.subr.bf16.mxu0 0
      %549 = vmatpush1.bf16.msra.mxu0 0
      %550 = vmatprep.subr.bf16.mxu0 0
      %551 = vmatpush1.bf16.msra.mxu0 0
      %552 = vmatprep.subr.bf16.mxu0 0
      %553 = vmatpush1.bf16.msra.mxu0 0
      %554 = vmatprep.subr.bf16.mxu0 0
      %555 = vmatpush1.bf16.msra.mxu0 0
      %556 = vmatprep.mubr.bf16.mxu0 0
      %557 = vmatmul.mubr.bf16.gmra.mrb[0].mxu0 %v519
      %v558 = vpop.f32.mrb[0].mxu0
      %v559 = vadd.f32 0.0, %v558
      %v560 = vpop.f32.mrb[0].mxu0
      %v561 = vpop.f32.mrb[0].mxu0
      %v562 = vpop.f32.mrb[0].mxu0
      %563 = vdwg.mxu0
      %564 = vrot.lane.b32.xlu0 %v324, 64
      %v565 = vpop.permute.xlu0 %564
      %v567 = vsel %vm420, %v417, 0
      %v570 = vsel %vm424, %v565, 0
      %572 = vmatprep.subr.bf16.mxu0 0
      %573 = vmatpush1.bf16.msra.mxu0 %v570
      %574 = vmatprep.subr.bf16.mxu0 0
      %575 = vmatpush1.bf16.msra.mxu0 0
      %576 = vmatprep.subr.bf16.mxu0 0
      %577 = vmatpush1.bf16.msra.mxu0 0
      %578 = vmatprep.subr.bf16.mxu0 0
      %579 = vmatpush1.bf16.msra.mxu0 0
      %580 = vmatprep.subr.bf16.mxu0 0
      %581 = vmatpush1.bf16.msra.mxu0 0
      %582 = vmatprep.subr.bf16.mxu0 0
      %583 = vmatpush1.bf16.msra.mxu0 0
      %584 = vmatprep.subr.bf16.mxu0 0
      %585 = vmatpush1.bf16.msra.mxu0 0
      %586 = vmatprep.subr.bf16.mxu0 0
      %587 = vmatpush1.bf16.msra.mxu0 0
      %588 = vmatprep.subr.bf16.mxu0 0
      %589 = vmatpush1.bf16.msra.mxu0 0
      %590 = vmatprep.subr.bf16.mxu0 0
      %591 = vmatpush1.bf16.msra.mxu0 0
      %592 = vmatprep.subr.bf16.mxu0 0
      %593 = vmatpush1.bf16.msra.mxu0 0
      %594 = vmatprep.subr.bf16.mxu0 0
      %595 = vmatpush1.bf16.msra.mxu0 0
      %596 = vmatprep.subr.bf16.mxu0 0
      %597 = vmatpush1.bf16.msra.mxu0 0
      %598 = vmatprep.subr.bf16.mxu0 0
      %599 = vmatpush1.bf16.msra.mxu0 0
      %600 = vmatprep.subr.bf16.mxu0 0
      %601 = vmatpush1.bf16.msra.mxu0 0
      %602 = vmatprep.subr.bf16.mxu0 0
      %603 = vmatpush1.bf16.msra.mxu0 0
      %604 = vmatprep.mubr.bf16.mxu0 0
      %605 = vmatmul.mubr.bf16.gmra.mrb[0].mxu0 %v567
      %v606 = vpop.f32.mrb[0].mxu0
      %v607 = vadd.f32 0.0, %v606
      %v608 = vpop.f32.mrb[0].mxu0
      %v609 = vpop.f32.mrb[0].mxu0
      %v610 = vpop.f32.mrb[0].mxu0
      %611 = vdwg.mxu0
      %v612 = vrcp.pop %v404
      %v613 = vmul.f32 %v463, %v612
      %v614 = vrcp.pop %v407
      %v615 = vmul.f32 %v511, %v614
      %v616 = vrcp.pop %v410
      %v617 = vmul.f32 %v559, %v616
      %v618 = vrcp.pop %v413
      %v619 = vmul.f32 %v607, %v618
      %v620 = vpack.c.bf16 %v613, %v613
      %v621 = vpack.c.bf16 %v615, %v615
      %v622 = vpack.c.bf16 %v617, %v617
      %v623 = vpack.c.bf16 %v619, %v619
      %vm624 = vcmask 57344
      %625 = vst.msk [vmem:[%s113] sm:$0x1] %vm624, %v620
      %626 = vst.msk [vmem:[%s113 + $0x1] sm:$0x1] %vm624, %v621
      %627 = vst.msk [vmem:[%s113 + $0x2] sm:$0x1] %vm624, %v622
      %628 = vst.msk [vmem:[%s113 + $0x3] sm:$0x1] %vm624, %v623
      %629 = vrot.lane.b32.xlu0 %v134, 120
      %v630 = vpop.permute.xlu0 %629
      %631 = vrot.lane.b32.xlu0 %v134, 88
      %v632 = vpop.permute.xlu0 %631
      %v634 = vsel %vm137, %v630, 0
      %v637 = vsel %vm137, %v632, 0
      %639 = vmatprep.subr.bf16.mxu0 0
      %640 = vmatpush1.bf16.xpose.msra.mxu0 %v637
      %641 = vmatprep.subr.bf16.mxu0 0
      %642 = vmatpush1.bf16.xpose.msra.mxu0 0
      %643 = vmatprep.subr.bf16.mxu0 0
      %644 = vmatpush1.bf16.xpose.msra.mxu0 0
      %645 = vmatprep.subr.bf16.mxu0 0
      %646 = vmatpush1.bf16.xpose.msra.mxu0 0
      %647 = vmatprep.subr.bf16.mxu0 0
      %648 = vmatpush1.bf16.xpose.msra.mxu0 0
      %649 = vmatprep.subr.bf16.mxu0 0
      %650 = vmatpush1.bf16.xpose.msra.mxu0 0
      %651 = vmatprep.subr.bf16.mxu0 0
      %652 = vmatpush1.bf16.xpose.msra.mxu0 0
      %653 = vmatprep.subr.bf16.mxu0 0
      %654 = vmatpush1.bf16.xpose.msra.mxu0 0
      %655 = vmatprep.subr.bf16.mxu0 0
      %656 = vmatpush1.bf16.xpose.msra.mxu0 0
      %657 = vmatprep.subr.bf16.mxu0 0
      %658 = vmatpush1.bf16.xpose.msra.mxu0 0
      %659 = vmatprep.subr.bf16.mxu0 0
      %660 = vmatpush1.bf16.xpose.msra.mxu0 0
      %661 = vmatprep.subr.bf16.mxu0 0
      %662 = vmatpush1.bf16.xpose.msra.mxu0 0
      %663 = vmatprep.subr.bf16.mxu0 0
      %664 = vmatpush1.bf16.xpose.msra.mxu0 0
      %665 = vmatprep.subr.bf16.mxu0 0
      %666 = vmatpush1.bf16.xpose.msra.mxu0 0
      %667 = vmatprep.subr.bf16.mxu0 0
      %668 = vmatpush1.bf16.xpose.msra.mxu0 0
      %669 = vmatprep.subr.bf16.mxu0 0
      %670 = vmatpush1.bf16.xpose.msra.mxu0 0
      %671 = vmatprep.mubr.bf16.mxu0 0
      %672 = vmatmul.mubr.bf16.gmra.mrb[0].mxu0 %v634
      %v673 = vpop.f32.mrb[0].mxu0
      %v674 = vadd.f32 0.0, %v673
      %v675 = vpop.f32.mrb[0].mxu0
      %v676 = vpop.f32.mrb[0].mxu0
      %v677 = vpop.f32.mrb[0].mxu0
      %678 = vdwg.mxu0
      %679 = vrot.lane.b32.xlu0 %v198, 120
      %v680 = vpop.permute.xlu0 %679
      %681 = vrot.lane.b32.xlu0 %v198, 88
      %v682 = vpop.permute.xlu0 %681
      %v684 = vsel %vm137, %v680, 0
      %v687 = vsel %vm137, %v682, 0
      %689 = vmatprep.subr.bf16.mxu0 0
      %690 = vmatpush1.bf16.xpose.msra.mxu0 %v687
      %691 = vmatprep.subr.bf16.mxu0 0
      %692 = vmatpush1.bf16.xpose.msra.mxu0 0
      %693 = vmatprep.subr.bf16.mxu0 0
      %694 = vmatpush1.bf16.xpose.msra.mxu0 0
      %695 = vmatprep.subr.bf16.mxu0 0
      %696 = vmatpush1.bf16.xpose.msra.mxu0 0
      %697 = vmatprep.subr.bf16.mxu0 0
      %698 = vmatpush1.bf16.xpose.msra.mxu0 0
      %699 = vmatprep.subr.bf16.mxu0 0
      %700 = vmatpush1.bf16.xpose.msra.mxu0 0
      %701 = vmatprep.subr.bf16.mxu0 0
      %702 = vmatpush1.bf16.xpose.msra.mxu0 0
      %703 = vmatprep.subr.bf16.mxu0 0
      %704 = vmatpush1.bf16.xpose.msra.mxu0 0
      %705 = vmatprep.subr.bf16.mxu0 0
      %706 = vmatpush1.bf16.xpose.msra.mxu0 0
      %707 = vmatprep.subr.bf16.mxu0 0
      %708 = vmatpush1.bf16.xpose.msra.mxu0 0
      %709 = vmatprep.subr.bf16.mxu0 0
      %710 = vmatpush1.bf16.xpose.msra.mxu0 0
      %711 = vmatprep.subr.bf16.mxu0 0
      %712 = vmatpush1.bf16.xpose.msra.mxu0 0
      %713 = vmatprep.subr.bf16.mxu0 0
      %714 = vmatpush1.bf16.xpose.msra.mxu0 0
      %715 = vmatprep.subr.bf16.mxu0 0
      %716 = vmatpush1.bf16.xpose.msra.mxu0 0
      %717 = vmatprep.subr.bf16.mxu0 0
      %718 = vmatpush1.bf16.xpose.msra.mxu0 0
      %719 = vmatprep.subr.bf16.mxu0 0
      %720 = vmatpush1.bf16.xpose.msra.mxu0 0
      %721 = vmatprep.mubr.bf16.mxu0 0
      %722 = vmatmul.mubr.bf16.gmra.mrb[0].mxu0 %v684
      %v723 = vpop.f32.mrb[0].mxu0
      %v724 = vadd.f32 0.0, %v723
      %v725 = vpop.f32.mrb[0].mxu0
      %v726 = vpop.f32.mrb[0].mxu0
      %v727 = vpop.f32.mrb[0].mxu0
      %728 = vdwg.mxu0
      %729 = vrot.lane.b32.xlu0 %v261, 120
      %v730 = vpop.permute.xlu0 %729
      %731 = vrot.lane.b32.xlu0 %v261, 88
      %v732 = vpop.permute.xlu0 %731
      %v734 = vsel %vm137, %v730, 0
      %v737 = vsel %vm137, %v732, 0
      %739 = vmatprep.subr.bf16.mxu0 0
      %740 = vmatpush1.bf16.xpose.msra.mxu0 %v737
      %741 = vmatprep.subr.bf16.mxu0 0
      %742 = vmatpush1.bf16.xpose.msra.mxu0 0
      %743 = vmatprep.subr.bf16.mxu0 0
      %744 = vmatpush1.bf16.xpose.msra.mxu0 0
      %745 = vmatprep.subr.bf16.mxu0 0
      %746 = vmatpush1.bf16.xpose.msra.mxu0 0
      %747 = vmatprep.subr.bf16.mxu0 0
      %748 = vmatpush1.bf16.xpose.msra.mxu0 0
      %749 = vmatprep.subr.bf16.mxu0 0
      %750 = vmatpush1.bf16.xpose.msra.mxu0 0
      %751 = vmatprep.subr.bf16.mxu0 0
      %752 = vmatpush1.bf16.xpose.msra.mxu0 0
      %753 = vmatprep.subr.bf16.mxu0 0
      %754 = vmatpush1.bf16.xpose.msra.mxu0 0
      %755 = vmatprep.subr.bf16.mxu0 0
      %756 = vmatpush1.bf16.xpose.msra.mxu0 0
      %757 = vmatprep.subr.bf16.mxu0 0
      %758 = vmatpush1.bf16.xpose.msra.mxu0 0
      %759 = vmatprep.subr.bf16.mxu0 0
      %760 = vmatpush1.bf16.xpose.msra.mxu0 0
      %761 = vmatprep.subr.bf16.mxu0 0
      %762 = vmatpush1.bf16.xpose.msra.mxu0 0
      %763 = vmatprep.subr.bf16.mxu0 0
      %764 = vmatpush1.bf16.xpose.msra.mxu0 0
      %765 = vmatprep.subr.bf16.mxu0 0
      %766 = vmatpush1.bf16.xpose.msra.mxu0 0
      %767 = vmatprep.subr.bf16.mxu0 0
      %768 = vmatpush1.bf16.xpose.msra.mxu0 0
      %769 = vmatprep.subr.bf16.mxu0 0
      %770 = vmatpush1.bf16.xpose.msra.mxu0 0
      %771 = vmatprep.mubr.bf16.mxu0 0
      %772 = vmatmul.mubr.bf16.gmra.mrb[0].mxu0 %v734
      %v773 = vpop.f32.mrb[0].mxu0
      %v774 = vadd.f32 0.0, %v773
      %v775 = vpop.f32.mrb[0].mxu0
      %v776 = vpop.f32.mrb[0].mxu0
      %v777 = vpop.f32.mrb[0].mxu0
      %778 = vdwg.mxu0
      %779 = vrot.lane.b32.xlu0 %v324, 120
      %v780 = vpop.permute.xlu0 %779
      %781 = vrot.lane.b32.xlu0 %v324, 88
      %v782 = vpop.permute.xlu0 %781
      %v784 = vsel %vm137, %v780, 0
      %v787 = vsel %vm137, %v782, 0
      %789 = vmatprep.subr.bf16.mxu0 0
      %790 = vmatpush1.bf16.xpose.msra.mxu0 %v787
      %791 = vmatprep.subr.bf16.mxu0 0
      %792 = vmatpush1.bf16.xpose.msra.mxu0 0
      %793 = vmatprep.subr.bf16.mxu0 0
      %794 = vmatpush1.bf16.xpose.msra.mxu0 0
      %795 = vmatprep.subr.bf16.mxu0 0
      %796 = vmatpush1.bf16.xpose.msra.mxu0 0
      %797 = vmatprep.subr.bf16.mxu0 0
      %798 = vmatpush1.bf16.xpose.msra.mxu0 0
      %799 = vmatprep.subr.bf16.mxu0 0
      %800 = vmatpush1.bf16.xpose.msra.mxu0 0
      %801 = vmatprep.subr.bf16.mxu0 0
      %802 = vmatpush1.bf16.xpose.msra.mxu0 0
      %803 = vmatprep.subr.bf16.mxu0 0
      %804 = vmatpush1.bf16.xpose.msra.mxu0 0
      %805 = vmatprep.subr.bf16.mxu0 0
      %806 = vmatpush1.bf16.xpose.msra.mxu0 0
      %807 = vmatprep.subr.bf16.mxu0 0
      %808 = vmatpush1.bf16.xpose.msra.mxu0 0
      %809 = vmatprep.subr.bf16.mxu0 0
      %810 = vmatpush1.bf16.xpose.msra.mxu0 0
      %811 = vmatprep.subr.bf16.mxu0 0
      %812 = vmatpush1.bf16.xpose.msra.mxu0 0
      %813 = vmatprep.subr.bf16.mxu0 0
      %814 = vmatpush1.bf16.xpose.msra.mxu0 0
      %815 = vmatprep.subr.bf16.mxu0 0
      %816 = vmatpush1.bf16.xpose.msra.mxu0 0
      %817 = vmatprep.subr.bf16.mxu0 0
      %818 = vmatpush1.bf16.xpose.msra.mxu0 0
      %819 = vmatprep.subr.bf16.mxu0 0
      %820 = vmatpush1.bf16.xpose.msra.mxu0 0
      %821 = vmatprep.mubr.bf16.mxu0 0
      %822 = vmatmul.mubr.bf16.gmra.mrb[0].mxu0 %v784
      %v823 = vpop.f32.mrb[0].mxu0
      %v824 = vadd.f32 0.0, %v823
      %v825 = vpop.f32.mrb[0].mxu0
      %v826 = vpop.f32.mrb[0].mxu0
      %v827 = vpop.f32.mrb[0].mxu0
      %828 = vdwg.mxu0
      %v829 = vmul.f32 %v674, 0.35355338
      %v830 = vmul.f32 %v724, 0.35355338
      %v831 = vmul.f32 %v774, 0.35355338
      %v832 = vmul.f32 %v824, 0.35355338
      %v833 = vsel %vm377, %v829, -inf
      %834 = vmax.xlane.f32.xlu0 %v833
      %v835 = vpop.xlane.xlu0 %834
      %v836 = vsel %vm377, %v830, -inf
      %837 = vmax.xlane.f32.xlu0 %v836
      %v838 = vpop.xlane.xlu0 %837
      %v839 = vsel %vm377, %v831, -inf
      %840 = vmax.xlane.f32.xlu0 %v839
      %v841 = vpop.xlane.xlu0 %840
      %v842 = vsel %vm377, %v832, -inf
      %843 = vmax.xlane.f32.xlu0 %v842
      %v844 = vpop.xlane.xlu0 %843
      %v845 = vsub.f32 %v829, %v835
      %v846 = vsub.f32 %v830, %v838
      %v847 = vsub.f32 %v831, %v841
      %v848 = vsub.f32 %v832, %v844
      %v849 = vmul.f32 %v845, 1.442695
      %v850 = vpow.pop %v849
      %v851 = vmul.f32 %v846, 1.442695
      %v852 = vpow.pop %v851
      %v853 = vmul.f32 %v847, 1.442695
      %v854 = vpow.pop %v853
      %v855 = vmul.f32 %v848, 1.442695
      %v856 = vpow.pop %v855
      %v857 = vsel %vm377, %v850, 0.0
      %858 = vadd.xlane.f32.xlu0 %v857
      %v859 = vpop.xlane.xlu0 %858
      %v860 = vsel %vm377, %v852, 0.0
      %861 = vadd.xlane.f32.xlu0 %v860
      %v862 = vpop.xlane.xlu0 %861
      %v863 = vsel %vm377, %v854, 0.0
      %864 = vadd.xlane.f32.xlu0 %v863
      %v865 = vpop.xlane.xlu0 %864
      %v866 = vsel %vm377, %v856, 0.0
      %867 = vadd.xlane.f32.xlu0 %v866
      %v868 = vpop.xlane.xlu0 %867
      %v869 = vpack.c.bf16 %v850, %v850
      %v870 = vpack.c.bf16 %v852, %v852
      %v871 = vpack.c.bf16 %v854, %v854
      %v872 = vpack.c.bf16 %v856, %v856
      %873 = vrot.lane.b32.xlu0 %v134, 56
      %v874 = vpop.permute.xlu0 %873
      %v876 = vsel %vm420, %v869, 0
      %v879 = vsel %vm424, %v874, 0
      %881 = vmatprep.subr.bf16.mxu0 0
      %882 = vmatpush1.bf16.msra.mxu0 %v879
      %883 = vmatprep.subr.bf16.mxu0 0
      %884 = vmatpush1.bf16.msra.mxu0 0
      %885 = vmatprep.subr.bf16.mxu0 0
      %886 = vmatpush1.bf16.msra.mxu0 0
      %887 = vmatprep.subr.bf16.mxu0 0
      %888 = vmatpush1.bf16.msra.mxu0 0
      %889 = vmatprep.subr.bf16.mxu0 0
      %890 = vmatpush1.bf16.msra.mxu0 0
      %891 = vmatprep.subr.bf16.mxu0 0
      %892 = vmatpush1.bf16.msra.mxu0 0
      %893 = vmatprep.subr.bf16.mxu0 0
      %894 = vmatpush1.bf16.msra.mxu0 0
      %895 = vmatprep.subr.bf16.mxu0 0
      %896 = vmatpush1.bf16.msra.mxu0 0
      %897 = vmatprep.subr.bf16.mxu0 0
      %898 = vmatpush1.bf16.msra.mxu0 0
      %899 = vmatprep.subr.bf16.mxu0 0
      %900 = vmatpush1.bf16.msra.mxu0 0
      %901 = vmatprep.subr.bf16.mxu0 0
      %902 = vmatpush1.bf16.msra.mxu0 0
      %903 = vmatprep.subr.bf16.mxu0 0
      %904 = vmatpush1.bf16.msra.mxu0 0
      %905 = vmatprep.subr.bf16.mxu0 0
      %906 = vmatpush1.bf16.msra.mxu0 0
      %907 = vmatprep.subr.bf16.mxu0 0
      %908 = vmatpush1.bf16.msra.mxu0 0
      %909 = vmatprep.subr.bf16.mxu0 0
      %910 = vmatpush1.bf16.msra.mxu0 0
      %911 = vmatprep.subr.bf16.mxu0 0
      %912 = vmatpush1.bf16.msra.mxu0 0
      %913 = vmatprep.mubr.bf16.mxu0 0
      %914 = vmatmul.mubr.bf16.gmra.mrb[0].mxu0 %v876
      %v915 = vpop.f32.mrb[0].mxu0
      %v916 = vadd.f32 0.0, %v915
      %v917 = vpop.f32.mrb[0].mxu0
      %v918 = vpop.f32.mrb[0].mxu0
      %v919 = vpop.f32.mrb[0].mxu0
      %920 = vdwg.mxu0
      %921 = vrot.lane.b32.xlu0 %v198, 56
      %v922 = vpop.permute.xlu0 %921
      %v924 = vsel %vm420, %v870, 0
      %v927 = vsel %vm424, %v922, 0
      %929 = vmatprep.subr.bf16.mxu0 0
      %930 = vmatpush1.bf16.msra.mxu0 %v927
      %931 = vmatprep.subr.bf16.mxu0 0
      %932 = vmatpush1.bf16.msra.mxu0 0
      %933 = vmatprep.subr.bf16.mxu0 0
      %934 = vmatpush1.bf16.msra.mxu0 0
      %935 = vmatprep.subr.bf16.mxu0 0
      %936 = vmatpush1.bf16.msra.mxu0 0
      %937 = vmatprep.subr.bf16.mxu0 0
      %938 = vmatpush1.bf16.msra.mxu0 0
      %939 = vmatprep.subr.bf16.mxu0 0
      %940 = vmatpush1.bf16.msra.mxu0 0
      %941 = vmatprep.subr.bf16.mxu0 0
      %942 = vmatpush1.bf16.msra.mxu0 0
      %943 = vmatprep.subr.bf16.mxu0 0
      %944 = vmatpush1.bf16.msra.mxu0 0
      %945 = vmatprep.subr.bf16.mxu0 0
      %946 = vmatpush1.bf16.msra.mxu0 0
      %947 = vmatprep.subr.bf16.mxu0 0
      %948 = vmatpush1.bf16.msra.mxu0 0
      %949 = vmatprep.subr.bf16.mxu0 0
      %950 = vmatpush1.bf16.msra.mxu0 0
      %951 = vmatprep.subr.bf16.mxu0 0
      %952 = vmatpush1.bf16.msra.mxu0 0
      %953 = vmatprep.subr.bf16.mxu0 0
      %954 = vmatpush1.bf16.msra.mxu0 0
      %955 = vmatprep.subr.bf16.mxu0 0
      %956 = vmatpush1.bf16.msra.mxu0 0
      %957 = vmatprep.subr.bf16.mxu0 0
      %958 = vmatpush1.bf16.msra.mxu0 0
      %959 = vmatprep.subr.bf16.mxu0 0
      %960 = vmatpush1.bf16.msra.mxu0 0
      %961 = vmatprep.mubr.bf16.mxu0 0
      %962 = vmatmul.mubr.bf16.gmra.mrb[0].mxu0 %v924
      %v963 = vpop.f32.mrb[0].mxu0
      %v964 = vadd.f32 0.0, %v963
      %v965 = vpop.f32.mrb[0].mxu0
      %v966 = vpop.f32.mrb[0].mxu0
      %v967 = vpop.f32.mrb[0].mxu0
      %968 = vdwg.mxu0
      %969 = vrot.lane.b32.xlu0 %v261, 56
      %v970 = vpop.permute.xlu0 %969
      %v972 = vsel %vm420, %v871, 0
      %v975 = vsel %vm424, %v970, 0
      %977 = vmatprep.subr.bf16.mxu0 0
      %978 = vmatpush1.bf16.msra.mxu0 %v975
      %979 = vmatprep.subr.bf16.mxu0 0
      %980 = vmatpush1.bf16.msra.mxu0 0
      %981 = vmatprep.subr.bf16.mxu0 0
      %982 = vmatpush1.bf16.msra.mxu0 0
      %983 = vmatprep.subr.bf16.mxu0 0
      %984 = vmatpush1.bf16.msra.mxu0 0
      %985 = vmatprep.subr.bf16.mxu0 0
      %986 = vmatpush1.bf16.msra.mxu0 0
      %987 = vmatprep.subr.bf16.mxu0 0
      %988 = vmatpush1.bf16.msra.mxu0 0
      %989 = vmatprep.subr.bf16.mxu0 0
      %990 = vmatpush1.bf16.msra.mxu0 0
      %991 = vmatprep.subr.bf16.mxu0 0
      %992 = vmatpush1.bf16.msra.mxu0 0
      %993 = vmatprep.subr.bf16.mxu0 0
      %994 = vmatpush1.bf16.msra.mxu0 0
      %995 = vmatprep.subr.bf16.mxu0 0
      %996 = vmatpush1.bf16.msra.mxu0 0
      %997 = vmatprep.subr.bf16.mxu0 0
      %998 = vmatpush1.bf16.msra.mxu0 0
      %999 = vmatprep.subr.bf16.mxu0 0
      %1000 = vmatpush1.bf16.msra.mxu0 0
      %1001 = vmatprep.subr.bf16.mxu0 0
      %1002 = vmatpush1.bf16.msra.mxu0 0
      %1003 = vmatprep.subr.bf16.mxu0 0
      %1004 = vmatpush1.bf16.msra.mxu0 0
      %1005 = vmatprep.subr.bf16.mxu0 0
      %1006 = vmatpush1.bf16.msra.mxu0 0
      %1007 = vmatprep.subr.bf16.mxu0 0
      %1008 = vmatpush1.bf16.msra.mxu0 0
      %1009 = vmatprep.mubr.bf16.mxu0 0
      %1010 = vmatmul.mubr.bf16.gmra.mrb[0].mxu0 %v972
      %v1011 = vpop.f32.mrb[0].mxu0
      %v1012 = vadd.f32 0.0, %v1011
      %v1013 = vpop.f32.mrb[0].mxu0
      %v1014 = vpop.f32.mrb[0].mxu0
      %v1015 = vpop.f32.mrb[0].mxu0
      %1016 = vdwg.mxu0
      %1017 = vrot.lane.b32.xlu0 %v324, 56
      %v1018 = vpop.permute.xlu0 %1017
      %v1020 = vsel %vm420, %v872, 0
      %v1023 = vsel %vm424, %v1018, 0
      %1025 = vmatprep.subr.bf16.mxu0 0
      %1026 = vmatpush1.bf16.msra.mxu0 %v1023
      %1027 = vmatprep.subr.bf16.mxu0 0
      %1028 = vmatpush1.bf16.msra.mxu0 0
      %1029 = vmatprep.subr.bf16.mxu0 0
      %1030 = vmatpush1.bf16.msra.mxu0 0
      %1031 = vmatprep.subr.bf16.mxu0 0
      %1032 = vmatpush1.bf16.msra.mxu0 0
      %1033 = vmatprep.subr.bf16.mxu0 0
      %1034 = vmatpush1.bf16.msra.mxu0 0
      %1035 = vmatprep.subr.bf16.mxu0 0
      %1036 = vmatpush1.bf16.msra.mxu0 0
      %1037 = vmatprep.subr.bf16.mxu0 0
      %1038 = vmatpush1.bf16.msra.mxu0 0
      %1039 = vmatprep.subr.bf16.mxu0 0
      %1040 = vmatpush1.bf16.msra.mxu0 0
      %1041 = vmatprep.subr.bf16.mxu0 0
      %1042 = vmatpush1.bf16.msra.mxu0 0
      %1043 = vmatprep.subr.bf16.mxu0 0
      %1044 = vmatpush1.bf16.msra.mxu0 0
      %1045 = vmatprep.subr.bf16.mxu0 0
      %1046 = vmatpush1.bf16.msra.mxu0 0
      %1047 = vmatprep.subr.bf16.mxu0 0
      %1048 = vmatpush1.bf16.msra.mxu0 0
      %1049 = vmatprep.subr.bf16.mxu0 0
      %1050 = vmatpush1.bf16.msra.mxu0 0
      %1051 = vmatprep.subr.bf16.mxu0 0
      %1052 = vmatpush1.bf16.msra.mxu0 0
      %1053 = vmatprep.subr.bf16.mxu0 0
      %1054 = vmatpush1.bf16.msra.mxu0 0
      %1055 = vmatprep.subr.bf16.mxu0 0
      %1056 = vmatpush1.bf16.msra.mxu0 0
      %1057 = vmatprep.mubr.bf16.mxu0 0
      %1058 = vmatmul.mubr.bf16.gmra.mrb[0].mxu0 %v1020
      %v1059 = vpop.f32.mrb[0].mxu0
      %v1060 = vadd.f32 0.0, %v1059
      %v1061 = vpop.f32.mrb[0].mxu0
      %v1062 = vpop.f32.mrb[0].mxu0
      %v1063 = vpop.f32.mrb[0].mxu0
      %1064 = vdwg.mxu0
      %v1065 = vrcp.pop %v859
      %v1066 = vmul.f32 %v916, %v1065
      %v1067 = vrcp.pop %v862
      %v1068 = vmul.f32 %v964, %v1067
      %v1069 = vrcp.pop %v865
      %v1070 = vmul.f32 %v1012, %v1069
      %v1071 = vrcp.pop %v868
      %v1072 = vmul.f32 %v1060, %v1071
      %v1073 = vpack.c.bf16 %v1066, %v1066
      %v1074 = vpack.c.bf16 %v1068, %v1068
      %v1075 = vpack.c.bf16 %v1070, %v1070
      %v1076 = vpack.c.bf16 %v1072, %v1072
      %v1082 = vunpack.c.l.s4 1966171168
      %v1083 = vunpack.c.0.s8 %v1082
      %v1084 = vlaneseq
      %v1085 = vshrl.u32 %v1084, 7
      %v1086 = vsub.s32 %v1083, %v1085
      %v1087 = vrot.slane %v1073, %v1086
      %v1089 = vunpack.c.l.s4 1966171168
      %v1090 = vunpack.c.0.s8 %v1089
      %v1091 = vlaneseq
      %v1092 = vshrl.u32 %v1091, 7
      %v1093 = vsub.s32 %v1090, %v1092
      %v1094 = vrot.slane %v1087, %v1093
      %v1096 = vunpack.c.l.s4 1966171168
      %v1097 = vunpack.c.0.s8 %v1096
      %v1098 = vlaneseq
      %v1099 = vshrl.u32 %v1098, 7
      %v1100 = vsub.s32 %v1097, %v1099
      %v1101 = vrot.slane %v1074, %v1100
      %v1103 = vunpack.c.l.s4 1966171168
      %v1104 = vunpack.c.0.s8 %v1103
      %v1105 = vlaneseq
      %v1106 = vshrl.u32 %v1105, 7
      %v1107 = vsub.s32 %v1104, %v1106
      %v1108 = vrot.slane %v1101, %v1107
      %v1110 = vunpack.c.l.s4 1966171168
      %v1111 = vunpack.c.0.s8 %v1110
      %v1112 = vlaneseq
      %v1113 = vshrl.u32 %v1112, 7
      %v1114 = vsub.s32 %v1111, %v1113
      %v1115 = vrot.slane %v1075, %v1114
      %v1117 = vunpack.c.l.s4 1966171168
      %v1118 = vunpack.c.0.s8 %v1117
      %v1119 = vlaneseq
      %v1120 = vshrl.u32 %v1119, 7
      %v1121 = vsub.s32 %v1118, %v1120
      %v1122 = vrot.slane %v1115, %v1121
      %v1124 = vunpack.c.l.s4 1966171168
      %v1125 = vunpack.c.0.s8 %v1124
      %v1126 = vlaneseq
      %v1127 = vshrl.u32 %v1126, 7
      %v1128 = vsub.s32 %v1125, %v1127
      %v1129 = vrot.slane %v1076, %v1128
      %v1131 = vunpack.c.l.s4 1966171168
      %v1132 = vunpack.c.0.s8 %v1131
      %v1133 = vlaneseq
      %v1134 = vshrl.u32 %v1133, 7
      %v1135 = vsub.s32 %v1132, %v1134
      %v1136 = vrot.slane %v1129, %v1135
      %1137 = vrot.lane.b32.xlu0 %v1094, 8
      %v1138 = vpop.permute.xlu0 %1137
      %1139 = vrot.lane.b32.xlu0 %v1108, 8
      %v1140 = vpop.permute.xlu0 %1139
      %1141 = vrot.lane.b32.xlu0 %v1122, 8
      %v1142 = vpop.permute.xlu0 %1141
      %1143 = vrot.lane.b32.xlu0 %v1136, 8
      %v1144 = vpop.permute.xlu0 %1143
      %vm1149 = vcmask 122944
      %1150 = vst.msk [vmem:[%s113] sm:$0x1] %vm1149, %v1138
      %1151 = vst.msk [vmem:[%s113 + $0x1] sm:$0x1] %vm1149, %v1140
      %1152 = vst.msk [vmem:[%s113 + $0x2] sm:$0x1] %vm1149, %v1142
      %1153 = vst.msk [vmem:[%s113 + $0x3] sm:$0x1] %vm1149, %v1144
      %1154 = vrot.lane.b32.xlu0 %v134, 112
      %v1155 = vpop.permute.xlu0 %1154
      %1156 = vrot.lane.b32.xlu0 %v134, 80
      %v1157 = vpop.permute.xlu0 %1156
      %v1159 = vsel %vm137, %v1155, 0
      %v1162 = vsel %vm137, %v1157, 0
      %1164 = vmatprep.subr.bf16.mxu0 0
      %1165 = vmatpush1.bf16.xpose.msra.mxu0 %v1162
      %1166 = vmatprep.subr.bf16.mxu0 0
      %1167 = vmatpush1.bf16.xpose.msra.mxu0 0
      %1168 = vmatprep.subr.bf16.mxu0 0
      %1169 = vmatpush1.bf16.xpose.msra.mxu0 0
      %1170 = vmatprep.subr.bf16.mxu0 0
      %1171 = vmatpush1.bf16.xpose.msra.mxu0 0
      %1172 = vmatprep.subr.bf16.mxu0 0
      %1173 = vmatpush1.bf16.xpose.msra.mxu0 0
      %1174 = vmatprep.subr.bf16.mxu0 0
      %1175 = vmatpush1.bf16.xpose.msra.mxu0 0
      %1176 = vmatprep.subr.bf16.mxu0 0
      %1177 = vmatpush1.bf16.xpose.msra.mxu0 0
      %1178 = vmatprep.subr.bf16.mxu0 0
      %1179 = vmatpush1.bf16.xpose.msra.mxu0 0
      %1180 = vmatprep.subr.bf16.mxu0 0
      %1181 = vmatpush1.bf16.xpose.msra.mxu0 0
      %1182 = vmatprep.subr.bf16.mxu0 0
      %1183 = vmatpush1.bf16.xpose.msra.mxu0 0
      %1184 = vmatprep.subr.bf16.mxu0 0
      %1185 = vmatpush1.bf16.xpose.msra.mxu0 0
      %1186 = vmatprep.subr.bf16.mxu0 0
      %1187 = vmatpush1.bf16.xpose.msra.mxu0 0
      %1188 = vmatprep.subr.bf16.mxu0 0
      %1189 = vmatpush1.bf16.xpose.msra.mxu0 0
      %1190 = vmatprep.subr.bf16.mxu0 0
      %1191 = vmatpush1.bf16.xpose.msra.mxu0 0
      %1192 = vmatprep.subr.bf16.mxu0 0
      %1193 = vmatpush1.bf16.xpose.msra.mxu0 0
      %1194 = vmatprep.subr.bf16.mxu0 0
      %1195 = vmatpush1.bf16.xpose.msra.mxu0 0
      %1196 = vmatprep.mubr.bf16.mxu0 0
      %1197 = vmatmul.mubr.bf16.gmra.mrb[0].mxu0 %v1159
      %v1198 = vpop.f32.mrb[0].mxu0
      %v1199 = vadd.f32 0.0, %v1198
      %v1200 = vpop.f32.mrb[0].mxu0
      %v1201 = vpop.f32.mrb[0].mxu0
      %v1202 = vpop.f32.mrb[0].mxu0
      %1203 = vdwg.mxu0
      %1204 = vrot.lane.b32.xlu0 %v198, 112
      %v1205 = vpop.permute.xlu0 %1204
      %1206 = vrot.lane.b32.xlu0 %v198, 80
      %v1207 = vpop.permute.xlu0 %1206
      %v1209 = vsel %vm137, %v1205, 0
      %v1212 = vsel %vm137, %v1207, 0
      %1214 = vmatprep.subr.bf16.mxu0 0
      %1215 = vmatpush1.bf16.xpose.msra.mxu0 %v1212
      %1216 = vmatprep.subr.bf16.mxu0 0
      %1217 = vmatpush1.bf16.xpose.msra.mxu0 0
      %1218 = vmatprep.subr.bf16.mxu0 0
      %1219 = vmatpush1.bf16.xpose.msra.mxu0 0
      %1220 = vmatprep.subr.bf16.mxu0 0
      %1221 = vmatpush1.bf16.xpose.msra.mxu0 0
      %1222 = vmatprep.subr.bf16.mxu0 0
      %1223 = vmatpush1.bf16.xpose.msra.mxu0 0
      %1224 = vmatprep.subr.bf16.mxu0 0
      %1225 = vmatpush1.bf16.xpose.msra.mxu0 0
      %1226 = vmatprep.subr.bf16.mxu0 0
      %1227 = vmatpush1.bf16.xpose.msra.mxu0 0
      %1228 = vmatprep.subr.bf16.mxu0 0
      %1229 = vmatpush1.bf16.xpose.msra.mxu0 0
      %1230 = vmatprep.subr.bf16.mxu0 0
      %1231 = vmatpush1.bf16.xpose.msra.mxu0 0
      %1232 = vmatprep.subr.bf16.mxu0 0
      %1233 = vmatpush1.bf16.xpose.msra.mxu0 0
      %1234 = vmatprep.subr.bf16.mxu0 0
      %1235 = vmatpush1.bf16.xpose.msra.mxu0 0
      %1236 = vmatprep.subr.bf16.mxu0 0
      %1237 = vmatpush1.bf16.xpose.msra.mxu0 0
      %1238 = vmatprep.subr.bf16.mxu0 0
      %1239 = vmatpush1.bf16.xpose.msra.mxu0 0
      %1240 = vmatprep.subr.bf16.mxu0 0
      %1241 = vmatpush1.bf16.xpose.msra.mxu0 0
      %1242 = vmatprep.subr.bf16.mxu0 0
      %1243 = vmatpush1.bf16.xpose.msra.mxu0 0
      %1244 = vmatprep.subr.bf16.mxu0 0
      %1245 = vmatpush1.bf16.xpose.msra.mxu0 0
      %1246 = vmatprep.mubr.bf16.mxu0 0
      %1247 = vmatmul.mubr.bf16.gmra.mrb[0].mxu0 %v1209
      %v1248 = vpop.f32.mrb[0].mxu0
      %v1249 = vadd.f32 0.0, %v1248
      %v1250 = vpop.f32.mrb[0].mxu0
      %v1251 = vpop.f32.mrb[0].mxu0
      %v1252 = vpop.f32.mrb[0].mxu0
      %1253 = vdwg.mxu0
      %1254 = vrot.lane.b32.xlu0 %v261, 112
      %v1255 = vpop.permute.xlu0 %1254
      %1256 = vrot.lane.b32.xlu0 %v261, 80
      %v1257 = vpop.permute.xlu0 %1256
      %v1259 = vsel %vm137, %v1255, 0
      %v1262 = vsel %vm137, %v1257, 0
      %1264 = vmatprep.subr.bf16.mxu0 0
      %1265 = vmatpush1.bf16.xpose.msra.mxu0 %v1262
      %1266 = vmatprep.subr.bf16.mxu0 0
      %1267 = vmatpush1.bf16.xpose.msra.mxu0 0
      %1268 = vmatprep.subr.bf16.mxu0 0
      %1269 = vmatpush1.bf16.xpose.msra.mxu0 0
      %1270 = vmatprep.subr.bf16.mxu0 0
      %1271 = vmatpush1.bf16.xpose.msra.mxu0 0
      %1272 = vmatprep.subr.bf16.mxu0 0
      %1273 = vmatpush1.bf16.xpose.msra.mxu0 0
      %1274 = vmatprep.subr.bf16.mxu0 0
      %1275 = vmatpush1.bf16.xpose.msra.mxu0 0
      %1276 = vmatprep.subr.bf16.mxu0 0
      %1277 = vmatpush1.bf16.xpose.msra.mxu0 0
      %1278 = vmatprep.subr.bf16.mxu0 0
      %1279 = vmatpush1.bf16.xpose.msra.mxu0 0
      %1280 = vmatprep.subr.bf16.mxu0 0
      %1281 = vmatpush1.bf16.xpose.msra.mxu0 0
      %1282 = vmatprep.subr.bf16.mxu0 0
      %1283 = vmatpush1.bf16.xpose.msra.mxu0 0
      %1284 = vmatprep.subr.bf16.mxu0 0
      %1285 = vmatpush1.bf16.xpose.msra.mxu0 0
      %1286 = vmatprep.subr.bf16.mxu0 0
      %1287 = vmatpush1.bf16.xpose.msra.mxu0 0
      %1288 = vmatprep.subr.bf16.mxu0 0
      %1289 = vmatpush1.bf16.xpose.msra.mxu0 0
      %1290 = vmatprep.subr.bf16.mxu0 0
      %1291 = vmatpush1.bf16.xpose.msra.mxu0 0
      %1292 = vmatprep.subr.bf16.mxu0 0
      %1293 = vmatpush1.bf16.xpose.msra.mxu0 0
      %1294 = vmatprep.subr.bf16.mxu0 0
      %1295 = vmatpush1.bf16.xpose.msra.mxu0 0
      %1296 = vmatprep.mubr.bf16.mxu0 0
      %1297 = vmatmul.mubr.bf16.gmra.mrb[0].mxu0 %v1259
      %v1298 = vpop.f32.mrb[0].mxu0
      %v1299 = vadd.f32 0.0, %v1298
      %v1300 = vpop.f32.mrb[0].mxu0
      %v1301 = vpop.f32.mrb[0].mxu0
      %v1302 = vpop.f32.mrb[0].mxu0
      %1303 = vdwg.mxu0
      %1304 = vrot.lane.b32.xlu0 %v324, 112
      %v1305 = vpop.permute.xlu0 %1304
      %1306 = vrot.lane.b32.xlu0 %v324, 80
      %v1307 = vpop.permute.xlu0 %1306
      %v1309 = vsel %vm137, %v1305, 0
      %v1312 = vsel %vm137, %v1307, 0
      %1314 = vmatprep.subr.bf16.mxu0 0
      %1315 = vmatpush1.bf16.xpose.msra.mxu0 %v1312
      %1316 = vmatprep.subr.bf16.mxu0 0
      %1317 = vmatpush1.bf16.xpose.msra.mxu0 0
      %1318 = vmatprep.subr.bf16.mxu0 0
      %1319 = vmatpush1.bf16.xpose.msra.mxu0 0
      %1320 = vmatprep.subr.bf16.mxu0 0
      %1321 = vmatpush1.bf16.xpose.msra.mxu0 0
      %1322 = vmatprep.subr.bf16.mxu0 0
      %1323 = vmatpush1.bf16.xpose.msra.mxu0 0
      %1324 = vmatprep.subr.bf16.mxu0 0
      %1325 = vmatpush1.bf16.xpose.msra.mxu0 0
      %1326 = vmatprep.subr.bf16.mxu0 0
      %1327 = vmatpush1.bf16.xpose.msra.mxu0 0
      %1328 = vmatprep.subr.bf16.mxu0 0
      %1329 = vmatpush1.bf16.xpose.msra.mxu0 0
      %1330 = vmatprep.subr.bf16.mxu0 0
      %1331 = vmatpush1.bf16.xpose.msra.mxu0 0
      %1332 = vmatprep.subr.bf16.mxu0 0
      %1333 = vmatpush1.bf16.xpose.msra.mxu0 0
      %1334 = vmatprep.subr.bf16.mxu0 0
      %1335 = vmatpush1.bf16.xpose.msra.mxu0 0
      %1336 = vmatprep.subr.bf16.mxu0 0
      %1337 = vmatpush1.bf16.xpose.msra.mxu0 0
      %1338 = vmatprep.subr.bf16.mxu0 0
      %1339 = vmatpush1.bf16.xpose.msra.mxu0 0
      %1340 = vmatprep.subr.bf16.mxu0 0
      %1341 = vmatpush1.bf16.xpose.msra.mxu0 0
      %1342 = vmatprep.subr.bf16.mxu0 0
      %1343 = vmatpush1.bf16.xpose.msra.mxu0 0
      %1344 = vmatprep.subr.bf16.mxu0 0
      %1345 = vmatpush1.bf16.xpose.msra.mxu0 0
      %1346 = vmatprep.mubr.bf16.mxu0 0
      %1347 = vmatmul.mubr.bf16.gmra.mrb[0].mxu0 %v1309
      %v1348 = vpop.f32.mrb[0].mxu0
      %v1349 = vadd.f32 0.0, %v1348
      %v1350 = vpop.f32.mrb[0].mxu0
      %v1351 = vpop.f32.mrb[0].mxu0
      %v1352 = vpop.f32.mrb[0].mxu0
      %1353 = vdwg.mxu0
      %v1354 = vmul.f32 %v1199, 0.35355338
      %v1355 = vmul.f32 %v1249, 0.35355338
      %v1356 = vmul.f32 %v1299, 0.35355338
      %v1357 = vmul.f32 %v1349, 0.35355338
      %v1358 = vsel %vm377, %v1354, -inf
      %1359 = vmax.xlane.f32.xlu0 %v1358
      %v1360 = vpop.xlane.xlu0 %1359
      %v1361 = vsel %vm377, %v1355, -inf
      %1362 = vmax.xlane.f32.xlu0 %v1361
      %v1363 = vpop.xlane.xlu0 %1362
      %v1364 = vsel %vm377, %v1356, -inf
      %1365 = vmax.xlane.f32.xlu0 %v1364
      %v1366 = vpop.xlane.xlu0 %1365
      %v1367 = vsel %vm377, %v1357, -inf
      %1368 = vmax.xlane.f32.xlu0 %v1367
      %v1369 = vpop.xlane.xlu0 %1368
      %v1370 = vsub.f32 %v1354, %v1360
      %v1371 = vsub.f32 %v1355, %v1363
      %v1372 = vsub.f32 %v1356, %v1366
      %v1373 = vsub.f32 %v1357, %v1369
      %v1374 = vmul.f32 %v1370, 1.442695
      %v1375 = vpow.pop %v1374
      %v1376 = vmul.f32 %v1371, 1.442695
      %v1377 = vpow.pop %v1376
      %v1378 = vmul.f32 %v1372, 1.442695
      %v1379 = vpow.pop %v1378
      %v1380 = vmul.f32 %v1373, 1.442695
      %v1381 = vpow.pop %v1380
      %v1382 = vsel %vm377, %v1375, 0.0
      %1383 = vadd.xlane.f32.xlu0 %v1382
      %v1384 = vpop.xlane.xlu0 %1383
      %v1385 = vsel %vm377, %v1377, 0.0
      %1386 = vadd.xlane.f32.xlu0 %v1385
      %v1387 = vpop.xlane.xlu0 %1386
      %v1388 = vsel %vm377, %v1379, 0.0
      %1389 = vadd.xlane.f32.xlu0 %v1388
      %v1390 = vpop.xlane.xlu0 %1389
      %v1391 = vsel %vm377, %v1381, 0.0
      %1392 = vadd.xlane.f32.xlu0 %v1391
      %v1393 = vpop.xlane.xlu0 %1392
      %v1394 = vpack.c.bf16 %v1375, %v1375
      %v1395 = vpack.c.bf16 %v1377, %v1377
      %v1396 = vpack.c.bf16 %v1379, %v1379
      %v1397 = vpack.c.bf16 %v1381, %v1381
      %1398 = vrot.lane.b32.xlu0 %v134, 48
      %v1399 = vpop.permute.xlu0 %1398
      %v1401 = vsel %vm420, %v1394, 0
      %v1404 = vsel %vm424, %v1399, 0
      %1406 = vmatprep.subr.bf16.mxu0 0
      %1407 = vmatpush1.bf16.msra.mxu0 %v1404
      %1408 = vmatprep.subr.bf16.mxu0 0
      %1409 = vmatpush1.bf16.msra.mxu0 0
      %1410 = vmatprep.subr.bf16.mxu0 0
      %1411 = vmatpush1.bf16.msra.mxu0 0
      %1412 = vmatprep.subr.bf16.mxu0 0
      %1413 = vmatpush1.bf16.msra.mxu0 0
      %1414 = vmatprep.subr.bf16.mxu0 0
      %1415 = vmatpush1.bf16.msra.mxu0 0
      %1416 = vmatprep.subr.bf16.mxu0 0
      %1417 = vmatpush1.bf16.msra.mxu0 0
      %1418 = vmatprep.subr.bf16.mxu0 0
      %1419 = vmatpush1.bf16.msra.mxu0 0
      %1420 = vmatprep.subr.bf16.mxu0 0
      %1421 = vmatpush1.bf16.msra.mxu0 0
      %1422 = vmatprep.subr.bf16.mxu0 0
      %1423 = vmatpush1.bf16.msra.mxu0 0
      %1424 = vmatprep.subr.bf16.mxu0 0
      %1425 = vmatpush1.bf16.msra.mxu0 0
      %1426 = vmatprep.subr.bf16.mxu0 0
      %1427 = vmatpush1.bf16.msra.mxu0 0
      %1428 = vmatprep.subr.bf16.mxu0 0
      %1429 = vmatpush1.bf16.msra.mxu0 0
      %1430 = vmatprep.subr.bf16.mxu0 0
      %1431 = vmatpush1.bf16.msra.mxu0 0
      %1432 = vmatprep.subr.bf16.mxu0 0
      %1433 = vmatpush1.bf16.msra.mxu0 0
      %1434 = vmatprep.subr.bf16.mxu0 0
      %1435 = vmatpush1.bf16.msra.mxu0 0
      %1436 = vmatprep.subr.bf16.mxu0 0
      %1437 = vmatpush1.bf16.msra.mxu0 0
      %1438 = vmatprep.mubr.bf16.mxu0 0
      %1439 = vmatmul.mubr.bf16.gmra.mrb[0].mxu0 %v1401
      %v1440 = vpop.f32.mrb[0].mxu0
      %v1441 = vadd.f32 0.0, %v1440
      %v1442 = vpop.f32.mrb[0].mxu0
      %v1443 = vpop.f32.mrb[0].mxu0
      %v1444 = vpop.f32.mrb[0].mxu0
      %1445 = vdwg.mxu0
      %1446 = vrot.lane.b32.xlu0 %v198, 48
      %v1447 = vpop.permute.xlu0 %1446
      %v1449 = vsel %vm420, %v1395, 0
      %v1452 = vsel %vm424, %v1447, 0
      %1454 = vmatprep.subr.bf16.mxu0 0
      %1455 = vmatpush1.bf16.msra.mxu0 %v1452
      %1456 = vmatprep.subr.bf16.mxu0 0
      %1457 = vmatpush1.bf16.msra.mxu0 0
      %1458 = vmatprep.subr.bf16.mxu0 0
      %1459 = vmatpush1.bf16.msra.mxu0 0
      %1460 = vmatprep.subr.bf16.mxu0 0
      %1461 = vmatpush1.bf16.msra.mxu0 0
      %1462 = vmatprep.subr.bf16.mxu0 0
      %1463 = vmatpush1.bf16.msra.mxu0 0
      %1464 = vmatprep.subr.bf16.mxu0 0
      %1465 = vmatpush1.bf16.msra.mxu0 0
      %1466 = vmatprep.subr.bf16.mxu0 0
      %1467 = vmatpush1.bf16.msra.mxu0 0
      %1468 = vmatprep.subr.bf16.mxu0 0
      %1469 = vmatpush1.bf16.msra.mxu0 0
      %1470 = vmatprep.subr.bf16.mxu0 0
      %1471 = vmatpush1.bf16.msra.mxu0 0
      %1472 = vmatprep.subr.bf16.mxu0 0
      %1473 = vmatpush1.bf16.msra.mxu0 0
      %1474 = vmatprep.subr.bf16.mxu0 0
      %1475 = vmatpush1.bf16.msra.mxu0 0
      %1476 = vmatprep.subr.bf16.mxu0 0
      %1477 = vmatpush1.bf16.msra.mxu0 0
      %1478 = vmatprep.subr.bf16.mxu0 0
      %1479 = vmatpush1.bf16.msra.mxu0 0
      %1480 = vmatprep.subr.bf16.mxu0 0
      %1481 = vmatpush1.bf16.msra.mxu0 0
      %1482 = vmatprep.subr.bf16.mxu0 0
      %1483 = vmatpush1.bf16.msra.mxu0 0
      %1484 = vmatprep.subr.bf16.mxu0 0
      %1485 = vmatpush1.bf16.msra.mxu0 0
      %1486 = vmatprep.mubr.bf16.mxu0 0
      %1487 = vmatmul.mubr.bf16.gmra.mrb[0].mxu0 %v1449
      %v1488 = vpop.f32.mrb[0].mxu0
      %v1489 = vadd.f32 0.0, %v1488
      %v1490 = vpop.f32.mrb[0].mxu0
      %v1491 = vpop.f32.mrb[0].mxu0
      %v1492 = vpop.f32.mrb[0].mxu0
      %1493 = vdwg.mxu0
      %1494 = vrot.lane.b32.xlu0 %v261, 48
      %v1495 = vpop.permute.xlu0 %1494
      %v1497 = vsel %vm420, %v1396, 0
      %v1500 = vsel %vm424, %v1495, 0
      %1502 = vmatprep.subr.bf16.mxu0 0
      %1503 = vmatpush1.bf16.msra.mxu0 %v1500
      %1504 = vmatprep.subr.bf16.mxu0 0
      %1505 = vmatpush1.bf16.msra.mxu0 0
      %1506 = vmatprep.subr.bf16.mxu0 0
      %1507 = vmatpush1.bf16.msra.mxu0 0
      %1508 = vmatprep.subr.bf16.mxu0 0
      %1509 = vmatpush1.bf16.msra.mxu0 0
      %1510 = vmatprep.subr.bf16.mxu0 0
      %1511 = vmatpush1.bf16.msra.mxu0 0
      %1512 = vmatprep.subr.bf16.mxu0 0
      %1513 = vmatpush1.bf16.msra.mxu0 0
      %1514 = vmatprep.subr.bf16.mxu0 0
      %1515 = vmatpush1.bf16.msra.mxu0 0
      %1516 = vmatprep.subr.bf16.mxu0 0
      %1517 = vmatpush1.bf16.msra.mxu0 0
      %1518 = vmatprep.subr.bf16.mxu0 0
      %1519 = vmatpush1.bf16.msra.mxu0 0
      %1520 = vmatprep.subr.bf16.mxu0 0
      %1521 = vmatpush1.bf16.msra.mxu0 0
      %1522 = vmatprep.subr.bf16.mxu0 0
      %1523 = vmatpush1.bf16.msra.mxu0 0
      %1524 = vmatprep.subr.bf16.mxu0 0
      %1525 = vmatpush1.bf16.msra.mxu0 0
      %1526 = vmatprep.subr.bf16.mxu0 0
      %1527 = vmatpush1.bf16.msra.mxu0 0
      %1528 = vmatprep.subr.bf16.mxu0 0
      %1529 = vmatpush1.bf16.msra.mxu0 0
      %1530 = vmatprep.subr.bf16.mxu0 0
      %1531 = vmatpush1.bf16.msra.mxu0 0
      %1532 = vmatprep.subr.bf16.mxu0 0
      %1533 = vmatpush1.bf16.msra.mxu0 0
      %1534 = vmatprep.mubr.bf16.mxu0 0
      %1535 = vmatmul.mubr.bf16.gmra.mrb[0].mxu0 %v1497
      %v1536 = vpop.f32.mrb[0].mxu0
      %v1537 = vadd.f32 0.0, %v1536
      %v1538 = vpop.f32.mrb[0].mxu0
      %v1539 = vpop.f32.mrb[0].mxu0
      %v1540 = vpop.f32.mrb[0].mxu0
      %1541 = vdwg.mxu0
      %1542 = vrot.lane.b32.xlu0 %v324, 48
      %v1543 = vpop.permute.xlu0 %1542
      %v1545 = vsel %vm420, %v1397, 0
      %v1548 = vsel %vm424, %v1543, 0
      %1550 = vmatprep.subr.bf16.mxu0 0
      %1551 = vmatpush1.bf16.msra.mxu0 %v1548
      %1552 = vmatprep.subr.bf16.mxu0 0
      %1553 = vmatpush1.bf16.msra.mxu0 0
      %1554 = vmatprep.subr.bf16.mxu0 0
      %1555 = vmatpush1.bf16.msra.mxu0 0
      %1556 = vmatprep.subr.bf16.mxu0 0
      %1557 = vmatpush1.bf16.msra.mxu0 0
      %1558 = vmatprep.subr.bf16.mxu0 0
      %1559 = vmatpush1.bf16.msra.mxu0 0
      %1560 = vmatprep.subr.bf16.mxu0 0
      %1561 = vmatpush1.bf16.msra.mxu0 0
      %1562 = vmatprep.subr.bf16.mxu0 0
      %1563 = vmatpush1.bf16.msra.mxu0 0
      %1564 = vmatprep.subr.bf16.mxu0 0
      %1565 = vmatpush1.bf16.msra.mxu0 0
      %1566 = vmatprep.subr.bf16.mxu0 0
      %1567 = vmatpush1.bf16.msra.mxu0 0
      %1568 = vmatprep.subr.bf16.mxu0 0
      %1569 = vmatpush1.bf16.msra.mxu0 0
      %1570 = vmatprep.subr.bf16.mxu0 0
      %1571 = vmatpush1.bf16.msra.mxu0 0
      %1572 = vmatprep.subr.bf16.mxu0 0
      %1573 = vmatpush1.bf16.msra.mxu0 0
      %1574 = vmatprep.subr.bf16.mxu0 0
      %1575 = vmatpush1.bf16.msra.mxu0 0
      %1576 = vmatprep.subr.bf16.mxu0 0
      %1577 = vmatpush1.bf16.msra.mxu0 0
      %1578 = vmatprep.subr.bf16.mxu0 0
      %1579 = vmatpush1.bf16.msra.mxu0 0
      %1580 = vmatprep.subr.bf16.mxu0 0
      %1581 = vmatpush1.bf16.msra.mxu0 0
      %1582 = vmatprep.mubr.bf16.mxu0 0
      %1583 = vmatmul.mubr.bf16.gmra.mrb[0].mxu0 %v1545
      %v1584 = vpop.f32.mrb[0].mxu0
      %v1585 = vadd.f32 0.0, %v1584
      %v1586 = vpop.f32.mrb[0].mxu0
      %v1587 = vpop.f32.mrb[0].mxu0
      %v1588 = vpop.f32.mrb[0].mxu0
      %1589 = vdwg.mxu0
      %v1590 = vrcp.pop %v1384
      %v1591 = vmul.f32 %v1441, %v1590
      %v1592 = vrcp.pop %v1387
      %v1593 = vmul.f32 %v1489, %v1592
      %v1594 = vrcp.pop %v1390
      %v1595 = vmul.f32 %v1537, %v1594
      %v1596 = vrcp.pop %v1393
      %v1597 = vmul.f32 %v1585, %v1596
      %v1598 = vpack.c.bf16 %v1591, %v1591
      %v1599 = vpack.c.bf16 %v1593, %v1593
      %v1600 = vpack.c.bf16 %v1595, %v1595
      %v1601 = vpack.c.bf16 %v1597, %v1597
      %v1607 = vunpack.c.l.s4 1966171168
      %v1608 = vunpack.c.0.s8 %v1607
      %v1609 = vlaneseq
      %v1610 = vshrl.u32 %v1609, 7
      %v1611 = vsub.s32 %v1608, %v1610
      %v1612 = vrot.slane %v1598, %v1611
      %v1614 = vunpack.c.l.s4 1966171168
      %v1615 = vunpack.c.0.s8 %v1614
      %v1616 = vlaneseq
      %v1617 = vshrl.u32 %v1616, 7
      %v1618 = vsub.s32 %v1615, %v1617
      %v1619 = vrot.slane %v1612, %v1618
      %v1621 = vunpack.c.l.s4 1966171168
      %v1622 = vunpack.c.0.s8 %v1621
      %v1623 = vlaneseq
      %v1624 = vshrl.u32 %v1623, 7
      %v1625 = vsub.s32 %v1622, %v1624
      %v1626 = vrot.slane %v1599, %v1625
      %v1628 = vunpack.c.l.s4 1966171168
      %v1629 = vunpack.c.0.s8 %v1628
      %v1630 = vlaneseq
      %v1631 = vshrl.u32 %v1630, 7
      %v1632 = vsub.s32 %v1629, %v1631
      %v1633 = vrot.slane %v1626, %v1632
      %v1635 = vunpack.c.l.s4 1966171168
      %v1636 = vunpack.c.0.s8 %v1635
      %v1637 = vlaneseq
      %v1638 = vshrl.u32 %v1637, 7
      %v1639 = vsub.s32 %v1636, %v1638
      %v1640 = vrot.slane %v1600, %v1639
      %v1642 = vunpack.c.l.s4 1966171168
      %v1643 = vunpack.c.0.s8 %v1642
      %v1644 = vlaneseq
      %v1645 = vshrl.u32 %v1644, 7
      %v1646 = vsub.s32 %v1643, %v1645
      %v1647 = vrot.slane %v1640, %v1646
      %v1649 = vunpack.c.l.s4 1966171168
      %v1650 = vunpack.c.0.s8 %v1649
      %v1651 = vlaneseq
      %v1652 = vshrl.u32 %v1651, 7
      %v1653 = vsub.s32 %v1650, %v1652
      %v1654 = vrot.slane %v1601, %v1653
      %v1656 = vunpack.c.l.s4 1966171168
      %v1657 = vunpack.c.0.s8 %v1656
      %v1658 = vlaneseq
      %v1659 = vshrl.u32 %v1658, 7
      %v1660 = vsub.s32 %v1657, %v1659
      %v1661 = vrot.slane %v1654, %v1660
      %1662 = vrot.lane.b32.xlu0 %v1619, 16
      %v1663 = vpop.permute.xlu0 %1662
      %1664 = vrot.lane.b32.xlu0 %v1633, 16
      %v1665 = vpop.permute.xlu0 %1664
      %1666 = vrot.lane.b32.xlu0 %v1647, 16
      %v1667 = vpop.permute.xlu0 %1666
      %1668 = vrot.lane.b32.xlu0 %v1661, 16
      %v1669 = vpop.permute.xlu0 %1668
      %vm1674 = vcmask 188544
      %1675 = vst.msk [vmem:[%s113] sm:$0x1] %vm1674, %v1663
      %1676 = vst.msk [vmem:[%s113 + $0x1] sm:$0x1] %vm1674, %v1665
      %1677 = vst.msk [vmem:[%s113 + $0x2] sm:$0x1] %vm1674, %v1667
      %1678 = vst.msk [vmem:[%s113 + $0x3] sm:$0x1] %vm1674, %v1669
      %1679 = vrot.lane.b32.xlu0 %v134, 104
      %v1680 = vpop.permute.xlu0 %1679
      %1681 = vrot.lane.b32.xlu0 %v134, 72
      %v1682 = vpop.permute.xlu0 %1681
      %v1684 = vsel %vm137, %v1680, 0
      %v1687 = vsel %vm137, %v1682, 0
      %1689 = vmatprep.subr.bf16.mxu0 0
      %1690 = vmatpush1.bf16.xpose.msra.mxu0 %v1687
      %1691 = vmatprep.subr.bf16.mxu0 0
      %1692 = vmatpush1.bf16.xpose.msra.mxu0 0
      %1693 = vmatprep.subr.bf16.mxu0 0
      %1694 = vmatpush1.bf16.xpose.msra.mxu0 0
      %1695 = vmatprep.subr.bf16.mxu0 0
      %1696 = vmatpush1.bf16.xpose.msra.mxu0 0
      %1697 = vmatprep.subr.bf16.mxu0 0
      %1698 = vmatpush1.bf16.xpose.msra.mxu0 0
      %1699 = vmatprep.subr.bf16.mxu0 0
      %1700 = vmatpush1.bf16.xpose.msra.mxu0 0
      %1701 = vmatprep.subr.bf16.mxu0 0
      %1702 = vmatpush1.bf16.xpose.msra.mxu0 0
      %1703 = vmatprep.subr.bf16.mxu0 0
      %1704 = vmatpush1.bf16.xpose.msra.mxu0 0
      %1705 = vmatprep.subr.bf16.mxu0 0
      %1706 = vmatpush1.bf16.xpose.msra.mxu0 0
      %1707 = vmatprep.subr.bf16.mxu0 0
      %1708 = vmatpush1.bf16.xpose.msra.mxu0 0
      %1709 = vmatprep.subr.bf16.mxu0 0
      %1710 = vmatpush1.bf16.xpose.msra.mxu0 0
      %1711 = vmatprep.subr.bf16.mxu0 0
      %1712 = vmatpush1.bf16.xpose.msra.mxu0 0
      %1713 = vmatprep.subr.bf16.mxu0 0
      %1714 = vmatpush1.bf16.xpose.msra.mxu0 0
      %1715 = vmatprep.subr.bf16.mxu0 0
      %1716 = vmatpush1.bf16.xpose.msra.mxu0 0
      %1717 = vmatprep.subr.bf16.mxu0 0
      %1718 = vmatpush1.bf16.xpose.msra.mxu0 0
      %1719 = vmatprep.subr.bf16.mxu0 0
      %1720 = vmatpush1.bf16.xpose.msra.mxu0 0
      %1721 = vmatprep.mubr.bf16.mxu0 0
      %1722 = vmatmul.mubr.bf16.gmra.mrb[0].mxu0 %v1684
      %v1723 = vpop.f32.mrb[0].mxu0
      %v1724 = vadd.f32 0.0, %v1723
      %v1725 = vpop.f32.mrb[0].mxu0
      %v1726 = vpop.f32.mrb[0].mxu0
      %v1727 = vpop.f32.mrb[0].mxu0
      %1728 = vdwg.mxu0
      %1729 = vrot.lane.b32.xlu0 %v198, 104
      %v1730 = vpop.permute.xlu0 %1729
      %1731 = vrot.lane.b32.xlu0 %v198, 72
      %v1732 = vpop.permute.xlu0 %1731
      %v1734 = vsel %vm137, %v1730, 0
      %v1737 = vsel %vm137, %v1732, 0
      %1739 = vmatprep.subr.bf16.mxu0 0
      %1740 = vmatpush1.bf16.xpose.msra.mxu0 %v1737
      %1741 = vmatprep.subr.bf16.mxu0 0
      %1742 = vmatpush1.bf16.xpose.msra.mxu0 0
      %1743 = vmatprep.subr.bf16.mxu0 0
      %1744 = vmatpush1.bf16.xpose.msra.mxu0 0
      %1745 = vmatprep.subr.bf16.mxu0 0
      %1746 = vmatpush1.bf16.xpose.msra.mxu0 0
      %1747 = vmatprep.subr.bf16.mxu0 0
      %1748 = vmatpush1.bf16.xpose.msra.mxu0 0
      %1749 = vmatprep.subr.bf16.mxu0 0
      %1750 = vmatpush1.bf16.xpose.msra.mxu0 0
      %1751 = vmatprep.subr.bf16.mxu0 0
      %1752 = vmatpush1.bf16.xpose.msra.mxu0 0
      %1753 = vmatprep.subr.bf16.mxu0 0
      %1754 = vmatpush1.bf16.xpose.msra.mxu0 0
      %1755 = vmatprep.subr.bf16.mxu0 0
      %1756 = vmatpush1.bf16.xpose.msra.mxu0 0
      %1757 = vmatprep.subr.bf16.mxu0 0
      %1758 = vmatpush1.bf16.xpose.msra.mxu0 0
      %1759 = vmatprep.subr.bf16.mxu0 0
      %1760 = vmatpush1.bf16.xpose.msra.mxu0 0
      %1761 = vmatprep.subr.bf16.mxu0 0
      %1762 = vmatpush1.bf16.xpose.msra.mxu0 0
      %1763 = vmatprep.subr.bf16.mxu0 0
      %1764 = vmatpush1.bf16.xpose.msra.mxu0 0
      %1765 = vmatprep.subr.bf16.mxu0 0
      %1766 = vmatpush1.bf16.xpose.msra.mxu0 0
      %1767 = vmatprep.subr.bf16.mxu0 0
      %1768 = vmatpush1.bf16.xpose.msra.mxu0 0
      %1769 = vmatprep.subr.bf16.mxu0 0
      %1770 = vmatpush1.bf16.xpose.msra.mxu0 0
      %1771 = vmatprep.mubr.bf16.mxu0 0
      %1772 = vmatmul.mubr.bf16.gmra.mrb[0].mxu0 %v1734
      %v1773 = vpop.f32.mrb[0].mxu0
      %v1774 = vadd.f32 0.0, %v1773
      %v1775 = vpop.f32.mrb[0].mxu0
      %v1776 = vpop.f32.mrb[0].mxu0
      %v1777 = vpop.f32.mrb[0].mxu0
      %1778 = vdwg.mxu0
      %1779 = vrot.lane.b32.xlu0 %v261, 104
      %v1780 = vpop.permute.xlu0 %1779
      %1781 = vrot.lane.b32.xlu0 %v261, 72
      %v1782 = vpop.permute.xlu0 %1781
      %v1784 = vsel %vm137, %v1780, 0
      %v1787 = vsel %vm137, %v1782, 0
      %1789 = vmatprep.subr.bf16.mxu0 0
      %1790 = vmatpush1.bf16.xpose.msra.mxu0 %v1787
      %1791 = vmatprep.subr.bf16.mxu0 0
      %1792 = vmatpush1.bf16.xpose.msra.mxu0 0
      %1793 = vmatprep.subr.bf16.mxu0 0
      %1794 = vmatpush1.bf16.xpose.msra.mxu0 0
      %1795 = vmatprep.subr.bf16.mxu0 0
      %1796 = vmatpush1.bf16.xpose.msra.mxu0 0
      %1797 = vmatprep.subr.bf16.mxu0 0
      %1798 = vmatpush1.bf16.xpose.msra.mxu0 0
      %1799 = vmatprep.subr.bf16.mxu0 0
      %1800 = vmatpush1.bf16.xpose.msra.mxu0 0
      %1801 = vmatprep.subr.bf16.mxu0 0
      %1802 = vmatpush1.bf16.xpose.msra.mxu0 0
      %1803 = vmatprep.subr.bf16.mxu0 0
      %1804 = vmatpush1.bf16.xpose.msra.mxu0 0
      %1805 = vmatprep.subr.bf16.mxu0 0
      %1806 = vmatpush1.bf16.xpose.msra.mxu0 0
      %1807 = vmatprep.subr.bf16.mxu0 0
      %1808 = vmatpush1.bf16.xpose.msra.mxu0 0
      %1809 = vmatprep.subr.bf16.mxu0 0
      %1810 = vmatpush1.bf16.xpose.msra.mxu0 0
      %1811 = vmatprep.subr.bf16.mxu0 0
      %1812 = vmatpush1.bf16.xpose.msra.mxu0 0
      %1813 = vmatprep.subr.bf16.mxu0 0
      %1814 = vmatpush1.bf16.xpose.msra.mxu0 0
      %1815 = vmatprep.subr.bf16.mxu0 0
      %1816 = vmatpush1.bf16.xpose.msra.mxu0 0
      %1817 = vmatprep.subr.bf16.mxu0 0
      %1818 = vmatpush1.bf16.xpose.msra.mxu0 0
      %1819 = vmatprep.subr.bf16.mxu0 0
      %1820 = vmatpush1.bf16.xpose.msra.mxu0 0
      %1821 = vmatprep.mubr.bf16.mxu0 0
      %1822 = vmatmul.mubr.bf16.gmra.mrb[0].mxu0 %v1784
      %v1823 = vpop.f32.mrb[0].mxu0
      %v1824 = vadd.f32 0.0, %v1823
      %v1825 = vpop.f32.mrb[0].mxu0
      %v1826 = vpop.f32.mrb[0].mxu0
      %v1827 = vpop.f32.mrb[0].mxu0
      %1828 = vdwg.mxu0
      %1829 = vrot.lane.b32.xlu0 %v324, 104
      %v1830 = vpop.permute.xlu0 %1829
      %1831 = vrot.lane.b32.xlu0 %v324, 72
      %v1832 = vpop.permute.xlu0 %1831
      %v1834 = vsel %vm137, %v1830, 0
      %v1837 = vsel %vm137, %v1832, 0
      %1839 = vmatprep.subr.bf16.mxu0 0
      %1840 = vmatpush1.bf16.xpose.msra.mxu0 %v1837
      %1841 = vmatprep.subr.bf16.mxu0 0
      %1842 = vmatpush1.bf16.xpose.msra.mxu0 0
      %1843 = vmatprep.subr.bf16.mxu0 0
      %1844 = vmatpush1.bf16.xpose.msra.mxu0 0
      %1845 = vmatprep.subr.bf16.mxu0 0
      %1846 = vmatpush1.bf16.xpose.msra.mxu0 0
      %1847 = vmatprep.subr.bf16.mxu0 0
      %1848 = vmatpush1.bf16.xpose.msra.mxu0 0
      %1849 = vmatprep.subr.bf16.mxu0 0
      %1850 = vmatpush1.bf16.xpose.msra.mxu0 0
      %1851 = vmatprep.subr.bf16.mxu0 0
      %1852 = vmatpush1.bf16.xpose.msra.mxu0 0
      %1853 = vmatprep.subr.bf16.mxu0 0
      %1854 = vmatpush1.bf16.xpose.msra.mxu0 0
      %1855 = vmatprep.subr.bf16.mxu0 0
      %1856 = vmatpush1.bf16.xpose.msra.mxu0 0
      %1857 = vmatprep.subr.bf16.mxu0 0
      %1858 = vmatpush1.bf16.xpose.msra.mxu0 0
      %1859 = vmatprep.subr.bf16.mxu0 0
      %1860 = vmatpush1.bf16.xpose.msra.mxu0 0
      %1861 = vmatprep.subr.bf16.mxu0 0
      %1862 = vmatpush1.bf16.xpose.msra.mxu0 0
      %1863 = vmatprep.subr.bf16.mxu0 0
      %1864 = vmatpush1.bf16.xpose.msra.mxu0 0
      %1865 = vmatprep.subr.bf16.mxu0 0
      %1866 = vmatpush1.bf16.xpose.msra.mxu0 0
      %1867 = vmatprep.subr.bf16.mxu0 0
      %1868 = vmatpush1.bf16.xpose.msra.mxu0 0
      %1869 = vmatprep.subr.bf16.mxu0 0
      %1870 = vmatpush1.bf16.xpose.msra.mxu0 0
      %1871 = vmatprep.mubr.bf16.mxu0 0
      %1872 = vmatmul.mubr.bf16.gmra.mrb[0].mxu0 %v1834
      %v1873 = vpop.f32.mrb[0].mxu0
      %v1874 = vadd.f32 0.0, %v1873
      %v1875 = vpop.f32.mrb[0].mxu0
      %v1876 = vpop.f32.mrb[0].mxu0
      %v1877 = vpop.f32.mrb[0].mxu0
      %1878 = vdwg.mxu0
      %v1879 = vmul.f32 %v1724, 0.35355338
      %v1880 = vmul.f32 %v1774, 0.35355338
      %v1881 = vmul.f32 %v1824, 0.35355338
      %v1882 = vmul.f32 %v1874, 0.35355338
      %v1883 = vsel %vm377, %v1879, -inf
      %1884 = vmax.xlane.f32.xlu0 %v1883
      %v1885 = vpop.xlane.xlu0 %1884
      %v1886 = vsel %vm377, %v1880, -inf
      %1887 = vmax.xlane.f32.xlu0 %v1886
      %v1888 = vpop.xlane.xlu0 %1887
      %v1889 = vsel %vm377, %v1881, -inf
      %1890 = vmax.xlane.f32.xlu0 %v1889
      %v1891 = vpop.xlane.xlu0 %1890
      %v1892 = vsel %vm377, %v1882, -inf
      %1893 = vmax.xlane.f32.xlu0 %v1892
      %v1894 = vpop.xlane.xlu0 %1893
      %v1895 = vsub.f32 %v1879, %v1885
      %v1896 = vsub.f32 %v1880, %v1888
      %v1897 = vsub.f32 %v1881, %v1891
      %v1898 = vsub.f32 %v1882, %v1894
      %v1899 = vmul.f32 %v1895, 1.442695
      %v1900 = vpow.pop %v1899
      %v1901 = vmul.f32 %v1896, 1.442695
      %v1902 = vpow.pop %v1901
      %v1903 = vmul.f32 %v1897, 1.442695
      %v1904 = vpow.pop %v1903
      %v1905 = vmul.f32 %v1898, 1.442695
      %v1906 = vpow.pop %v1905
      %v1907 = vsel %vm377, %v1900, 0.0
      %1908 = vadd.xlane.f32.xlu0 %v1907
      %v1909 = vpop.xlane.xlu0 %1908
      %v1910 = vsel %vm377, %v1902, 0.0
      %1911 = vadd.xlane.f32.xlu0 %v1910
      %v1912 = vpop.xlane.xlu0 %1911
      %v1913 = vsel %vm377, %v1904, 0.0
      %1914 = vadd.xlane.f32.xlu0 %v1913
      %v1915 = vpop.xlane.xlu0 %1914
      %v1916 = vsel %vm377, %v1906, 0.0
      %1917 = vadd.xlane.f32.xlu0 %v1916
      %v1918 = vpop.xlane.xlu0 %1917
      %v1919 = vpack.c.bf16 %v1900, %v1900
      %v1920 = vpack.c.bf16 %v1902, %v1902
      %v1921 = vpack.c.bf16 %v1904, %v1904
      %v1922 = vpack.c.bf16 %v1906, %v1906
      %1923 = vrot.lane.b32.xlu0 %v134, 40
      %v1924 = vpop.permute.xlu0 %1923
      %v1926 = vsel %vm420, %v1919, 0
      %v1929 = vsel %vm424, %v1924, 0
      %1931 = vmatprep.subr.bf16.mxu0 0
      %1932 = vmatpush1.bf16.msra.mxu0 %v1929
      %1933 = vmatprep.subr.bf16.mxu0 0
      %1934 = vmatpush1.bf16.msra.mxu0 0
      %1935 = vmatprep.subr.bf16.mxu0 0
      %1936 = vmatpush1.bf16.msra.mxu0 0
      %1937 = vmatprep.subr.bf16.mxu0 0
      %1938 = vmatpush1.bf16.msra.mxu0 0
      %1939 = vmatprep.subr.bf16.mxu0 0
      %1940 = vmatpush1.bf16.msra.mxu0 0
      %1941 = vmatprep.subr.bf16.mxu0 0
      %1942 = vmatpush1.bf16.msra.mxu0 0
      %1943 = vmatprep.subr.bf16.mxu0 0
      %1944 = vmatpush1.bf16.msra.mxu0 0
      %1945 = vmatprep.subr.bf16.mxu0 0
      %1946 = vmatpush1.bf16.msra.mxu0 0
      %1947 = vmatprep.subr.bf16.mxu0 0
      %1948 = vmatpush1.bf16.msra.mxu0 0
      %1949 = vmatprep.subr.bf16.mxu0 0
      %1950 = vmatpush1.bf16.msra.mxu0 0
      %1951 = vmatprep.subr.bf16.mxu0 0
      %1952 = vmatpush1.bf16.msra.mxu0 0
      %1953 = vmatprep.subr.bf16.mxu0 0
      %1954 = vmatpush1.bf16.msra.mxu0 0
      %1955 = vmatprep.subr.bf16.mxu0 0
      %1956 = vmatpush1.bf16.msra.mxu0 0
      %1957 = vmatprep.subr.bf16.mxu0 0
      %1958 = vmatpush1.bf16.msra.mxu0 0
      %1959 = vmatprep.subr.bf16.mxu0 0
      %1960 = vmatpush1.bf16.msra.mxu0 0
      %1961 = vmatprep.subr.bf16.mxu0 0
      %1962 = vmatpush1.bf16.msra.mxu0 0
      %1963 = vmatprep.mubr.bf16.mxu0 0
      %1964 = vmatmul.mubr.bf16.gmra.mrb[0].mxu0 %v1926
      %v1965 = vpop.f32.mrb[0].mxu0
      %v1966 = vadd.f32 0.0, %v1965
      %v1967 = vpop.f32.mrb[0].mxu0
      %v1968 = vpop.f32.mrb[0].mxu0
      %v1969 = vpop.f32.mrb[0].mxu0
      %1970 = vdwg.mxu0
      %1971 = vrot.lane.b32.xlu0 %v198, 40
      %v1972 = vpop.permute.xlu0 %1971
      %v1974 = vsel %vm420, %v1920, 0
      %v1977 = vsel %vm424, %v1972, 0
      %1979 = vmatprep.subr.bf16.mxu0 0
      %1980 = vmatpush1.bf16.msra.mxu0 %v1977
      %1981 = vmatprep.subr.bf16.mxu0 0
      %1982 = vmatpush1.bf16.msra.mxu0 0
      %1983 = vmatprep.subr.bf16.mxu0 0
      %1984 = vmatpush1.bf16.msra.mxu0 0
      %1985 = vmatprep.subr.bf16.mxu0 0
      %1986 = vmatpush1.bf16.msra.mxu0 0
      %1987 = vmatprep.subr.bf16.mxu0 0
      %1988 = vmatpush1.bf16.msra.mxu0 0
      %1989 = vmatprep.subr.bf16.mxu0 0
      %1990 = vmatpush1.bf16.msra.mxu0 0
      %1991 = vmatprep.subr.bf16.mxu0 0
      %1992 = vmatpush1.bf16.msra.mxu0 0
      %1993 = vmatprep.subr.bf16.mxu0 0
      %1994 = vmatpush1.bf16.msra.mxu0 0
      %1995 = vmatprep.subr.bf16.mxu0 0
      %1996 = vmatpush1.bf16.msra.mxu0 0
      %1997 = vmatprep.subr.bf16.mxu0 0
      %1998 = vmatpush1.bf16.msra.mxu0 0
      %1999 = vmatprep.subr.bf16.mxu0 0
      %2000 = vmatpush1.bf16.msra.mxu0 0
      %2001 = vmatprep.subr.bf16.mxu0 0
      %2002 = vmatpush1.bf16.msra.mxu0 0
      %2003 = vmatprep.subr.bf16.mxu0 0
      %2004 = vmatpush1.bf16.msra.mxu0 0
      %2005 = vmatprep.subr.bf16.mxu0 0
      %2006 = vmatpush1.bf16.msra.mxu0 0
      %2007 = vmatprep.subr.bf16.mxu0 0
      %2008 = vmatpush1.bf16.msra.mxu0 0
      %2009 = vmatprep.subr.bf16.mxu0 0
      %2010 = vmatpush1.bf16.msra.mxu0 0
      %2011 = vmatprep.mubr.bf16.mxu0 0
      %2012 = vmatmul.mubr.bf16.gmra.mrb[0].mxu0 %v1974
      %v2013 = vpop.f32.mrb[0].mxu0
      %v2014 = vadd.f32 0.0, %v2013
      %v2015 = vpop.f32.mrb[0].mxu0
      %v2016 = vpop.f32.mrb[0].mxu0
      %v2017 = vpop.f32.mrb[0].mxu0
      %2018 = vdwg.mxu0
      %2019 = vrot.lane.b32.xlu0 %v261, 40
      %v2020 = vpop.permute.xlu0 %2019
      %v2022 = vsel %vm420, %v1921, 0
      %v2025 = vsel %vm424, %v2020, 0
      %2027 = vmatprep.subr.bf16.mxu0 0
      %2028 = vmatpush1.bf16.msra.mxu0 %v2025
      %2029 = vmatprep.subr.bf16.mxu0 0
      %2030 = vmatpush1.bf16.msra.mxu0 0
      %2031 = vmatprep.subr.bf16.mxu0 0
      %2032 = vmatpush1.bf16.msra.mxu0 0
      %2033 = vmatprep.subr.bf16.mxu0 0
      %2034 = vmatpush1.bf16.msra.mxu0 0
      %2035 = vmatprep.subr.bf16.mxu0 0
      %2036 = vmatpush1.bf16.msra.mxu0 0
      %2037 = vmatprep.subr.bf16.mxu0 0
      %2038 = vmatpush1.bf16.msra.mxu0 0
      %2039 = vmatprep.subr.bf16.mxu0 0
      %2040 = vmatpush1.bf16.msra.mxu0 0
      %2041 = vmatprep.subr.bf16.mxu0 0
      %2042 = vmatpush1.bf16.msra.mxu0 0
      %2043 = vmatprep.subr.bf16.mxu0 0
      %2044 = vmatpush1.bf16.msra.mxu0 0
      %2045 = vmatprep.subr.bf16.mxu0 0
      %2046 = vmatpush1.bf16.msra.mxu0 0
      %2047 = vmatprep.subr.bf16.mxu0 0
      %2048 = vmatpush1.bf16.msra.mxu0 0
      %2049 = vmatprep.subr.bf16.mxu0 0
      %2050 = vmatpush1.bf16.msra.mxu0 0
      %2051 = vmatprep.subr.bf16.mxu0 0
      %2052 = vmatpush1.bf16.msra.mxu0 0
      %2053 = vmatprep.subr.bf16.mxu0 0
      %2054 = vmatpush1.bf16.msra.mxu0 0
      %2055 = vmatprep.subr.bf16.mxu0 0
      %2056 = vmatpush1.bf16.msra.mxu0 0
      %2057 = vmatprep.subr.bf16.mxu0 0
      %2058 = vmatpush1.bf16.msra.mxu0 0
      %2059 = vmatprep.mubr.bf16.mxu0 0
      %2060 = vmatmul.mubr.bf16.gmra.mrb[0].mxu0 %v2022
      %v2061 = vpop.f32.mrb[0].mxu0
      %v2062 = vadd.f32 0.0, %v2061
      %v2063 = vpop.f32.mrb[0].mxu0
      %v2064 = vpop.f32.mrb[0].mxu0
      %v2065 = vpop.f32.mrb[0].mxu0
      %2066 = vdwg.mxu0
      %2067 = vrot.lane.b32.xlu0 %v324, 40
      %v2068 = vpop.permute.xlu0 %2067
      %v2070 = vsel %vm420, %v1922, 0
      %v2073 = vsel %vm424, %v2068, 0
      %2075 = vmatprep.subr.bf16.mxu0 0
      %2076 = vmatpush1.bf16.msra.mxu0 %v2073
      %2077 = vmatprep.subr.bf16.mxu0 0
      %2078 = vmatpush1.bf16.msra.mxu0 0
      %2079 = vmatprep.subr.bf16.mxu0 0
      %2080 = vmatpush1.bf16.msra.mxu0 0
      %2081 = vmatprep.subr.bf16.mxu0 0
      %2082 = vmatpush1.bf16.msra.mxu0 0
      %2083 = vmatprep.subr.bf16.mxu0 0
      %2084 = vmatpush1.bf16.msra.mxu0 0
      %2085 = vmatprep.subr.bf16.mxu0 0
      %2086 = vmatpush1.bf16.msra.mxu0 0
      %2087 = vmatprep.subr.bf16.mxu0 0
      %2088 = vmatpush1.bf16.msra.mxu0 0
      %2089 = vmatprep.subr.bf16.mxu0 0
      %2090 = vmatpush1.bf16.msra.mxu0 0
      %2091 = vmatprep.subr.bf16.mxu0 0
      %2092 = vmatpush1.bf16.msra.mxu0 0
      %2093 = vmatprep.subr.bf16.mxu0 0
      %2094 = vmatpush1.bf16.msra.mxu0 0
      %2095 = vmatprep.subr.bf16.mxu0 0
      %2096 = vmatpush1.bf16.msra.mxu0 0
      %2097 = vmatprep.subr.bf16.mxu0 0
      %2098 = vmatpush1.bf16.msra.mxu0 0
      %2099 = vmatprep.subr.bf16.mxu0 0
      %2100 = vmatpush1.bf16.msra.mxu0 0
      %2101 = vmatprep.subr.bf16.mxu0 0
      %2102 = vmatpush1.bf16.msra.mxu0 0
      %2103 = vmatprep.subr.bf16.mxu0 0
      %2104 = vmatpush1.bf16.msra.mxu0 0
      %2105 = vmatprep.subr.bf16.mxu0 0
      %2106 = vmatpush1.bf16.msra.mxu0 0
      %2107 = vmatprep.mubr.bf16.mxu0 0
      %2108 = vmatmul.mubr.bf16.gmra.mrb[0].mxu0 %v2070
      %v2109 = vpop.f32.mrb[0].mxu0
      %v2110 = vadd.f32 0.0, %v2109
      %v2111 = vpop.f32.mrb[0].mxu0
      %v2112 = vpop.f32.mrb[0].mxu0
      %v2113 = vpop.f32.mrb[0].mxu0
      %2114 = vdwg.mxu0
      %v2115 = vrcp.pop %v1909
      %v2116 = vmul.f32 %v1966, %v2115
      %v2117 = vrcp.pop %v1912
      %v2118 = vmul.f32 %v2014, %v2117
      %v2119 = vrcp.pop %v1915
      %v2120 = vmul.f32 %v2062, %v2119
      %v2121 = vrcp.pop %v1918
      %v2122 = vmul.f32 %v2110, %v2121
      %v2123 = vpack.c.bf16 %v2116, %v2116
      %v2124 = vpack.c.bf16 %v2118, %v2118
      %v2125 = vpack.c.bf16 %v2120, %v2120
      %v2126 = vpack.c.bf16 %v2122, %v2122
      %v2132 = vunpack.c.l.s4 1966171168
      %v2133 = vunpack.c.0.s8 %v2132
      %v2134 = vlaneseq
      %v2135 = vshrl.u32 %v2134, 7
      %v2136 = vsub.s32 %v2133, %v2135
      %v2137 = vrot.slane %v2123, %v2136
      %v2139 = vunpack.c.l.s4 1966171168
      %v2140 = vunpack.c.0.s8 %v2139
      %v2141 = vlaneseq
      %v2142 = vshrl.u32 %v2141, 7
      %v2143 = vsub.s32 %v2140, %v2142
      %v2144 = vrot.slane %v2137, %v2143
      %v2146 = vunpack.c.l.s4 1966171168
      %v2147 = vunpack.c.0.s8 %v2146
      %v2148 = vlaneseq
      %v2149 = vshrl.u32 %v2148, 7
      %v2150 = vsub.s32 %v2147, %v2149
      %v2151 = vrot.slane %v2124, %v2150
      %v2153 = vunpack.c.l.s4 1966171168
      %v2154 = vunpack.c.0.s8 %v2153
      %v2155 = vlaneseq
      %v2156 = vshrl.u32 %v2155, 7
      %v2157 = vsub.s32 %v2154, %v2156
      %v2158 = vrot.slane %v2151, %v2157
      %v2160 = vunpack.c.l.s4 1966171168
      %v2161 = vunpack.c.0.s8 %v2160
      %v2162 = vlaneseq
      %v2163 = vshrl.u32 %v2162, 7
      %v2164 = vsub.s32 %v2161, %v2163
      %v2165 = vrot.slane %v2125, %v2164
      %v2167 = vunpack.c.l.s4 1966171168
      %v2168 = vunpack.c.0.s8 %v2167
      %v2169 = vlaneseq
      %v2170 = vshrl.u32 %v2169, 7
      %v2171 = vsub.s32 %v2168, %v2170
      %v2172 = vrot.slane %v2165, %v2171
      %v2174 = vunpack.c.l.s4 1966171168
      %v2175 = vunpack.c.0.s8 %v2174
      %v2176 = vlaneseq
      %v2177 = vshrl.u32 %v2176, 7
      %v2178 = vsub.s32 %v2175, %v2177
      %v2179 = vrot.slane %v2126, %v2178
      %v2181 = vunpack.c.l.s4 1966171168
      %v2182 = vunpack.c.0.s8 %v2181
      %v2183 = vlaneseq
      %v2184 = vshrl.u32 %v2183, 7
      %v2185 = vsub.s32 %v2182, %v2184
      %v2186 = vrot.slane %v2179, %v2185
      %2187 = vrot.lane.b32.xlu0 %v2144, 24
      %v2188 = vpop.permute.xlu0 %2187
      %2189 = vrot.lane.b32.xlu0 %v2158, 24
      %v2190 = vpop.permute.xlu0 %2189
      %2191 = vrot.lane.b32.xlu0 %v2172, 24
      %v2192 = vpop.permute.xlu0 %2191
      %2193 = vrot.lane.b32.xlu0 %v2186, 24
      %v2194 = vpop.permute.xlu0 %2193
      %vm2199 = vcmask 254144
      %2200 = vst.msk [vmem:[%s113] sm:$0x1] %vm2199, %v2188
      %2201 = vst.msk [vmem:[%s113 + $0x1] sm:$0x1] %vm2199, %v2190
      %2202 = vst.msk [vmem:[%s113 + $0x2] sm:$0x1] %vm2199, %v2192
      %2203 = vst.msk [vmem:[%s113 + $0x3] sm:$0x1] %vm2199, %v2194
      %s2204 = smul.u32 4, %s12
      %p2205 = scmp.lt.s32.totalorder %s2204, 7
      %s2206 = scalar_select %p2205, %s2204, 7
      %s2207 = scalar_lea.vmem %s1, %s2206
      // Predicated region
      $region25: #{timesformer_forward.22} parent=23 // pred_check
        %p2208 = pneg %p56
      $region26: #{timesformer_forward.22} parent=23 // pred_check_branch
        %2210 = sbr.rel (%p2208) target = $region28
      $region27: #{timesformer_forward.22} parent=23 // pred_region
        %s2211 = smul.u32 4, %s12
      $region28: #{timesformer_forward.22} parent=23 // pred_fallthru
        _
    $region24: #{timesformer_forward.22} parent=5 // pred_fallthru
      _
    %p2212 = scmp.le.s32.totalorder 2, %s7
    // Predicated region
    $region29: #{timesformer_forward.22} parent=5 // pred_check
      %p2213 = pneg %p2212
    $region30: #{timesformer_forward.22} parent=5 // pred_check_branch
      %2215 = sbr.rel (%p2213) target = $region32
    $region31: #{timesformer_forward.22} parent=5 // pred_region
      %s2216 = ssub.s32 %s7, 2
      // Predicated region
      $region33: #{timesformer_forward.22} parent=31 // pred_check
        %p2217 = pneg %p62
      $region34: #{timesformer_forward.22} parent=31 // pred_check_branch
        %2219 = sbr.rel (%p2217) target = $region36
      $region35: #{timesformer_forward.22} parent=31 // pred_region
        %s2220 = smul.u32 4, %s13
        %p2221 = scmp.lt.s32.totalorder %s2220, 7
        %s2222 = scalar_select %p2221, %s2220, 7
        %s2223 = scalar_lea.vmem %s1, %s2222
      $region36: #{timesformer_forward.22} parent=31 // pred_fallthru
        _
    $region32: #{timesformer_forward.22} parent=5 // pred_fallthru
      _
  $region6: #{timesformer_forward.22} parent=0 // loop_footer
    %s11 = sadd.s32 1, %s7
  $region7: #{timesformer_forward.22} parent=0 // loop_footer_branch
    %6 = sbr.rel target = $region3
  $region8: #{timesformer_forward.22} parent=0 // loop_exit
    _

// kernel: timesformer_forward.25
$region0: #{timesformer_forward.25}
  #allocation0 [shape = 'u32[]', space=smem, size = 0x4, offset = 0x4, fixed_abs, tag = 'smem constant byte address 0x4 - core index']
  #allocation1 [shape = 'u32[144,128]{1,0:T(1,128)}', space=vmem, size = 0x12000, scoped, tag = 'internal scratch']
  #allocation2 [shape = 'bf16[24,32]{1,0:T(8,128)(2,1)}', space=vmem, size = 0x1800, scoped, tag = 'scratch operand']
  %s0 = inlined_call_operand.vmem [shape: f32[24,32], index: 0, kind: input, shape index: {}]
  %s1 = inlined_call_operand.vmem [shape: f32[1,32], index: 1, kind: input, shape index: {}]
  %s2 = inlined_call_operand.vmem [shape: f32[1,32], index: 2, kind: input, shape index: {}]
  %s3 = inlined_call_operand.vmem [shape: bf16[32,128], index: 3, kind: input, shape index: {}]
  %s4 = inlined_call_operand.vmem [shape: f32[1,128], index: 4, kind: input, shape index: {}]
  %s5 = inlined_call_operand.vmem [shape: bf16[24,128], index: 5, kind: output, shape index: {}]
  %s6 = sld [smem:[#allocation0]]
  $region34: #{timesformer_forward.25} parent=0
    _
  %s8 = ssub.s32 1, %s6
  %s9 = scalar_select 0, %s8, %s6
  // Predicated region
  $region2: #{timesformer_forward.25} parent=0 // pred_check
    _
  $region3: #{timesformer_forward.25} parent=0 // pred_check_branch
    %11 = sbr.rel (0) target = $region5
  $region4: #{timesformer_forward.25} parent=0 // pred_region
    _
  $region5: #{timesformer_forward.25} parent=0 // pred_fallthru
    _
  // Predicated region
  $region6: #{timesformer_forward.25} parent=0 // pred_check
    _
  $region7: #{timesformer_forward.25} parent=0 // pred_check_branch
    %13 = sbr.rel (0) target = $region9
  $region8: #{timesformer_forward.25} parent=0 // pred_region
    _
  $region9: #{timesformer_forward.25} parent=0 // pred_fallthru
    _
  // Predicated region
  $region10: #{timesformer_forward.25} parent=0 // pred_check
    _
  $region11: #{timesformer_forward.25} parent=0 // pred_check_branch
    %15 = sbr.rel (0) target = $region13
  $region12: #{timesformer_forward.25} parent=0 // pred_region
    _
  $region13: #{timesformer_forward.25} parent=0 // pred_fallthru
    _
  // Predicated region
  $region14: #{timesformer_forward.25} parent=0 // pred_check
    _
  $region15: #{timesformer_forward.25} parent=0 // pred_check_branch
    %17 = sbr.rel (0) target = $region17
  $region16: #{timesformer_forward.25} parent=0 // pred_region
    _
  $region17: #{timesformer_forward.25} parent=0 // pred_fallthru
    _
  // Predicated region
  $region18: #{timesformer_forward.25} parent=0 // pred_check
    _
  $region19: #{timesformer_forward.25} parent=0 // pred_check_branch
    %19 = sbr.rel (0) target = $region21
  $region20: #{timesformer_forward.25} parent=0 // pred_region
    _
  $region21: #{timesformer_forward.25} parent=0 // pred_fallthru
    _
  %p21 = scmp.eq.s32.totalorder 0, 0
  // Predicated region
  $region22: #{timesformer_forward.25} parent=0 // pred_check
    %p22 = pneg %p21
  $region23: #{timesformer_forward.25} parent=0 // pred_check_branch
    %24 = sbr.rel (%p22) target = $region25
  $region24: #{timesformer_forward.25} parent=0 // pred_region
    %v25 = vld [vmem:[%s0] sm:$0xff]
    %v26 = vld [vmem:[%s0 + $0x8] sm:$0xff]
    %v27 = vld [vmem:[%s0 + $0x10] sm:$0xff]
    %vm28 = vcmask 261120
    %v29 = vsel %vm28, %v25, 0.0
    %30 = vadd.xlane.f32.xlu0 %v29
    %v31 = vpop.xlane.xlu0 %30
    %v32 = vsel %vm28, %v26, 0.0
    %33 = vadd.xlane.f32.xlu0 %v32
    %v34 = vpop.xlane.xlu0 %33
    %v35 = vsel %vm28, %v27, 0.0
    %36 = vadd.xlane.f32.xlu0 %v35
    %v37 = vpop.xlane.xlu0 %36
    %v38 = vrcp.pop 32.0
    %v39 = vmul.f32 %v31, %v38
    %v40 = vmul.f32 %v34, %v38
    %v41 = vmul.f32 %v37, %v38
    %v42 = vsub.f32 %v25, %v39
    %v43 = vsub.f32 %v26, %v40
    %v44 = vsub.f32 %v27, %v41
    %v45 = vmul.f32 %v42, %v42
    %v46 = vmul.f32 %v43, %v43
    %v47 = vmul.f32 %v44, %v44
    %v48 = vsel %vm28, %v45, 0.0
    %49 = vadd.xlane.f32.xlu0 %v48
    %v50 = vpop.xlane.xlu0 %49
    %v51 = vsel %vm28, %v46, 0.0
    %52 = vadd.xlane.f32.xlu0 %v51
    %v53 = vpop.xlane.xlu0 %52
    %v54 = vsel %vm28, %v47, 0.0
    %55 = vadd.xlane.f32.xlu0 %v54
    %v56 = vpop.xlane.xlu0 %55
    %v57 = vmul.f32 %v50, %v38
    %v58 = vmul.f32 %v53, %v38
    %v59 = vmul.f32 %v56, %v38
    %v60 = vadd.f32 %v57, 1e-05
    %v61 = vadd.f32 %v58, 1e-05
    %v62 = vadd.f32 %v59, 1e-05
    %v63 = vrsqrt.pop %v60
    %v64 = vrsqrt.pop %v61
    %v65 = vrsqrt.pop %v62
    %v66 = vmul.f32 %v42, %v63
    %v67 = vmul.f32 %v43, %v64
    %v68 = vmul.f32 %v44, %v65
    %v69 = vld [vmem:[%s1] sm:$0x1]
    %v71 = vlaneseq
    %v72 = vshrl.u32 %v71, 7
    %v73 = vsub.s32 0, %v72
    %v74 = vrot.slane %v69, %v73
    %v76 = vmul.f32 %v66, %v74
    %v77 = vmul.f32 %v67, %v74
    %v78 = vmul.f32 %v68, %v74
    %v79 = vld [vmem:[%s2] sm:$0x1]
    %v81 = vlaneseq
    %v82 = vshrl.u32 %v81, 7
    %v83 = vsub.s32 0, %v82
    %v84 = vrot.slane %v79, %v83
    %v86 = vadd.f32 %v76, %v84
    %v87 = vadd.f32 %v77, %v84
    %v88 = vadd.f32 %v78, %v84
    %v89 = vpack.c.bf16 %v87, %v86
    %v90 = vpack.c.bf16 %v88, %v88
    %v93 = vunpack.c.l.b16 %v89
    %v94 = vunpack.c.h.b16 %v89
    %v95 = vunpack.c.l.b16 %v90
    %v96 = vpack.c.b16 %v93, %v93
    %v97 = vpack.c.b16 %v94, %v94
    %v98 = vpack.c.b16 %v95, %v95
    %vm102 = vcmask 257024
    %103 = vst.msk [vmem:[#allocation2] sm:$0xf] %vm102, %v96
    %104 = vst.msk [vmem:[#allocation2 + $0x4] sm:$0xf] %vm102, %v97
    %105 = vst.msk [vmem:[#allocation2 + $0x8] sm:$0xf] %vm102, %v98
  $region25: #{timesformer_forward.25} parent=0 // pred_fallthru
    _
  %v106 = vld [vmem:[#allocation2] sm:$0xf]
  %v107 = vld [vmem:[#allocation2 + $0x4] sm:$0xf]
  %v108 = vld [vmem:[#allocation2 + $0x8] sm:$0xf]
  %v109 = vld [vmem:[%s3] sm:$0xf]
  %v110 = vld [vmem:[%s3 + $0x4] sm:$0xf]
  %v111 = vld [vmem:[%s3 + $0x8] sm:$0xf]
  %v112 = vld [vmem:[%s3 + $0xc] sm:$0xf]
  %v113 = vld [vmem:[%s4] sm:$0x1]
  %v115 = vlaneseq
  %v116 = vshrl.u32 %v115, 7
  %v117 = vsub.s32 0, %v116
  %v118 = vrot.slane %v113, %v117
  %v123 = vunpack.c.l.b16 %v106
  %v124 = vunpack.c.l.b16 %v107
  %v125 = vunpack.c.l.b16 %v108
  %v126 = vpack.c.b16 %v124, %v123
  %v127 = vpack.c.b16 %v125, %v125
  %v132 = vunpack.c.l.b16 %v109
  %v133 = vunpack.c.l.b16 %v110
  %v134 = vunpack.c.l.b16 %v111
  %v135 = vunpack.c.l.b16 %v112
  %v136 = vpack.c.b16 %v133, %v132
  %v137 = vpack.c.b16 %v135, %v134
  %vm140 = vcmask 261120
  %v142 = vsel %vm140, %v126, 0
  %v145 = vsel %vm140, %v127, 0
  %147 = vmatprep.subr.bf16.mxu0 0
  %148 = vmatpush1.bf16.msra.mxu0 %v136
  %149 = vmatprep.subr.bf16.mxu0 0
  %150 = vmatpush1.bf16.msra.mxu0 %v137
  %151 = vmatprep.subr.bf16.mxu0 0
  %152 = vmatpush1.bf16.msra.mxu0 0
  %153 = vmatprep.subr.bf16.mxu0 0
  %154 = vmatpush1.bf16.msra.mxu0 0
  %155 = vmatprep.subr.bf16.mxu0 0
  %156 = vmatpush1.bf16.msra.mxu0 0
  %157 = vmatprep.subr.bf16.mxu0 0
  %158 = vmatpush1.bf16.msra.mxu0 0
  %159 = vmatprep.subr.bf16.mxu0 0
  %160 = vmatpush1.bf16.msra.mxu0 0
  %161 = vmatprep.subr.bf16.mxu0 0
  %162 = vmatpush1.bf16.msra.mxu0 0
  %163 = vmatprep.subr.bf16.mxu0 0
  %164 = vmatpush1.bf16.msra.mxu0 0
  %165 = vmatprep.subr.bf16.mxu0 0
  %166 = vmatpush1.bf16.msra.mxu0 0
  %167 = vmatprep.subr.bf16.mxu0 0
  %168 = vmatpush1.bf16.msra.mxu0 0
  %169 = vmatprep.subr.bf16.mxu0 0
  %170 = vmatpush1.bf16.msra.mxu0 0
  %171 = vmatprep.subr.bf16.mxu0 0
  %172 = vmatpush1.bf16.msra.mxu0 0
  %173 = vmatprep.subr.bf16.mxu0 0
  %174 = vmatpush1.bf16.msra.mxu0 0
  %175 = vmatprep.subr.bf16.mxu0 0
  %176 = vmatpush1.bf16.msra.mxu0 0
  %177 = vmatprep.subr.bf16.mxu0 0
  %178 = vmatpush1.bf16.msra.mxu0 0
  %179 = vmatprep.mubr.bf16.mxu0 0
  %180 = vmatmul.mubr.bf16.gmra.mrb[0].mxu0 %v142
  %v181 = vpop.f32.mrb[0].mxu0
  %v182 = vadd.f32 %v118, %v181
  %v183 = vpop.f32.mrb[0].mxu0
  %v184 = vpop.f32.mrb[0].mxu0
  %v185 = vadd.f32 %v118, %v184
  %v186 = vpop.f32.mrb[0].mxu0
  %187 = vmatprep.mubr.bf16.mxu0 0
  %188 = vmatmul.mubr.bf16.gmra.mrb[0].mxu0 %v145
  %v189 = vpop.f32.mrb[0].mxu0
  %v190 = vadd.f32 %v118, %v189
  %v191 = vpop.f32.mrb[0].mxu0
  %v192 = vpop.f32.mrb[0].mxu0
  %v193 = vpop.f32.mrb[0].mxu0
  %194 = vdwg.mxu0
  %v195 = vpack.c.bf16 %v185, %v182
  %v196 = vpack.c.bf16 %v190, %v190
  %v199 = vunpack.c.l.b16 %v195
  %v200 = vunpack.c.h.b16 %v195
  %v201 = vunpack.c.l.b16 %v196
  %v202 = vpack.c.b16 %v199, %v199
  %v203 = vpack.c.b16 %v200, %v200
  %v204 = vpack.c.b16 %v201, %v201
  %208 = vst [vmem:[%s5] sm:$0xf] %v202
  %209 = vst [vmem:[%s5 + $0x4] sm:$0xf] %v203
  %210 = vst [vmem:[%s5 + $0x8] sm:$0xf] %v204
  // Predicated region
  $region26: #{timesformer_forward.25} parent=0 // pred_check
    _
  $region27: #{timesformer_forward.25} parent=0 // pred_check_branch
    %212 = sbr.rel (0) target = $region29
  $region28: #{timesformer_forward.25} parent=0 // pred_region
    _
  $region29: #{timesformer_forward.25} parent=0 // pred_fallthru
    _
  // Predicated region
  $region30: #{timesformer_forward.25} parent=0 // pred_check
    _
  $region31: #{timesformer_forward.25} parent=0 // pred_check_branch
    %214 = sbr.rel (0) target = $region33
  $region32: #{timesformer_forward.25} parent=0 // pred_region
    _
  $region33: #{timesformer_forward.25} parent=0 // pred_fallthru
    _

// kernel: timesformer_forward.27
$region0: #{timesformer_forward.27}
  #allocation0 [shape = 'u32[]', space=smem, size = 0x4, offset = 0x4, fixed_abs, tag = 'smem constant byte address 0x4 - core index']
  #allocation1 [shape = 'u32[144,128]{1,0:T(1,128)}', space=vmem, size = 0x12000, scoped, tag = 'internal scratch']
  %s0 = inlined_call_operand.vmem [shape: bf16[24,32], index: 0, kind: input, shape index: {}]
  %s1 = inlined_call_operand.vmem [shape: bf16[32,128], index: 1, kind: input, shape index: {}]
  %s2 = inlined_call_operand.vmem [shape: f32[1,128], index: 2, kind: input, shape index: {}]
  %s3 = inlined_call_operand.vmem [shape: f32[24,128], index: 3, kind: output, shape index: {}]
  %s4 = sld [smem:[#allocation0]]
  $region22: #{timesformer_forward.27} parent=0
    _
  %s6 = ssub.s32 1, %s4
  %s7 = scalar_select 0, %s6, %s4
  // Predicated region
  $region2: #{timesformer_forward.27} parent=0 // pred_check
    _
  $region3: #{timesformer_forward.27} parent=0 // pred_check_branch
    %9 = sbr.rel (0) target = $region5
  $region4: #{timesformer_forward.27} parent=0 // pred_region
    _
  $region5: #{timesformer_forward.27} parent=0 // pred_fallthru
    _
  // Predicated region
  $region6: #{timesformer_forward.27} parent=0 // pred_check
    _
  $region7: #{timesformer_forward.27} parent=0 // pred_check_branch
    %11 = sbr.rel (0) target = $region9
  $region8: #{timesformer_forward.27} parent=0 // pred_region
    _
  $region9: #{timesformer_forward.27} parent=0 // pred_fallthru
    _
  // Predicated region
  $region10: #{timesformer_forward.27} parent=0 // pred_check
    _
  $region11: #{timesformer_forward.27} parent=0 // pred_check_branch
    %13 = sbr.rel (0) target = $region13
  $region12: #{timesformer_forward.27} parent=0 // pred_region
    _
  $region13: #{timesformer_forward.27} parent=0 // pred_fallthru
    _
  %v15 = vld [vmem:[%s0] sm:$0xf]
  %v16 = vld [vmem:[%s0 + $0x4] sm:$0xf]
  %v17 = vld [vmem:[%s0 + $0x8] sm:$0xf]
  %v18 = vld [vmem:[%s1] sm:$0xf]
  %v19 = vld [vmem:[%s1 + $0x4] sm:$0xf]
  %v20 = vld [vmem:[%s1 + $0x8] sm:$0xf]
  %v21 = vld [vmem:[%s1 + $0xc] sm:$0xf]
  %v22 = vld [vmem:[%s2] sm:$0x1]
  %v24 = vlaneseq
  %v25 = vshrl.u32 %v24, 7
  %v26 = vsub.s32 0, %v25
  %v27 = vrot.slane %v22, %v26
  %v32 = vunpack.c.l.b16 %v15
  %v33 = vunpack.c.l.b16 %v16
  %v34 = vunpack.c.l.b16 %v17
  %v35 = vpack.c.b16 %v33, %v32
  %v36 = vpack.c.b16 %v34, %v34
  %v41 = vunpack.c.l.b16 %v18
  %v42 = vunpack.c.l.b16 %v19
  %v43 = vunpack.c.l.b16 %v20
  %v44 = vunpack.c.l.b16 %v21
  %v45 = vpack.c.b16 %v42, %v41
  %v46 = vpack.c.b16 %v44, %v43
  %vm49 = vcmask 261120
  %v51 = vsel %vm49, %v35, 0
  %v54 = vsel %vm49, %v36, 0
  %56 = vmatprep.subr.bf16.mxu0 0
  %57 = vmatpush1.bf16.msra.mxu0 %v45
  %58 = vmatprep.subr.bf16.mxu0 0
  %59 = vmatpush1.bf16.msra.mxu0 %v46
  %60 = vmatprep.subr.bf16.mxu0 0
  %61 = vmatpush1.bf16.msra.mxu0 0
  %62 = vmatprep.subr.bf16.mxu0 0
  %63 = vmatpush1.bf16.msra.mxu0 0
  %64 = vmatprep.subr.bf16.mxu0 0
  %65 = vmatpush1.bf16.msra.mxu0 0
  %66 = vmatprep.subr.bf16.mxu0 0
  %67 = vmatpush1.bf16.msra.mxu0 0
  %68 = vmatprep.subr.bf16.mxu0 0
  %69 = vmatpush1.bf16.msra.mxu0 0
  %70 = vmatprep.subr.bf16.mxu0 0
  %71 = vmatpush1.bf16.msra.mxu0 0
  %72 = vmatprep.subr.bf16.mxu0 0
  %73 = vmatpush1.bf16.msra.mxu0 0
  %74 = vmatprep.subr.bf16.mxu0 0
  %75 = vmatpush1.bf16.msra.mxu0 0
  %76 = vmatprep.subr.bf16.mxu0 0
  %77 = vmatpush1.bf16.msra.mxu0 0
  %78 = vmatprep.subr.bf16.mxu0 0
  %79 = vmatpush1.bf16.msra.mxu0 0
  %80 = vmatprep.subr.bf16.mxu0 0
  %81 = vmatpush1.bf16.msra.mxu0 0
  %82 = vmatprep.subr.bf16.mxu0 0
  %83 = vmatpush1.bf16.msra.mxu0 0
  %84 = vmatprep.subr.bf16.mxu0 0
  %85 = vmatpush1.bf16.msra.mxu0 0
  %86 = vmatprep.subr.bf16.mxu0 0
  %87 = vmatpush1.bf16.msra.mxu0 0
  %88 = vmatprep.mubr.bf16.mxu0 0
  %89 = vmatmul.mubr.bf16.gmra.mrb[0].mxu0 %v51
  %v90 = vpop.f32.mrb[0].mxu0
  %v91 = vadd.f32 %v27, %v90
  %v92 = vpop.f32.mrb[0].mxu0
  %v93 = vpop.f32.mrb[0].mxu0
  %v94 = vadd.f32 %v27, %v93
  %v95 = vpop.f32.mrb[0].mxu0
  %96 = vmatprep.mubr.bf16.mxu0 0
  %97 = vmatmul.mubr.bf16.gmra.mrb[0].mxu0 %v54
  %v98 = vpop.f32.mrb[0].mxu0
  %v99 = vadd.f32 %v27, %v98
  %v100 = vpop.f32.mrb[0].mxu0
  %v101 = vpop.f32.mrb[0].mxu0
  %v102 = vpop.f32.mrb[0].mxu0
  %103 = vdwg.mxu0
  %104 = vst [vmem:[%s3] sm:$0xff] %v91
  %105 = vst [vmem:[%s3 + $0x8] sm:$0xff] %v94
  %106 = vst [vmem:[%s3 + $0x10] sm:$0xff] %v99
  // Predicated region
  $region14: #{timesformer_forward.27} parent=0 // pred_check
    _
  $region15: #{timesformer_forward.27} parent=0 // pred_check_branch
    %108 = sbr.rel (0) target = $region17
  $region16: #{timesformer_forward.27} parent=0 // pred_region
    _
  $region17: #{timesformer_forward.27} parent=0 // pred_fallthru
    _
  // Predicated region
  $region18: #{timesformer_forward.27} parent=0 // pred_check
    _
  $region19: #{timesformer_forward.27} parent=0 // pred_check_branch
    %110 = sbr.rel (0) target = $region21
  $region20: #{timesformer_forward.27} parent=0 // pred_region
    _
  $region21: #{timesformer_forward.27} parent=0 // pred_fallthru
    _

// kernel: timesformer_forward.28
$region0: #{timesformer_forward.28}
  #allocation0 [shape = 'u32[]', space=smem, size = 0x4, offset = 0x4, fixed_abs, tag = 'smem constant byte address 0x4 - core index']
  #allocation1 [shape = 'u32[144,128]{1,0:T(1,128)}', space=vmem, size = 0x12000, scoped, tag = 'internal scratch']
  #allocation2 [shape = 'bf16[24,32]{1,0:T(8,128)(2,1)}', space=vmem, size = 0x1800, scoped, tag = 'scratch operand']
  %s0 = inlined_call_operand.vmem [shape: f32[24,32], index: 0, kind: input, shape index: {}]
  %s1 = inlined_call_operand.vmem [shape: f32[1,32], index: 1, kind: input, shape index: {}]
  %s2 = inlined_call_operand.vmem [shape: f32[1,32], index: 2, kind: input, shape index: {}]
  %s3 = inlined_call_operand.vmem [shape: bf16[32,128], index: 3, kind: input, shape index: {}]
  %s4 = inlined_call_operand.vmem [shape: f32[1,128], index: 4, kind: input, shape index: {}]
  %s5 = inlined_call_operand.vmem [shape: bf16[24,128], index: 5, kind: output, shape index: {}]
  %s6 = sld [smem:[#allocation0]]
  $region34: #{timesformer_forward.28} parent=0
    _
  %s8 = ssub.s32 1, %s6
  %s9 = scalar_select 0, %s8, %s6
  // Predicated region
  $region2: #{timesformer_forward.28} parent=0 // pred_check
    _
  $region3: #{timesformer_forward.28} parent=0 // pred_check_branch
    %11 = sbr.rel (0) target = $region5
  $region4: #{timesformer_forward.28} parent=0 // pred_region
    _
  $region5: #{timesformer_forward.28} parent=0 // pred_fallthru
    _
  // Predicated region
  $region6: #{timesformer_forward.28} parent=0 // pred_check
    _
  $region7: #{timesformer_forward.28} parent=0 // pred_check_branch
    %13 = sbr.rel (0) target = $region9
  $region8: #{timesformer_forward.28} parent=0 // pred_region
    _
  $region9: #{timesformer_forward.28} parent=0 // pred_fallthru
    _
  // Predicated region
  $region10: #{timesformer_forward.28} parent=0 // pred_check
    _
  $region11: #{timesformer_forward.28} parent=0 // pred_check_branch
    %15 = sbr.rel (0) target = $region13
  $region12: #{timesformer_forward.28} parent=0 // pred_region
    _
  $region13: #{timesformer_forward.28} parent=0 // pred_fallthru
    _
  // Predicated region
  $region14: #{timesformer_forward.28} parent=0 // pred_check
    _
  $region15: #{timesformer_forward.28} parent=0 // pred_check_branch
    %17 = sbr.rel (0) target = $region17
  $region16: #{timesformer_forward.28} parent=0 // pred_region
    _
  $region17: #{timesformer_forward.28} parent=0 // pred_fallthru
    _
  // Predicated region
  $region18: #{timesformer_forward.28} parent=0 // pred_check
    _
  $region19: #{timesformer_forward.28} parent=0 // pred_check_branch
    %19 = sbr.rel (0) target = $region21
  $region20: #{timesformer_forward.28} parent=0 // pred_region
    _
  $region21: #{timesformer_forward.28} parent=0 // pred_fallthru
    _
  %p21 = scmp.eq.s32.totalorder 0, 0
  // Predicated region
  $region22: #{timesformer_forward.28} parent=0 // pred_check
    %p22 = pneg %p21
  $region23: #{timesformer_forward.28} parent=0 // pred_check_branch
    %24 = sbr.rel (%p22) target = $region25
  $region24: #{timesformer_forward.28} parent=0 // pred_region
    %v25 = vld [vmem:[%s0] sm:$0xff]
    %v26 = vld [vmem:[%s0 + $0x8] sm:$0xff]
    %v27 = vld [vmem:[%s0 + $0x10] sm:$0xff]
    %vm28 = vcmask 261120
    %v29 = vsel %vm28, %v25, 0.0
    %30 = vadd.xlane.f32.xlu0 %v29
    %v31 = vpop.xlane.xlu0 %30
    %v32 = vsel %vm28, %v26, 0.0
    %33 = vadd.xlane.f32.xlu0 %v32
    %v34 = vpop.xlane.xlu0 %33
    %v35 = vsel %vm28, %v27, 0.0
    %36 = vadd.xlane.f32.xlu0 %v35
    %v37 = vpop.xlane.xlu0 %36
    %v38 = vrcp.pop 32.0
    %v39 = vmul.f32 %v31, %v38
    %v40 = vmul.f32 %v34, %v38
    %v41 = vmul.f32 %v37, %v38
    %v42 = vsub.f32 %v25, %v39
    %v43 = vsub.f32 %v26, %v40
    %v44 = vsub.f32 %v27, %v41
    %v45 = vmul.f32 %v42, %v42
    %v46 = vmul.f32 %v43, %v43
    %v47 = vmul.f32 %v44, %v44
    %v48 = vsel %vm28, %v45, 0.0
    %49 = vadd.xlane.f32.xlu0 %v48
    %v50 = vpop.xlane.xlu0 %49
    %v51 = vsel %vm28, %v46, 0.0
    %52 = vadd.xlane.f32.xlu0 %v51
    %v53 = vpop.xlane.xlu0 %52
    %v54 = vsel %vm28, %v47, 0.0
    %55 = vadd.xlane.f32.xlu0 %v54
    %v56 = vpop.xlane.xlu0 %55
    %v57 = vmul.f32 %v50, %v38
    %v58 = vmul.f32 %v53, %v38
    %v59 = vmul.f32 %v56, %v38
    %v60 = vadd.f32 %v57, 1e-05
    %v61 = vadd.f32 %v58, 1e-05
    %v62 = vadd.f32 %v59, 1e-05
    %v63 = vrsqrt.pop %v60
    %v64 = vrsqrt.pop %v61
    %v65 = vrsqrt.pop %v62
    %v66 = vmul.f32 %v42, %v63
    %v67 = vmul.f32 %v43, %v64
    %v68 = vmul.f32 %v44, %v65
    %v69 = vld [vmem:[%s1] sm:$0x1]
    %v71 = vlaneseq
    %v72 = vshrl.u32 %v71, 7
    %v73 = vsub.s32 0, %v72
    %v74 = vrot.slane %v69, %v73
    %v76 = vmul.f32 %v66, %v74
    %v77 = vmul.f32 %v67, %v74
    %v78 = vmul.f32 %v68, %v74
    %v79 = vld [vmem:[%s2] sm:$0x1]
    %v81 = vlaneseq
    %v82 = vshrl.u32 %v81, 7
    %v83 = vsub.s32 0, %v82
    %v84 = vrot.slane %v79, %v83
    %v86 = vadd.f32 %v76, %v84
    %v87 = vadd.f32 %v77, %v84
    %v88 = vadd.f32 %v78, %v84
    %v89 = vpack.c.bf16 %v87, %v86
    %v90 = vpack.c.bf16 %v88, %v88
    %v93 = vunpack.c.l.b16 %v89
    %v94 = vunpack.c.h.b16 %v89
    %v95 = vunpack.c.l.b16 %v90
    %v96 = vpack.c.b16 %v93, %v93
    %v97 = vpack.c.b16 %v94, %v94
    %v98 = vpack.c.b16 %v95, %v95
    %vm102 = vcmask 257024
    %103 = vst.msk [vmem:[#allocation2] sm:$0xf] %vm102, %v96
    %104 = vst.msk [vmem:[#allocation2 + $0x4] sm:$0xf] %vm102, %v97
    %105 = vst.msk [vmem:[#allocation2 + $0x8] sm:$0xf] %vm102, %v98
  $region25: #{timesformer_forward.28} parent=0 // pred_fallthru
    _
  %v106 = vld [vmem:[#allocation2] sm:$0xf]
  %v107 = vld [vmem:[#allocation2 + $0x4] sm:$0xf]
  %v108 = vld [vmem:[#allocation2 + $0x8] sm:$0xf]
  %v109 = vld [vmem:[%s3] sm:$0xf]
  %v110 = vld [vmem:[%s3 + $0x4] sm:$0xf]
  %v111 = vld [vmem:[%s3 + $0x8] sm:$0xf]
  %v112 = vld [vmem:[%s3 + $0xc] sm:$0xf]
  %v113 = vld [vmem:[%s4] sm:$0x1]
  %v115 = vlaneseq
  %v116 = vshrl.u32 %v115, 7
  %v117 = vsub.s32 0, %v116
  %v118 = vrot.slane %v113, %v117
  %v123 = vunpack.c.l.b16 %v106
  %v124 = vunpack.c.l.b16 %v107
  %v125 = vunpack.c.l.b16 %v108
  %v126 = vpack.c.b16 %v124, %v123
  %v127 = vpack.c.b16 %v125, %v125
  %v132 = vunpack.c.l.b16 %v109
  %v133 = vunpack.c.l.b16 %v110
  %v134 = vunpack.c.l.b16 %v111
  %v135 = vunpack.c.l.b16 %v112
  %v136 = vpack.c.b16 %v133, %v132
  %v137 = vpack.c.b16 %v135, %v134
  %vm140 = vcmask 261120
  %v142 = vsel %vm140, %v126, 0
  %v145 = vsel %vm140, %v127, 0
  %147 = vmatprep.subr.bf16.mxu0 0
  %148 = vmatpush1.bf16.msra.mxu0 %v136
  %149 = vmatprep.subr.bf16.mxu0 0
  %150 = vmatpush1.bf16.msra.mxu0 %v137
  %151 = vmatprep.subr.bf16.mxu0 0
  %152 = vmatpush1.bf16.msra.mxu0 0
  %153 = vmatprep.subr.bf16.mxu0 0
  %154 = vmatpush1.bf16.msra.mxu0 0
  %155 = vmatprep.subr.bf16.mxu0 0
  %156 = vmatpush1.bf16.msra.mxu0 0
  %157 = vmatprep.subr.bf16.mxu0 0
  %158 = vmatpush1.bf16.msra.mxu0 0
  %159 = vmatprep.subr.bf16.mxu0 0
  %160 = vmatpush1.bf16.msra.mxu0 0
  %161 = vmatprep.subr.bf16.mxu0 0
  %162 = vmatpush1.bf16.msra.mxu0 0
  %163 = vmatprep.subr.bf16.mxu0 0
  %164 = vmatpush1.bf16.msra.mxu0 0
  %165 = vmatprep.subr.bf16.mxu0 0
  %166 = vmatpush1.bf16.msra.mxu0 0
  %167 = vmatprep.subr.bf16.mxu0 0
  %168 = vmatpush1.bf16.msra.mxu0 0
  %169 = vmatprep.subr.bf16.mxu0 0
  %170 = vmatpush1.bf16.msra.mxu0 0
  %171 = vmatprep.subr.bf16.mxu0 0
  %172 = vmatpush1.bf16.msra.mxu0 0
  %173 = vmatprep.subr.bf16.mxu0 0
  %174 = vmatpush1.bf16.msra.mxu0 0
  %175 = vmatprep.subr.bf16.mxu0 0
  %176 = vmatpush1.bf16.msra.mxu0 0
  %177 = vmatprep.subr.bf16.mxu0 0
  %178 = vmatpush1.bf16.msra.mxu0 0
  %179 = vmatprep.mubr.bf16.mxu0 0
  %180 = vmatmul.mubr.bf16.gmra.mrb[0].mxu0 %v142
  %v181 = vpop.f32.mrb[0].mxu0
  %v182 = vadd.f32 %v118, %v181
  %v183 = vpop.f32.mrb[0].mxu0
  %v184 = vpop.f32.mrb[0].mxu0
  %v185 = vadd.f32 %v118, %v184
  %v186 = vpop.f32.mrb[0].mxu0
  %187 = vmatprep.mubr.bf16.mxu0 0
  %188 = vmatmul.mubr.bf16.gmra.mrb[0].mxu0 %v145
  %v189 = vpop.f32.mrb[0].mxu0
  %v190 = vadd.f32 %v118, %v189
  %v191 = vpop.f32.mrb[0].mxu0
  %v192 = vpop.f32.mrb[0].mxu0
  %v193 = vpop.f32.mrb[0].mxu0
  %194 = vdwg.mxu0
  %v195 = vmul.f32 %v182, 0.5
  %v196 = vmul.f32 %v185, 0.5
  %v197 = vmul.f32 %v190, 0.5
  %v198 = vmul.f32 %v182, 0.044715
  %v199 = vmul.f32 %v185, 0.044715
  %v200 = vmul.f32 %v190, 0.044715
  %v201 = vmul.f32 %v198, %v182
  %v202 = vmul.f32 %v199, %v185
  %v203 = vmul.f32 %v200, %v190
  %v204 = vmul.f32 %v201, %v182
  %v205 = vmul.f32 %v202, %v185
  %v206 = vmul.f32 %v203, %v190
  %v207 = vadd.f32 %v182, %v204
  %v208 = vadd.f32 %v185, %v205
  %v209 = vadd.f32 %v190, %v206
  %v210 = vmul.f32 %v207, 0.7978846
  %v211 = vmul.f32 %v208, 0.7978846
  %v212 = vmul.f32 %v209, 0.7978846
  %v213 = vtanh.pop %v210
  %v214 = vtanh.pop %v211
  %v215 = vtanh.pop %v212
  %v216 = vadd.f32 %v213, 1.0
  %v217 = vadd.f32 %v214, 1.0
  %v218 = vadd.f32 %v215, 1.0
  %v219 = vmul.f32 %v195, %v216
  %v220 = vmul.f32 %v196, %v217
  %v221 = vmul.f32 %v197, %v218
  %v222 = vpack.c.bf16 %v220, %v219
  %v223 = vpack.c.bf16 %v221, %v221
  %v226 = vunpack.c.l.b16 %v222
  %v227 = vunpack.c.h.b16 %v222
  %v228 = vunpack.c.l.b16 %v223
  %v229 = vpack.c.b16 %v226, %v226
  %v230 = vpack.c.b16 %v227, %v227
  %v231 = vpack.c.b16 %v228, %v228
  %235 = vst [vmem:[%s5] sm:$0xf] %v229
  %236 = vst [vmem:[%s5 + $0x4] sm:$0xf] %v230
  %237 = vst [vmem:[%s5 + $0x8] sm:$0xf] %v231
  // Predicated region
  $region26: #{timesformer_forward.28} parent=0 // pred_check
    _
  $region27: #{timesformer_forward.28} parent=0 // pred_check_branch
    %239 = sbr.rel (0) target = $region29
  $region28: #{timesformer_forward.28} parent=0 // pred_region
    _
  $region29: #{timesformer_forward.28} parent=0 // pred_fallthru
    _
  // Predicated region
  $region30: #{timesformer_forward.28} parent=0 // pred_check
    _
  $region31: #{timesformer_forward.28} parent=0 // pred_check_branch
    %241 = sbr.rel (0) target = $region33
  $region32: #{timesformer_forward.28} parent=0 // pred_region
    _
  $region33: #{timesformer_forward.28} parent=0 // pred_fallthru
    _

// kernel: timesformer_forward.29
$region0: #{timesformer_forward.29}
  #allocation0 [shape = 'u32[]', space=smem, size = 0x4, offset = 0x4, fixed_abs, tag = 'smem constant byte address 0x4 - core index']
  #allocation1 [shape = 'u32[144,128]{1,0:T(1,128)}', space=vmem, size = 0x12000, scoped, tag = 'internal scratch']
  %s0 = inlined_call_operand.vmem [shape: bf16[24,128], index: 0, kind: input, shape index: {}]
  %s1 = inlined_call_operand.vmem [shape: bf16[128,128], index: 1, kind: input, shape index: {}]
  %s2 = inlined_call_operand.vmem [shape: f32[1,128], index: 2, kind: input, shape index: {}]
  %s3 = inlined_call_operand.vmem [shape: f32[24,128], index: 3, kind: input, shape index: {}]
  %s4 = inlined_call_operand.vmem [shape: f32[24,128], index: 4, kind: output, shape index: {}]
  %s5 = sld [smem:[#allocation0]]
  $region26: #{timesformer_forward.29} parent=0
    _
  %s7 = ssub.s32 1, %s5
  %s8 = scalar_select 0, %s7, %s5
  // Predicated region
  $region2: #{timesformer_forward.29} parent=0 // pred_check
    _
  $region3: #{timesformer_forward.29} parent=0 // pred_check_branch
    %10 = sbr.rel (0) target = $region5
  $region4: #{timesformer_forward.29} parent=0 // pred_region
    _
  $region5: #{timesformer_forward.29} parent=0 // pred_fallthru
    _
  // Predicated region
  $region6: #{timesformer_forward.29} parent=0 // pred_check
    _
  $region7: #{timesformer_forward.29} parent=0 // pred_check_branch
    %12 = sbr.rel (0) target = $region9
  $region8: #{timesformer_forward.29} parent=0 // pred_region
    _
  $region9: #{timesformer_forward.29} parent=0 // pred_fallthru
    _
  // Predicated region
  $region10: #{timesformer_forward.29} parent=0 // pred_check
    _
  $region11: #{timesformer_forward.29} parent=0 // pred_check_branch
    %14 = sbr.rel (0) target = $region13
  $region12: #{timesformer_forward.29} parent=0 // pred_region
    _
  $region13: #{timesformer_forward.29} parent=0 // pred_fallthru
    _
  // Predicated region
  $region14: #{timesformer_forward.29} parent=0 // pred_check
    _
  $region15: #{timesformer_forward.29} parent=0 // pred_check_branch
    %16 = sbr.rel (0) target = $region17
  $region16: #{timesformer_forward.29} parent=0 // pred_region
    _
  $region17: #{timesformer_forward.29} parent=0 // pred_fallthru
    _
  %v18 = vld [vmem:[%s0] sm:$0xf]
  %v19 = vld [vmem:[%s0 + $0x4] sm:$0xf]
  %v20 = vld [vmem:[%s0 + $0x8] sm:$0xf]
  %v21 = vld [vmem:[%s1] sm:$0xf]
  %v22 = vld [vmem:[%s1 + $0x4] sm:$0xf]
  %v23 = vld [vmem:[%s1 + $0x8] sm:$0xf]
  %v24 = vld [vmem:[%s1 + $0xc] sm:$0xf]
  %v25 = vld [vmem:[%s1 + $0x10] sm:$0xf]
  %v26 = vld [vmem:[%s1 + $0x14] sm:$0xf]
  %v27 = vld [vmem:[%s1 + $0x18] sm:$0xf]
  %v28 = vld [vmem:[%s1 + $0x1c] sm:$0xf]
  %v29 = vld [vmem:[%s1 + $0x20] sm:$0xf]
  %v30 = vld [vmem:[%s1 + $0x24] sm:$0xf]
  %v31 = vld [vmem:[%s1 + $0x28] sm:$0xf]
  %v32 = vld [vmem:[%s1 + $0x2c] sm:$0xf]
  %v33 = vld [vmem:[%s1 + $0x30] sm:$0xf]
  %v34 = vld [vmem:[%s1 + $0x34] sm:$0xf]
  %v35 = vld [vmem:[%s1 + $0x38] sm:$0xf]
  %v36 = vld [vmem:[%s1 + $0x3c] sm:$0xf]
  %v37 = vld [vmem:[%s2] sm:$0x1]
  %v39 = vlaneseq
  %v40 = vshrl.u32 %v39, 7
  %v41 = vsub.s32 0, %v40
  %v42 = vrot.slane %v37, %v41
  %v47 = vunpack.c.l.b16 %v18
  %v48 = vunpack.c.l.b16 %v19
  %v49 = vunpack.c.l.b16 %v20
  %v50 = vpack.c.b16 %v48, %v47
  %v51 = vpack.c.b16 %v49, %v49
  %v70 = vunpack.c.l.b16 %v21
  %v71 = vunpack.c.l.b16 %v22
  %v72 = vunpack.c.l.b16 %v23
  %v73 = vunpack.c.l.b16 %v24
  %v74 = vunpack.c.l.b16 %v25
  %v75 = vunpack.c.l.b16 %v26
  %v76 = vunpack.c.l.b16 %v27
  %v77 = vunpack.c.l.b16 %v28
  %v78 = vunpack.c.l.b16 %v29
  %v79 = vunpack.c.l.b16 %v30
  %v80 = vunpack.c.l.b16 %v31
  %v81 = vunpack.c.l.b16 %v32
  %v82 = vunpack.c.l.b16 %v33
  %v83 = vunpack.c.l.b16 %v34
  %v84 = vunpack.c.l.b16 %v35
  %v85 = vunpack.c.l.b16 %v36
  %v86 = vpack.c.b16 %v71, %v70
  %v87 = vpack.c.b16 %v73, %v72
  %v88 = vpack.c.b16 %v75, %v74
  %v89 = vpack.c.b16 %v77, %v76
  %v90 = vpack.c.b16 %v79, %v78
  %v91 = vpack.c.b16 %v81, %v80
  %v92 = vpack.c.b16 %v83, %v82
  %v93 = vpack.c.b16 %v85, %v84
  %102 = vmatprep.subr.bf16.mxu0 0
  %103 = vmatpush1.bf16.msra.mxu0 %v86
  %104 = vmatprep.subr.bf16.mxu0 0
  %105 = vmatpush1.bf16.msra.mxu0 %v87
  %106 = vmatprep.subr.bf16.mxu0 0
  %107 = vmatpush1.bf16.msra.mxu0 %v88
  %108 = vmatprep.subr.bf16.mxu0 0
  %109 = vmatpush1.bf16.msra.mxu0 %v89
  %110 = vmatprep.subr.bf16.mxu0 0
  %111 = vmatpush1.bf16.msra.mxu0 %v90
  %112 = vmatprep.subr.bf16.mxu0 0
  %113 = vmatpush1.bf16.msra.mxu0 %v91
  %114 = vmatprep.subr.bf16.mxu0 0
  %115 = vmatpush1.bf16.msra.mxu0 %v92
  %116 = vmatprep.subr.bf16.mxu0 0
  %117 = vmatpush1.bf16.msra.mxu0 %v93
  %118 = vmatprep.subr.bf16.mxu0 0
  %119 = vmatpush1.bf16.msra.mxu0 0
  %120 = vmatprep.subr.bf16.mxu0 0
  %121 = vmatpush1.bf16.msra.mxu0 0
  %122 = vmatprep.subr.bf16.mxu0 0
  %123 = vmatpush1.bf16.msra.mxu0 0
  %124 = vmatprep.subr.bf16.mxu0 0
  %125 = vmatpush1.bf16.msra.mxu0 0
  %126 = vmatprep.subr.bf16.mxu0 0
  %127 = vmatpush1.bf16.msra.mxu0 0
  %128 = vmatprep.subr.bf16.mxu0 0
  %129 = vmatpush1.bf16.msra.mxu0 0
  %130 = vmatprep.subr.bf16.mxu0 0
  %131 = vmatpush1.bf16.msra.mxu0 0
  %132 = vmatprep.subr.bf16.mxu0 0
  %133 = vmatpush1.bf16.msra.mxu0 0
  %134 = vmatprep.mubr.bf16.mxu0 0
  %135 = vmatmul.mubr.bf16.gmra.mrb[0].mxu0 %v50
  %v136 = vpop.f32.mrb[0].mxu0
  %v137 = vadd.f32 %v42, %v136
  %v138 = vpop.f32.mrb[0].mxu0
  %v139 = vpop.f32.mrb[0].mxu0
  %v140 = vadd.f32 %v42, %v139
  %v141 = vpop.f32.mrb[0].mxu0
  %142 = vmatprep.mubr.bf16.mxu0 0
  %143 = vmatmul.mubr.bf16.gmra.mrb[0].mxu0 %v51
  %v144 = vpop.f32.mrb[0].mxu0
  %v145 = vadd.f32 %v42, %v144
  %v146 = vpop.f32.mrb[0].mxu0
  %v147 = vpop.f32.mrb[0].mxu0
  %v148 = vpop.f32.mrb[0].mxu0
  %149 = vdwg.mxu0
  %v150 = vld [vmem:[%s3] sm:$0xff]
  %v151 = vld [vmem:[%s3 + $0x8] sm:$0xff]
  %v152 = vld [vmem:[%s3 + $0x10] sm:$0xff]
  %v153 = vadd.f32 %v137, %v150
  %v154 = vadd.f32 %v140, %v151
  %v155 = vadd.f32 %v145, %v152
  %156 = vst [vmem:[%s4] sm:$0xff] %v153
  %157 = vst [vmem:[%s4 + $0x8] sm:$0xff] %v154
  %158 = vst [vmem:[%s4 + $0x10] sm:$0xff] %v155
  // Predicated region
  $region18: #{timesformer_forward.29} parent=0 // pred_check
    _
  $region19: #{timesformer_forward.29} parent=0 // pred_check_branch
    %160 = sbr.rel (0) target = $region21
  $region20: #{timesformer_forward.29} parent=0 // pred_region
    _
  $region21: #{timesformer_forward.29} parent=0 // pred_fallthru
    _
  // Predicated region
  $region22: #{timesformer_forward.29} parent=0 // pred_check
    _
  $region23: #{timesformer_forward.29} parent=0 // pred_check_branch
    %162 = sbr.rel (0) target = $region25
  $region24: #{timesformer_forward.29} parent=0 // pred_region
    _
  $region25: #{timesformer_forward.29} parent=0 // pred_fallthru
    _

// kernel: timesformer_forward.39
$region0: #{timesformer_forward.39}
  #allocation0 [shape = 'u32[]', space=smem, size = 0x4, offset = 0x4, fixed_abs, tag = 'smem constant byte address 0x4 - core index']
  #allocation1 [shape = 'u32[144,128]{1,0:T(1,128)}', space=vmem, size = 0x12000, scoped, tag = 'internal scratch']
  %s0 = inlined_call_operand.vmem [shape: f32[8,32], index: 0, kind: input, shape index: {}]
  %s1 = inlined_call_operand.vmem [shape: f32[1,32], index: 1, kind: input, shape index: {}]
  %s2 = inlined_call_operand.vmem [shape: f32[1,32], index: 2, kind: input, shape index: {}]
  %s3 = inlined_call_operand.vmem [shape: f32[8,32], index: 3, kind: output, shape index: {}]
  %s4 = sld [smem:[#allocation0]]
  $region22: #{timesformer_forward.39} parent=0
    _
  %s6 = ssub.s32 1, %s4
  %s7 = scalar_select 0, %s6, %s4
  // Predicated region
  $region2: #{timesformer_forward.39} parent=0 // pred_check
    _
  $region3: #{timesformer_forward.39} parent=0 // pred_check_branch
    %9 = sbr.rel (0) target = $region5
  $region4: #{timesformer_forward.39} parent=0 // pred_region
    _
  $region5: #{timesformer_forward.39} parent=0 // pred_fallthru
    _
  // Predicated region
  $region6: #{timesformer_forward.39} parent=0 // pred_check
    _
  $region7: #{timesformer_forward.39} parent=0 // pred_check_branch
    %11 = sbr.rel (0) target = $region9
  $region8: #{timesformer_forward.39} parent=0 // pred_region
    _
  $region9: #{timesformer_forward.39} parent=0 // pred_fallthru
    _
  // Predicated region
  $region10: #{timesformer_forward.39} parent=0 // pred_check
    _
  $region11: #{timesformer_forward.39} parent=0 // pred_check_branch
    %13 = sbr.rel (0) target = $region13
  $region12: #{timesformer_forward.39} parent=0 // pred_region
    _
  $region13: #{timesformer_forward.39} parent=0 // pred_fallthru
    _
  %v14 = vld [vmem:[%s0] sm:$0xff]
  %vm15 = vcmask 261120
  %v16 = vsel %vm15, %v14, 0.0
  %17 = vadd.xlane.f32.xlu0 %v16
  %v18 = vpop.xlane.xlu0 %17
  %v19 = vrcp.pop 32.0
  %v20 = vmul.f32 %v18, %v19
  %v21 = vsub.f32 %v14, %v20
  %v22 = vmul.f32 %v21, %v21
  %v23 = vsel %vm15, %v22, 0.0
  %24 = vadd.xlane.f32.xlu0 %v23
  %v25 = vpop.xlane.xlu0 %24
  %v26 = vmul.f32 %v25, %v19
  %v27 = vadd.f32 %v26, 1e-06
  %v28 = vrsqrt.pop %v27
  %v29 = vmul.f32 %v21, %v28
  %v30 = vld [vmem:[%s1] sm:$0x1]
  %v32 = vlaneseq
  %v33 = vshrl.u32 %v32, 7
  %v34 = vsub.s32 0, %v33
  %v35 = vrot.slane %v30, %v34
  %v37 = vmul.f32 %v29, %v35
  %v38 = vld [vmem:[%s2] sm:$0x1]
  %v40 = vlaneseq
  %v41 = vshrl.u32 %v40, 7
  %v42 = vsub.s32 0, %v41
  %v43 = vrot.slane %v38, %v42
  %v45 = vadd.f32 %v37, %v43
  %46 = vst.msk [vmem:[%s3] sm:$0xff] %vm15, %v45
  // Predicated region
  $region14: #{timesformer_forward.39} parent=0 // pred_check
    _
  $region15: #{timesformer_forward.39} parent=0 // pred_check_branch
    %48 = sbr.rel (0) target = $region17
  $region16: #{timesformer_forward.39} parent=0 // pred_region
    _
  $region17: #{timesformer_forward.39} parent=0 // pred_fallthru
    _
  // Predicated region
  $region18: #{timesformer_forward.39} parent=0 // pred_check
    _
  $region19: #{timesformer_forward.39} parent=0 // pred_check_branch
    %50 = sbr.rel (0) target = $region21
  $region20: #{timesformer_forward.39} parent=0 // pred_region
    _
  $region21: #{timesformer_forward.39} parent=0 // pred_fallthru
    _

</llo_original>
